<compile_context>
chip_gen: v7x
topology: tpu7x:2x2x1
jax: 0.10.0
libtpu: 0.0.40
codegen_flags: <defaults>
</compile_context>

<pallas_src>
import functools

import jax
import jax.numpy as jnp
from jax.experimental import pallas as pl
from jax.experimental.pallas import tpu as pltpu

LANES = 128  # output-channel lane padding for every matmul RHS


def _pad_to(n, m):
    return ((n + m - 1) // m) * m


def _pick_bt(B, cap=8):
    """Images per conv grid step: largest divisor of B <= cap, preferring an
    even grid length so ("parallel",) shards across both v7x TensorCores."""
    divisors = [d for d in range(1, min(B, cap) + 1) if B % d == 0]
    even_grid = [d for d in divisors if (B // d) % 2 == 0]
    return max(even_grid) if even_grid else max(divisors)


# --------------------------------------------------------------------------
# Pallas kernels
# --------------------------------------------------------------------------
def _conv_bias_relu_pool_kernel(x_ref, w_ref, b_ref, o_ref, acc_ref, *, Bt, Mp):
    # x_ref  : (Bt*4*Mp, Kp)     bf16 im2col patches, rows ordered
    #                            (image, pool-quadrant, pooled-pixel)
    # w_ref  : (Kp, LANES)       bf16 weights (Cout zero-padded to 128 lanes)
    # b_ref  : (1, LANES)        f32 bias
    # o_ref  : (Bt*Mp, LANES)    bf16 pooled output (image, pooled-pixel)
    # acc_ref: (Bt*4*Mp, LANES)  f32 scratch holding the raw conv matmul
    #
    # One big MXU matmul for the whole block, result streamed into the scratch.
    acc_ref[...] = jnp.dot(x_ref[...], w_ref[...],
                           preferred_element_type=jnp.float32)
    # TODO(synk): accumulate the four quadrant matmuls with a running max (or
    # v7x MRB accumulation) to drop this scratch round-trip entirely.
    for bi in range(Bt):  # static unroll, Bt <= 8
        base = bi * 4 * Mp
        q0 = acc_ref[pl.ds(base, Mp), :]
        q1 = acc_ref[pl.ds(base + Mp, Mp), :]
        q2 = acc_ref[pl.ds(base + 2 * Mp, Mp), :]
        q3 = acc_ref[pl.ds(base + 3 * Mp, Mp), :]
        pooled = jnp.maximum(jnp.maximum(q0, q1), jnp.maximum(q2, q3))
        # bias + ReLU commute with the max (both monotone), so apply them to
        # the 4x smaller pooled tile only.
        o_ref[pl.ds(bi * Mp, Mp), :] = jnp.maximum(
            pooled + b_ref[...], 0.0).astype(o_ref.dtype)


def _fc_head_kernel(x_ref, w1_ref, b1_ref, w2_ref, b2_ref, w3_ref, b3_ref, o_ref):
    # Fused fc1 -> ReLU -> fc2 -> ReLU -> fc3; all weights resident in VMEM,
    # the (TM,128) intermediates never leave the kernel.
    h = jnp.dot(x_ref[...], w1_ref[...], preferred_element_type=jnp.float32)
    h = jnp.maximum(h + b1_ref[...], 0.0)
    h = jnp.dot(h.astype(w2_ref.dtype), w2_ref[...],
                preferred_element_type=jnp.float32)
    h = jnp.maximum(h + b2_ref[...], 0.0)
    h = jnp.dot(h.astype(w3_ref.dtype), w3_ref[...],
                preferred_element_type=jnp.float32)
    o_ref[...] = (h + b3_ref[...]).astype(o_ref.dtype)


# --------------------------------------------------------------------------
# XLA glue: pool-quadrant-ordered im2col (valid conv, stride 1, then 2x2 pool)
# --------------------------------------------------------------------------
def _pool_ordered_patches(x, KH, KW, Mp):
    """x: (B, H, W, C).  Returns (B*4*Mp, KH*KW*C) bf16-castable patches where
    row ((b*4 + dh*2 + dw)*Mp + p*PW + q) is the conv patch for output pixel
    (2p+dh, 2q+dw) of image b.  Rows [PH*PW, Mp) of each quadrant are zero pad
    (dropped by the caller)."""
    B, H, W, C = x.shape
    OH, OW = H - KH + 1, W - KW + 1
    PH, PW = OH // 2, OW // 2
    quads = []
    for dh in range(2):
        for dw in range(2):
            taps = [x[:, dh + ki: dh + ki + 2 * PH: 2,
                        dw + kj: dw + kj + 2 * PW: 2, :]
                    for ki in range(KH) for kj in range(KW)]
            quads.append(jnp.concatenate(taps, axis=-1))  # (B, PH, PW, KH*KW*C)
    p = jnp.stack(quads, axis=1).reshape(B, 4, PH * PW, KH * KW * C)
    p = jnp.pad(p, ((0, 0), (0, 0), (0, Mp - PH * PW), (0, 0)))
    return p.reshape(B * 4 * Mp, KH * KW * C)


def conv_relu_pool(x_nhwc, w, b):
    """PyTorch Conv2d(stride=1, 'valid') -> ReLU -> MaxPool2d(2,2), fused.

    x_nhwc: (B, H, W, Cin).  w: (Cout, Cin, KH, KW).  b: (Cout,).
    Returns (B, OH//2, OW//2, LANES) bf16 with the real channels in [..., :Cout].
    """
    B, H, W, Cin = x_nhwc.shape
    Cout, Cin_w, KH, KW = w.shape
    assert Cin_w == Cin
    OH, OW = H - KH + 1, W - KW + 1
    PH, PW = OH // 2, OW // 2
    Mp = _pad_to(PH * PW, 8)          # pooled pixels per image, sublane-aligned
    K = KH * KW * Cin                  # real contraction depth (no channel pad)
    Kp = _pad_to(K, 128)

    # TODO(synk): build conv2's patches with in-kernel row-shifted slices
    # (KW-merged taps) to avoid the KH*KW-fold HBM expansion of explicit im2col.
    patches = _pool_ordered_patches(x_nhwc, KH, KW, Mp).astype(jnp.bfloat16)
    patches = jnp.pad(patches, ((0, 0), (0, Kp - K)))            # (B*4*Mp, Kp)

    wt = jnp.transpose(w, (2, 3, 1, 0)).reshape(K, Cout)         # (ki,kj,c) x out
    wt = jnp.pad(wt, ((0, Kp - K), (0, LANES - Cout))).astype(jnp.bfloat16)
    bp = jnp.pad(b, (0, LANES - Cout)).reshape(1, LANES).astype(jnp.float32)

    Bt = _pick_bt(B)
    grid = (B // Bt,)
    kernel = functools.partial(_conv_bias_relu_pool_kernel, Bt=Bt, Mp=Mp)

    out = pl.pallas_call(
        kernel,
        out_shape=jax.ShapeDtypeStruct((B * Mp, LANES), jnp.bfloat16),
        grid_spec=pltpu.PrefetchScalarGridSpec(
            num_scalar_prefetch=0,
            grid=grid,
            in_specs=[
                pl.BlockSpec((Bt * 4 * Mp, Kp), lambda i: (i, 0)),
                pl.BlockSpec((Kp, LANES), lambda i: (0, 0)),
                pl.BlockSpec((1, LANES), lambda i: (0, 0)),
            ],
            out_specs=pl.BlockSpec((Bt * Mp, LANES), lambda i: (i, 0)),
            scratch_shapes=[pltpu.VMEM((Bt * 4 * Mp, LANES), jnp.float32)],
        ),
        compiler_params=pltpu.CompilerParams(
            dimension_semantics=("parallel",)),
    )(patches, wt, bp)

    return out.reshape(B, Mp, LANES)[:, :PH * PW, :].reshape(B, PH, PW, LANES)


# --------------------------------------------------------------------------
# Fused FC head (fc1 -> ReLU -> fc2 -> ReLU -> fc3)
# --------------------------------------------------------------------------
def fc_head(flat, params):
    """flat: (B, 400) flatten in (h, w, c) order.  Returns (B, LANES) f32."""
    B, K = flat.shape                      # K == 400
    Kp = _pad_to(K, 128)                   # 512
    f32, bf16 = jnp.float32, jnp.bfloat16

    # fc1 weight is (120, 400) indexed as (c, h, w); remap to our (h, w, c)
    # flatten order so no activation transpose is needed.
    w1 = params["fc1_w"].reshape(120, 16, 5, 5)                  # (out, c, h, w)
    w1 = jnp.transpose(w1, (2, 3, 1, 0)).reshape(400, 120)       # (h, w, c) x out
    w1 = jnp.pad(w1, ((0, Kp - 400), (0, LANES - 120))).astype(bf16)
    b1 = jnp.pad(params["fc1_b"], (0, LANES - 120)).reshape(1, LANES).astype(f32)

    w2 = jnp.pad(params["fc2_w"].T,
                 ((0, LANES - 120), (0, LANES - 84))).astype(bf16)
    b2 = jnp.pad(params["fc2_b"], (0, LANES - 84)).reshape(1, LANES).astype(f32)

    w3 = jnp.pad(params["fc3_w"].T,
                 ((0, LANES - 84), (0, LANES - 10))).astype(bf16)
    b3 = jnp.pad(params["fc3_b"], (0, LANES - 10)).reshape(1, LANES).astype(f32)

    x = jnp.pad(flat, ((0, 0), (0, Kp - K))).astype(bf16)
    TM = B if B <= 1024 else 1024
    grid = (pl.cdiv(B, TM),)

    wide = pl.BlockSpec((Kp, LANES), lambda i: (0, 0))
    sq = pl.BlockSpec((LANES, LANES), lambda i: (0, 0))
    bias = pl.BlockSpec((1, LANES), lambda i: (0, 0))

    return pl.pallas_call(
        _fc_head_kernel,
        out_shape=jax.ShapeDtypeStruct((B, LANES), f32),
        grid_spec=pltpu.PrefetchScalarGridSpec(
            num_scalar_prefetch=0,
            grid=grid,
            in_specs=[pl.BlockSpec((TM, Kp), lambda i: (i, 0)),
                      wide, bias, sq, bias, sq, bias],
            out_specs=pl.BlockSpec((TM, LANES), lambda i: (i, 0)),
        ),
        compiler_params=pltpu.CompilerParams(dimension_semantics=("parallel",)),
    )(x, w1, b1, w2, b2, w3, b3)


# --------------------------------------------------------------------------
# Parameters (deterministic, PyTorch-default-style uniform init)
# --------------------------------------------------------------------------
def init_params(key):
    def uni(k, shape, fan_in):
        bound = 1.0 / (fan_in ** 0.5)
        return jax.random.uniform(k, shape, jnp.float32, -bound, bound)

    ks = jax.random.split(key, 10)
    return {
        "conv1_w": uni(ks[0], (32, 3, 5, 5), 3 * 5 * 5),
        "conv1_b": uni(ks[1], (32,), 3 * 5 * 5),
        "conv2_w": uni(ks[2], (16, 32, 5, 5), 32 * 5 * 5),
        "conv2_b": uni(ks[3], (16,), 32 * 5 * 5),
        "fc1_w":   uni(ks[4], (120, 16 * 5 * 5), 16 * 5 * 5),
        "fc1_b":   uni(ks[5], (120,), 16 * 5 * 5),
        "fc2_w":   uni(ks[6], (84, 120), 120),
        "fc2_b":   uni(ks[7], (84,), 120),
        "fc3_w":   uni(ks[8], (10, 84), 84),
        "fc3_b":   uni(ks[9], (10,), 84),
    }


# --------------------------------------------------------------------------
# Forward pass (mirrors Net.forward exactly)
# --------------------------------------------------------------------------
def net_forward(params, x):
    # x: (B, 3, 32, 32) NCHW f32 (PyTorch layout at the boundary).
    B = x.shape[0]
    x = jnp.transpose(x, (0, 2, 3, 1))                             # (B,32,32,3)

    y = conv_relu_pool(x, params["conv1_w"], params["conv1_b"])    # (B,14,14,128)
    y = y[..., :32]                                                # real channels
    y = conv_relu_pool(y, params["conv2_w"], params["conv2_b"])    # (B, 5, 5,128)
    y = y[..., :16]                                                # (B, 5, 5, 16)

    flat = y.reshape(B, 5 * 5 * 16)                                # (B, 400)
    out = fc_head(flat, params)                                    # (B, 128) f32
    return out[:, :10]                                             # (B, 10)


if __name__ == "__main__":
    key = jax.random.PRNGKey(0)
    pkey, xkey = jax.random.split(key)
    params = init_params(pkey)
    # CIFAR-style input implied by fc1 = 16*5*5: (batch=2, channels=3, 32x32)
    x = jax.random.normal(xkey, (2, 3, 32, 32), dtype=jnp.float32)

    fwd = jax.jit(net_forward)
    out = fwd(params, x)
    jax.block_until_ready(out)
    assert out.shape == (2, 10) and out.dtype == jnp.float32
    print("KERNEL_OK")
</pallas_src>

<mosaic_0001>
module attributes {stable_mosaic.version = 11 : i64} {
  func.func @_conv_bias_relu_pool_kernel(%arg0: i32, %arg1: memref<800x128xbf16, #tpu.memory_space<vmem>>, %arg2: memref<128x128xbf16, #tpu.memory_space<vmem>>, %arg3: memref<1x128xf32, #tpu.memory_space<vmem>>, %arg4: memref<200x128xbf16, #tpu.memory_space<vmem>>, %arg5: memref<800x128xf32, #tpu.memory_space<vmem>>) attributes {dimension_semantics = [#tpu.dimension_semantics<parallel>], iteration_bounds = array<i64: 2>, scalar_prefetch = 0 : i64, scratch_operands = 1 : i64, tpu.core_type = #tpu.core_type<tc>, window_params = [{transform_indices = @transform_0, window_bounds = array<i64: 800, 128>}, {pipeline_mode = #tpu.pipeline_mode<synchronous>, transform_indices = @transform_1, window_bounds = array<i64: 128, 128>}, {pipeline_mode = #tpu.pipeline_mode<synchronous>, transform_indices = @transform_2, window_bounds = array<i64: 1, 128>}, {transform_indices = @transform_3, window_bounds = array<i64: 200, 128>}]} {
    %c0 = arith.constant 0 : index
    %c0_0 = arith.constant 0 : index
    %0 = vector.load %arg1[%c0, %c0_0] : memref<800x128xbf16, #tpu.memory_space<vmem>>, vector<800x128xbf16>
    %c0_1 = arith.constant 0 : index
    %c0_2 = arith.constant 0 : index
    %1 = vector.load %arg2[%c0_1, %c0_2] : memref<128x128xbf16, #tpu.memory_space<vmem>>, vector<128x128xbf16>
    %cst = arith.constant dense<0.000000e+00> : vector<800x128xf32>
    %2 = tpu.matmul %0, %1, %cst {dimension_numbers = #tpu.dot_dimension_numbers<[1], [0], [0], [1], [0, 0, 1, 1], [], []>} : vector<800x128xbf16>, vector<128x128xbf16>, vector<800x128xf32> -> vector<800x128xf32>
    %c0_3 = arith.constant 0 : index
    %c0_4 = arith.constant 0 : index
    %3 = vector.load %arg5[%c0_3, %c0_4] : memref<800x128xf32, #tpu.memory_space<vmem>>, vector<800x128xf32>
    tpu.vector_store %arg5[%c0_3, %c0_4], %2 {strides = array<i32>} : memref<800x128xf32, #tpu.memory_space<vmem>>, vector<800x128xf32>,
    %c0_5 = arith.constant 0 : index
    %c0_6 = arith.constant 0 : index
    %4 = vector.load %arg5[%c0_5, %c0_6] : memref<800x128xf32, #tpu.memory_space<vmem>>, vector<200x128xf32>
    %c200 = arith.constant 200 : index
    %c0_7 = arith.constant 0 : index
    %5 = vector.load %arg5[%c200, %c0_7] : memref<800x128xf32, #tpu.memory_space<vmem>>, vector<200x128xf32>
    %c400 = arith.constant 400 : index
    %c0_8 = arith.constant 0 : index
    %6 = vector.load %arg5[%c400, %c0_8] : memref<800x128xf32, #tpu.memory_space<vmem>>, vector<200x128xf32>
    %c600 = arith.constant 600 : index
    %c0_9 = arith.constant 0 : index
    %7 = vector.load %arg5[%c600, %c0_9] : memref<800x128xf32, #tpu.memory_space<vmem>>, vector<200x128xf32>
    %8 = arith.maximumf %4, %5 : vector<200x128xf32>
    %9 = arith.maximumf %6, %7 : vector<200x128xf32>
    %10 = arith.maximumf %8, %9 : vector<200x128xf32>
    %c0_10 = arith.constant 0 : index
    %c0_11 = arith.constant 0 : index
    %11 = vector.load %arg3[%c0_10, %c0_11] : memref<1x128xf32, #tpu.memory_space<vmem>>, vector<1x128xf32>
    %12 = vector.broadcast %11 : vector<1x128xf32> to vector<200x128xf32>
    %13 = arith.addf %10, %12 : vector<200x128xf32>
    %cst_12 = arith.constant 0.000000e+00 : f32
    %14 = vector.broadcast %cst_12 : f32 to vector<200x128xf32>
    %15 = arith.maximumf %13, %14 : vector<200x128xf32>
    %16 = arith.truncf %15 : vector<200x128xf32> to vector<200x128xbf16>
    %c0_13 = arith.constant 0 : index
    %c0_14 = arith.constant 0 : index
    %17 = vector.load %arg4[%c0_13, %c0_14] : memref<200x128xbf16, #tpu.memory_space<vmem>>, vector<200x128xbf16>
    tpu.vector_store %arg4[%c0_13, %c0_14], %16 {strides = array<i32>} : memref<200x128xbf16, #tpu.memory_space<vmem>>, vector<200x128xbf16>,
    return
  }
  func.func @transform_0(%arg0: i32) -> (i32, i32) {
    %c0_i32 = arith.constant 0 : i32
    %c0_i32_0 = arith.constant 0 : i32
    return %arg0, %c0_i32 : i32, i32
  }
  func.func @transform_1(%arg0: i32) -> (i32, i32) {
    %c0_i32 = arith.constant 0 : i32
    %c0_i32_0 = arith.constant 0 : i32
    %c0_i32_1 = arith.constant 0 : i32
    return %c0_i32, %c0_i32_0 : i32, i32
  }
  func.func @transform_2(%arg0: i32) -> (i32, i32) {
    %c0_i32 = arith.constant 0 : i32
    %c0_i32_0 = arith.constant 0 : i32
    %c0_i32_1 = arith.constant 0 : i32
    return %c0_i32, %c0_i32_0 : i32, i32
  }
  func.func @transform_3(%arg0: i32) -> (i32, i32) {
    %c0_i32 = arith.constant 0 : i32
    %c0_i32_0 = arith.constant 0 : i32
    return %arg0, %c0_i32 : i32, i32
  }
}

module attributes {stable_mosaic.version = 11 : i64} {
  func.func @_conv_bias_relu_pool_kernel(%arg0: i32, %arg1: memref<128x896xbf16, #tpu.memory_space<vmem>>, %arg2: memref<896x128xbf16, #tpu.memory_space<vmem>>, %arg3: memref<1x128xf32, #tpu.memory_space<vmem>>, %arg4: memref<32x128xbf16, #tpu.memory_space<vmem>>, %arg5: memref<128x128xf32, #tpu.memory_space<vmem>>) attributes {dimension_semantics = [#tpu.dimension_semantics<parallel>], iteration_bounds = array<i64: 2>, scalar_prefetch = 0 : i64, scratch_operands = 1 : i64, tpu.core_type = #tpu.core_type<tc>, window_params = [{transform_indices = @transform_0, window_bounds = array<i64: 128, 896>}, {pipeline_mode = #tpu.pipeline_mode<synchronous>, transform_indices = @transform_1, window_bounds = array<i64: 896, 128>}, {pipeline_mode = #tpu.pipeline_mode<synchronous>, transform_indices = @transform_2, window_bounds = array<i64: 1, 128>}, {transform_indices = @transform_3, window_bounds = array<i64: 32, 128>}]} {
    %c0 = arith.constant 0 : index
    %c0_0 = arith.constant 0 : index
    %0 = vector.load %arg1[%c0, %c0_0] : memref<128x896xbf16, #tpu.memory_space<vmem>>, vector<128x896xbf16>
    %c0_1 = arith.constant 0 : index
    %c0_2 = arith.constant 0 : index
    %1 = vector.load %arg2[%c0_1, %c0_2] : memref<896x128xbf16, #tpu.memory_space<vmem>>, vector<896x128xbf16>
    %cst = arith.constant dense<0.000000e+00> : vector<128x128xf32>
    %2 = tpu.matmul %0, %1, %cst {dimension_numbers = #tpu.dot_dimension_numbers<[1], [0], [0], [1], [0, 0, 1, 1], [], []>} : vector<128x896xbf16>, vector<896x128xbf16>, vector<128x128xf32> -> vector<128x128xf32>
    %c0_3 = arith.constant 0 : index
    %c0_4 = arith.constant 0 : index
    %3 = vector.load %arg5[%c0_3, %c0_4] : memref<128x128xf32, #tpu.memory_space<vmem>>, vector<128x128xf32>
    tpu.vector_store %arg5[%c0_3, %c0_4], %2 {strides = array<i32>} : memref<128x128xf32, #tpu.memory_space<vmem>>, vector<128x128xf32>,
    %c0_5 = arith.constant 0 : index
    %c0_6 = arith.constant 0 : index
    %4 = vector.load %arg5[%c0_5, %c0_6] : memref<128x128xf32, #tpu.memory_space<vmem>>, vector<32x128xf32>
    %c32 = arith.constant 32 : index
    %c0_7 = arith.constant 0 : index
    %5 = vector.load %arg5[%c32, %c0_7] : memref<128x128xf32, #tpu.memory_space<vmem>>, vector<32x128xf32>
    %c64 = arith.constant 64 : index
    %c0_8 = arith.constant 0 : index
    %6 = vector.load %arg5[%c64, %c0_8] : memref<128x128xf32, #tpu.memory_space<vmem>>, vector<32x128xf32>
    %c96 = arith.constant 96 : index
    %c0_9 = arith.constant 0 : index
    %7 = vector.load %arg5[%c96, %c0_9] : memref<128x128xf32, #tpu.memory_space<vmem>>, vector<32x128xf32>
    %8 = arith.maximumf %4, %5 : vector<32x128xf32>
    %9 = arith.maximumf %6, %7 : vector<32x128xf32>
    %10 = arith.maximumf %8, %9 : vector<32x128xf32>
    %c0_10 = arith.constant 0 : index
    %c0_11 = arith.constant 0 : index
    %11 = vector.load %arg3[%c0_10, %c0_11] : memref<1x128xf32, #tpu.memory_space<vmem>>, vector<1x128xf32>
    %12 = vector.broadcast %11 : vector<1x128xf32> to vector<32x128xf32>
    %13 = arith.addf %10, %12 : vector<32x128xf32>
    %cst_12 = arith.constant 0.000000e+00 : f32
    %14 = vector.broadcast %cst_12 : f32 to vector<32x128xf32>
    %15 = arith.maximumf %13, %14 : vector<32x128xf32>
    %16 = arith.truncf %15 : vector<32x128xf32> to vector<32x128xbf16>
    %c0_13 = arith.constant 0 : index
    %c0_14 = arith.constant 0 : index
    %17 = vector.load %arg4[%c0_13, %c0_14] : memref<32x128xbf16, #tpu.memory_space<vmem>>, vector<32x128xbf16>
    tpu.vector_store %arg4[%c0_13, %c0_14], %16 {strides = array<i32>} : memref<32x128xbf16, #tpu.memory_space<vmem>>, vector<32x128xbf16>,
    return
  }
  func.func @transform_0(%arg0: i32) -> (i32, i32) {
    %c0_i32 = arith.constant 0 : i32
    %c0_i32_0 = arith.constant 0 : i32
    return %arg0, %c0_i32 : i32, i32
  }
  func.func @transform_1(%arg0: i32) -> (i32, i32) {
    %c0_i32 = arith.constant 0 : i32
    %c0_i32_0 = arith.constant 0 : i32
    %c0_i32_1 = arith.constant 0 : i32
    return %c0_i32, %c0_i32_0 : i32, i32
  }
  func.func @transform_2(%arg0: i32) -> (i32, i32) {
    %c0_i32 = arith.constant 0 : i32
    %c0_i32_0 = arith.constant 0 : i32
    %c0_i32_1 = arith.constant 0 : i32
    return %c0_i32, %c0_i32_0 : i32, i32
  }
  func.func @transform_3(%arg0: i32) -> (i32, i32) {
    %c0_i32 = arith.constant 0 : i32
    %c0_i32_0 = arith.constant 0 : i32
    return %arg0, %c0_i32 : i32, i32
  }
}

module attributes {stable_mosaic.version = 11 : i64} {
  func.func @_fc_head_kernel(%arg0: i32, %arg1: memref<2x512xbf16, #tpu.memory_space<vmem>>, %arg2: memref<512x128xbf16, #tpu.memory_space<vmem>>, %arg3: memref<1x128xf32, #tpu.memory_space<vmem>>, %arg4: memref<128x128xbf16, #tpu.memory_space<vmem>>, %arg5: memref<1x128xf32, #tpu.memory_space<vmem>>, %arg6: memref<128x128xbf16, #tpu.memory_space<vmem>>, %arg7: memref<1x128xf32, #tpu.memory_space<vmem>>, %arg8: memref<2x128xf32, #tpu.memory_space<vmem>>) attributes {dimension_semantics = [#tpu.dimension_semantics<parallel>], iteration_bounds = array<i64: 1>, scalar_prefetch = 0 : i64, scratch_operands = 0 : i64, tpu.core_type = #tpu.core_type<tc>, window_params = [{transform_indices = @transform_0, window_bounds = array<i64: 2, 512>}, {pipeline_mode = #tpu.pipeline_mode<synchronous>, transform_indices = @transform_1, window_bounds = array<i64: 512, 128>}, {pipeline_mode = #tpu.pipeline_mode<synchronous>, transform_indices = @transform_2, window_bounds = array<i64: 1, 128>}, {pipeline_mode = #tpu.pipeline_mode<synchronous>, transform_indices = @transform_3, window_bounds = array<i64: 128, 128>}, {pipeline_mode = #tpu.pipeline_mode<synchronous>, transform_indices = @transform_4, window_bounds = array<i64: 1, 128>}, {pipeline_mode = #tpu.pipeline_mode<synchronous>, transform_indices = @transform_5, window_bounds = array<i64: 128, 128>}, {pipeline_mode = #tpu.pipeline_mode<synchronous>, transform_indices = @transform_6, window_bounds = array<i64: 1, 128>}, {transform_indices = @transform_7, window_bounds = array<i64: 2, 128>}]} {
    %c0 = arith.constant 0 : index
    %c0_0 = arith.constant 0 : index
    %0 = vector.load %arg1[%c0, %c0_0] : memref<2x512xbf16, #tpu.memory_space<vmem>>, vector<2x512xbf16>
    %c0_1 = arith.constant 0 : index
    %c0_2 = arith.constant 0 : index
    %1 = vector.load %arg2[%c0_1, %c0_2] : memref<512x128xbf16, #tpu.memory_space<vmem>>, vector<512x128xbf16>
    %cst = arith.constant dense<0.000000e+00> : vector<2x128xf32>
    %2 = tpu.matmul %0, %1, %cst {dimension_numbers = #tpu.dot_dimension_numbers<[1], [0], [0], [1], [0, 0, 1, 1], [], []>} : vector<2x512xbf16>, vector<512x128xbf16>, vector<2x128xf32> -> vector<2x128xf32>
    %c0_3 = arith.constant 0 : index
    %c0_4 = arith.constant 0 : index
    %3 = vector.load %arg3[%c0_3, %c0_4] : memref<1x128xf32, #tpu.memory_space<vmem>>, vector<1x128xf32>
    %4 = vector.broadcast %3 : vector<1x128xf32> to vector<2x128xf32>
    %5 = arith.addf %2, %4 : vector<2x128xf32>
    %cst_5 = arith.constant 0.000000e+00 : f32
    %6 = vector.broadcast %cst_5 : f32 to vector<2x128xf32>
    %7 = arith.maximumf %5, %6 : vector<2x128xf32>
    %8 = arith.truncf %7 : vector<2x128xf32> to vector<2x128xbf16>
    %c0_6 = arith.constant 0 : index
    %c0_7 = arith.constant 0 : index
    %9 = vector.load %arg4[%c0_6, %c0_7] : memref<128x128xbf16, #tpu.memory_space<vmem>>, vector<128x128xbf16>
    %cst_8 = arith.constant dense<0.000000e+00> : vector<2x128xf32>
    %10 = tpu.matmul %8, %9, %cst_8 {dimension_numbers = #tpu.dot_dimension_numbers<[1], [0], [0], [1], [0, 0, 1, 1], [], []>} : vector<2x128xbf16>, vector<128x128xbf16>, vector<2x128xf32> -> vector<2x128xf32>
    %c0_9 = arith.constant 0 : index
    %c0_10 = arith.constant 0 : index
    %11 = vector.load %arg5[%c0_9, %c0_10] : memref<1x128xf32, #tpu.memory_space<vmem>>, vector<1x128xf32>
    %12 = vector.broadcast %11 : vector<1x128xf32> to vector<2x128xf32>
    %13 = arith.addf %10, %12 : vector<2x128xf32>
    %cst_11 = arith.constant 0.000000e+00 : f32
    %14 = vector.broadcast %cst_11 : f32 to vector<2x128xf32>
    %15 = arith.maximumf %13, %14 : vector<2x128xf32>
    %16 = arith.truncf %15 : vector<2x128xf32> to vector<2x128xbf16>
    %c0_12 = arith.constant 0 : index
    %c0_13 = arith.constant 0 : index
    %17 = vector.load %arg6[%c0_12, %c0_13] : memref<128x128xbf16, #tpu.memory_space<vmem>>, vector<128x128xbf16>
    %cst_14 = arith.constant dense<0.000000e+00> : vector<2x128xf32>
    %18 = tpu.matmul %16, %17, %cst_14 {dimension_numbers = #tpu.dot_dimension_numbers<[1], [0], [0], [1], [0, 0, 1, 1], [], []>} : vector<2x128xbf16>, vector<128x128xbf16>, vector<2x128xf32> -> vector<2x128xf32>
    %c0_15 = arith.constant 0 : index
    %c0_16 = arith.constant 0 : index
    %19 = vector.load %arg7[%c0_15, %c0_16] : memref<1x128xf32, #tpu.memory_space<vmem>>, vector<1x128xf32>
    %20 = vector.broadcast %19 : vector<1x128xf32> to vector<2x128xf32>
    %21 = arith.addf %18, %20 : vector<2x128xf32>
    %c0_17 = arith.constant 0 : index
    %c0_18 = arith.constant 0 : index
    %22 = vector.load %arg8[%c0_17, %c0_18] : memref<2x128xf32, #tpu.memory_space<vmem>>, vector<2x128xf32>
    tpu.vector_store %arg8[%c0_17, %c0_18], %21 {strides = array<i32>} : memref<2x128xf32, #tpu.memory_space<vmem>>, vector<2x128xf32>,
    return
  }
  func.func @transform_0(%arg0: i32) -> (i32, i32) {
    %c0_i32 = arith.constant 0 : i32
    %c0_i32_0 = arith.constant 0 : i32
    return %arg0, %c0_i32 : i32, i32
  }
  func.func @transform_1(%arg0: i32) -> (i32, i32) {
    %c0_i32 = arith.constant 0 : i32
    %c0_i32_0 = arith.constant 0 : i32
    %c0_i32_1 = arith.constant 0 : i32
    return %c0_i32, %c0_i32_0 : i32, i32
  }
  func.func @transform_2(%arg0: i32) -> (i32, i32) {
    %c0_i32 = arith.constant 0 : i32
    %c0_i32_0 = arith.constant 0 : i32
    %c0_i32_1 = arith.constant 0 : i32
    return %c0_i32, %c0_i32_0 : i32, i32
  }
  func.func @transform_3(%arg0: i32) -> (i32, i32) {
    %c0_i32 = arith.constant 0 : i32
    %c0_i32_0 = arith.constant 0 : i32
    %c0_i32_1 = arith.constant 0 : i32
    return %c0_i32, %c0_i32_0 : i32, i32
  }
  func.func @transform_4(%arg0: i32) -> (i32, i32) {
    %c0_i32 = arith.constant 0 : i32
    %c0_i32_0 = arith.constant 0 : i32
    %c0_i32_1 = arith.constant 0 : i32
    return %c0_i32, %c0_i32_0 : i32, i32
  }
  func.func @transform_5(%arg0: i32) -> (i32, i32) {
    %c0_i32 = arith.constant 0 : i32
    %c0_i32_0 = arith.constant 0 : i32
    %c0_i32_1 = arith.constant 0 : i32
    return %c0_i32, %c0_i32_0 : i32, i32
  }
  func.func @transform_6(%arg0: i32) -> (i32, i32) {
    %c0_i32 = arith.constant 0 : i32
    %c0_i32_0 = arith.constant 0 : i32
    %c0_i32_1 = arith.constant 0 : i32
    return %c0_i32, %c0_i32_0 : i32, i32
  }
  func.func @transform_7(%arg0: i32) -> (i32, i32) {
    %c0_i32 = arith.constant 0 : i32
    %c0_i32_0 = arith.constant 0 : i32
    return %arg0, %c0_i32 : i32, i32
  }
}

</mosaic_0001>

<llo_original>
// kernel: net_forward.3
$region0: #{net_forward.3}
  #allocation0 [shape = 'u32[]', space=smem, size = 0x4, offset = 0x4, fixed_abs, tag = 'smem constant byte address 0x4 - core index']
  #allocation1 [shape = 'u32[144,128]{1,0:T(1,128)}', space=vmem, size = 0x12000, scoped, tag = 'internal scratch']
  #allocation2 [shape = 'f32[800,128]{1,0:T(8,128)}', space=vmem, size = 0x64000, scoped, tag = 'scratch operand']
  %s0 = inlined_call_operand.vmem [shape: bf16[1600,128], index: 0, kind: input, shape index: {}]
  %s1 = inlined_call_operand.vmem [shape: bf16[128,128], index: 1, kind: input, shape index: {}]
  %s2 = inlined_call_operand.vmem [shape: f32[1,128], index: 2, kind: input, shape index: {}]
  %s3 = inlined_call_operand.vmem [shape: bf16[400,128], index: 3, kind: output, shape index: {}]
  %s4 = sld [smem:[#allocation0]]
  $region45: #{net_forward.3} parent=0
    _
  %s6 = ssub.s32 1, %s4
  %s7 = scalar_select 0, %s6, %s4
  loop: start=0, step=1, limit=4
  $region2: #{net_forward.3} parent=0 // loop_pre_header
    _
  $region3: #{net_forward.3} parent=0 // loop_header
    %s9 = sphi 0, %s13
    %p10 = scmp.ge.s32.totalorder %s9, 4
    %s19 = sphi 0, %s21
    %s22 = sphi 0, %s19
    %s23 = sphi 0, %s22
    %s39 = sphi 0, %s23
    %s43 = sphi 0, %s43
    %s45 = sphi 0, %s43
    %s46 = sphi 0, %s45
    %s60 = sphi 0, %s46
    %s64 = sphi 0, %s64
    %s66 = sphi 0, %s64
    %s67 = sphi 0, %s66
    %s81 = sphi 0, %s67
    %s87 = sphi 0, %s89
    %s90 = sphi 0, %s87
    %s91 = sphi 0, %s90
    %s107 = sphi 0, %s91
  $region4: #{net_forward.3} parent=0 // loop_header_branch
    %12 = sbr.rel (%p10) target = $region8
  $region5: #{net_forward.3} parent=0 // loop_body
    %s14 = ssub.s32 %s9, 1
    %s15 = ssub.s32 %s9, 2
    %s16 = sadd.s32 %s9, 1
    %s17 = ssub.s32 %s9, %s16
    %p18 = scmp.eq.s32.totalorder %s17, 0
    %s20 = sadd.s32 %s19, 1
    %s21 = scalar_select %p18, %s19, %s20
    %p24 = pneg %p18
    %p25 = scmp.eq.s32.totalorder %s9, 1
    %p26 = por %p24, %p25
    %p27 = scmp.ne.s32.totalorder %s19, %s22
    %p28 = scmp.eq.s32.totalorder %s9, 0
    %p29 = por %p27, %p28
    %p30 = scmp.ne.s32.totalorder %s19, %s22
    %p31 = scmp.eq.s32.totalorder %s14, 1
    %p32 = por %p30, %p31
    %p33 = scmp.ne.s32.totalorder %s22, %s23
    %p34 = scmp.eq.s32.totalorder %s14, 0
    %p35 = por %p33, %p34
    %p36 = scmp.ne.s32.totalorder %s22, %s23
    %p37 = scmp.eq.s32.totalorder %s15, 1
    %p38 = por %p36, %p37
    %p40 = scmp.ne.s32.totalorder %s23, %s39
    %p41 = scmp.eq.s32.totalorder %s15, 0
    %p42 = por %p40, %p41
    %s44 = sadd.s32 %s43, 1
    %p47 = scmp.eq.s32.totalorder %s9, 1
    %p48 = scmp.ne.s32.totalorder %s43, %s45
    %p49 = scmp.eq.s32.totalorder %s9, 0
    %p50 = por %p48, %p49
    %p51 = scmp.ne.s32.totalorder %s43, %s45
    %p52 = scmp.eq.s32.totalorder %s14, 1
    %p53 = por %p51, %p52
    %p54 = scmp.ne.s32.totalorder %s45, %s46
    %p55 = scmp.eq.s32.totalorder %s14, 0
    %p56 = por %p54, %p55
    %p57 = scmp.ne.s32.totalorder %s45, %s46
    %p58 = scmp.eq.s32.totalorder %s15, 1
    %p59 = por %p57, %p58
    %p61 = scmp.ne.s32.totalorder %s46, %s60
    %p62 = scmp.eq.s32.totalorder %s15, 0
    %p63 = por %p61, %p62
    %s65 = sadd.s32 %s64, 1
    %p68 = scmp.eq.s32.totalorder %s9, 1
    %p69 = scmp.ne.s32.totalorder %s64, %s66
    %p70 = scmp.eq.s32.totalorder %s9, 0
    %p71 = por %p69, %p70
    %p72 = scmp.ne.s32.totalorder %s64, %s66
    %p73 = scmp.eq.s32.totalorder %s14, 1
    %p74 = por %p72, %p73
    %p75 = scmp.ne.s32.totalorder %s66, %s67
    %p76 = scmp.eq.s32.totalorder %s14, 0
    %p77 = por %p75, %p76
    %p78 = scmp.ne.s32.totalorder %s66, %s67
    %p79 = scmp.eq.s32.totalorder %s15, 1
    %p80 = por %p78, %p79
    %p82 = scmp.ne.s32.totalorder %s67, %s81
    %p83 = scmp.eq.s32.totalorder %s15, 0
    %p84 = por %p82, %p83
    %s85 = ssub.s32 %s9, %s16
    %p86 = scmp.eq.s32.totalorder %s85, 0
    %s88 = sadd.s32 %s87, 1
    %s89 = scalar_select %p86, %s87, %s88
    %p92 = pneg %p86
    %p93 = scmp.eq.s32.totalorder %s9, 1
    %p94 = por %p92, %p93
    %p95 = scmp.ne.s32.totalorder %s87, %s90
    %p96 = scmp.eq.s32.totalorder %s9, 0
    %p97 = por %p95, %p96
    %p98 = scmp.ne.s32.totalorder %s87, %s90
    %p99 = scmp.eq.s32.totalorder %s14, 1
    %p100 = por %p98, %p99
    %p101 = scmp.ne.s32.totalorder %s90, %s91
    %p102 = scmp.eq.s32.totalorder %s14, 0
    %p103 = por %p101, %p102
    %p104 = scmp.ne.s32.totalorder %s90, %s91
    %p105 = scmp.eq.s32.totalorder %s15, 1
    %p106 = por %p104, %p105
    %p108 = scmp.ne.s32.totalorder %s91, %s107
    %p109 = scmp.eq.s32.totalorder %s15, 0
    %p110 = por %p108, %p109
    %p111 = scmp.le.s32.totalorder 1, %s9
    %p112 = scmp.lt.s32.totalorder %s9, 3
    %p113 = pnand %p111, %p112
    %p114 = pneg %p113
    // Predicated region
    $region9: #{net_forward.3} parent=5 // pred_check
      _
    $region10: #{net_forward.3} parent=5 // pred_check_branch
      %116 = sbr.rel (%p113) target = $region12
    $region11: #{net_forward.3} parent=5 // pred_region
      %s117 = ssub.s32 %s9, 1
      // Predicated region
      $region13: #{net_forward.3} parent=11 // pred_check
        %p118 = pneg %p56
      $region14: #{net_forward.3} parent=11 // pred_check_branch
        %120 = sbr.rel (%p118) target = $region16
      $region15: #{net_forward.3} parent=11 // pred_region
        _
      $region16: #{net_forward.3} parent=11 // pred_fallthru
        _
      // Predicated region
      $region17: #{net_forward.3} parent=11 // pred_check
        %p121 = pneg %p77
      $region18: #{net_forward.3} parent=11 // pred_check_branch
        %123 = sbr.rel (%p121) target = $region20
      $region19: #{net_forward.3} parent=11 // pred_region
        _
      $region20: #{net_forward.3} parent=11 // pred_fallthru
        _
    $region12: #{net_forward.3} parent=5 // pred_fallthru
      _
    %p124 = scmp.lt.s32.totalorder %s9, 2
    // Predicated region
    $region21: #{net_forward.3} parent=5 // pred_check
      %p125 = pneg %p124
    $region22: #{net_forward.3} parent=5 // pred_check_branch
      %127 = sbr.rel (%p125) target = $region24
    $region23: #{net_forward.3} parent=5 // pred_region
      // Predicated region
      $region25: #{net_forward.3} parent=23 // pred_check
        %p128 = pneg %p29
      $region26: #{net_forward.3} parent=23 // pred_check_branch
        %130 = sbr.rel (%p128) target = $region28
      $region27: #{net_forward.3} parent=23 // pred_region
        %s131 = smul.u32 100, %s9
        %p132 = scmp.lt.s32.totalorder %s131, 199
        %s133 = scalar_select %p132, %s131, 199
        %s134 = smul.addr %s133, 4
        %s135 = scalar_lea.vmem %s0, %s134
        %s136 = smul.u32 100, %s9
      $region28: #{net_forward.3} parent=23 // pred_fallthru
        _
    $region24: #{net_forward.3} parent=5 // pred_fallthru
      _
    %p137 = scmp.le.s32.totalorder 1, %s9
    %p138 = scmp.lt.s32.totalorder %s9, 3
    %p139 = pnand %p137, %p138
    %p140 = pneg %p139
    // Predicated region
    $region29: #{net_forward.3} parent=5 // pred_check
      _
    $region30: #{net_forward.3} parent=5 // pred_check_branch
      %142 = sbr.rel (%p139) target = $region32
    $region31: #{net_forward.3} parent=5 // pred_region
      %s143 = ssub.s32 %s9, 1
      %s144 = smul.u32 100, %s14
      %p145 = scmp.lt.s32.totalorder %s144, 199
      %s146 = scalar_select %p145, %s144, 199
      %s147 = smul.addr %s146, 4
      %s148 = scalar_lea.vmem %s0, %s147
      %p149 = pneg %p35
      %p150 = pneg %p32
      %p151 = pneg %p56
      %p152 = pneg %p53
      %p153 = pneg %p77
      %p154 = pneg %p74
      %p155 = pneg %p103
      %p156 = pneg %p100
      %s157 = smul.u32 25, %s14
      %p158 = scmp.lt.s32.totalorder %s157, 49
      %s159 = scalar_select %p158, %s157, 49
      %s160 = smul.addr %s159, 4
      %s161 = scalar_lea.vmem %s3, %s160
      %s162 = smul.u32 100, %s14
      %p163 = scmp.lt.s32.totalorder %s162, 199
      %s164 = scalar_select %p163, %s162, 199
      %s165 = smul.addr %s164, 4
      %s166 = scalar_lea.vmem %s0, %s165
      %s167 = smul.u32 100, %s14
      %s168 = smul.u32 25, %s14
      %p169 = scmp.lt.s32.totalorder %s168, 49
      %s170 = scalar_select %p169, %s168, 49
      %s171 = smul.addr %s170, 4
      %s172 = scalar_lea.vmem %s3, %s171
      %s173 = smul.u32 25, %s14
      %v175 = vld [vmem:[%s166] sm:$0xf]
      %v176 = vld [vmem:[%s166 + $0x4] sm:$0xf]
      %v177 = vld [vmem:[%s166 + $0x8] sm:$0xf]
      %v178 = vld [vmem:[%s166 + $0xc] sm:$0xf]
      %v179 = vld [vmem:[%s166 + $0x10] sm:$0xf]
      %v180 = vld [vmem:[%s166 + $0x14] sm:$0xf]
      %v181 = vld [vmem:[%s166 + $0x18] sm:$0xf]
      %v182 = vld [vmem:[%s166 + $0x1c] sm:$0xf]
      %v183 = vld [vmem:[%s166 + $0x20] sm:$0xf]
      %v184 = vld [vmem:[%s166 + $0x24] sm:$0xf]
      %v185 = vld [vmem:[%s166 + $0x28] sm:$0xf]
      %v186 = vld [vmem:[%s166 + $0x2c] sm:$0xf]
      %v187 = vld [vmem:[%s166 + $0x30] sm:$0xf]
      %v188 = vld [vmem:[%s166 + $0x34] sm:$0xf]
      %v189 = vld [vmem:[%s166 + $0x38] sm:$0xf]
      %v190 = vld [vmem:[%s166 + $0x3c] sm:$0xf]
      %v191 = vld [vmem:[%s166 + $0x40] sm:$0xf]
      %v192 = vld [vmem:[%s166 + $0x44] sm:$0xf]
      %v193 = vld [vmem:[%s166 + $0x48] sm:$0xf]
      %v194 = vld [vmem:[%s166 + $0x4c] sm:$0xf]
      %v195 = vld [vmem:[%s166 + $0x50] sm:$0xf]
      %v196 = vld [vmem:[%s166 + $0x54] sm:$0xf]
      %v197 = vld [vmem:[%s166 + $0x58] sm:$0xf]
      %v198 = vld [vmem:[%s166 + $0x5c] sm:$0xf]
      %v199 = vld [vmem:[%s166 + $0x60] sm:$0xf]
      %v200 = vld [vmem:[%s166 + $0x64] sm:$0xf]
      %v201 = vld [vmem:[%s166 + $0x68] sm:$0xf]
      %v202 = vld [vmem:[%s166 + $0x6c] sm:$0xf]
      %v203 = vld [vmem:[%s166 + $0x70] sm:$0xf]
      %v204 = vld [vmem:[%s166 + $0x74] sm:$0xf]
      %v205 = vld [vmem:[%s166 + $0x78] sm:$0xf]
      %v206 = vld [vmem:[%s166 + $0x7c] sm:$0xf]
      %v207 = vld [vmem:[%s166 + $0x80] sm:$0xf]
      %v208 = vld [vmem:[%s166 + $0x84] sm:$0xf]
      %v209 = vld [vmem:[%s166 + $0x88] sm:$0xf]
      %v210 = vld [vmem:[%s166 + $0x8c] sm:$0xf]
      %v211 = vld [vmem:[%s166 + $0x90] sm:$0xf]
      %v212 = vld [vmem:[%s166 + $0x94] sm:$0xf]
      %v213 = vld [vmem:[%s166 + $0x98] sm:$0xf]
      %v214 = vld [vmem:[%s166 + $0x9c] sm:$0xf]
      %v215 = vld [vmem:[%s166 + $0xa0] sm:$0xf]
      %v216 = vld [vmem:[%s166 + $0xa4] sm:$0xf]
      %v217 = vld [vmem:[%s166 + $0xa8] sm:$0xf]
      %v218 = vld [vmem:[%s166 + $0xac] sm:$0xf]
      %v219 = vld [vmem:[%s166 + $0xb0] sm:$0xf]
      %v220 = vld [vmem:[%s166 + $0xb4] sm:$0xf]
      %v221 = vld [vmem:[%s166 + $0xb8] sm:$0xf]
      %v222 = vld [vmem:[%s166 + $0xbc] sm:$0xf]
      %v223 = vld [vmem:[%s166 + $0xc0] sm:$0xf]
      %v224 = vld [vmem:[%s166 + $0xc4] sm:$0xf]
      %v225 = vld [vmem:[%s166 + $0xc8] sm:$0xf]
      %v226 = vld [vmem:[%s166 + $0xcc] sm:$0xf]
      %v227 = vld [vmem:[%s166 + $0xd0] sm:$0xf]
      %v228 = vld [vmem:[%s166 + $0xd4] sm:$0xf]
      %v229 = vld [vmem:[%s166 + $0xd8] sm:$0xf]
      %v230 = vld [vmem:[%s166 + $0xdc] sm:$0xf]
      %v231 = vld [vmem:[%s166 + $0xe0] sm:$0xf]
      %v232 = vld [vmem:[%s166 + $0xe4] sm:$0xf]
      %v233 = vld [vmem:[%s166 + $0xe8] sm:$0xf]
      %v234 = vld [vmem:[%s166 + $0xec] sm:$0xf]
      %v235 = vld [vmem:[%s166 + $0xf0] sm:$0xf]
      %v236 = vld [vmem:[%s166 + $0xf4] sm:$0xf]
      %v237 = vld [vmem:[%s166 + $0xf8] sm:$0xf]
      %v238 = vld [vmem:[%s166 + $0xfc] sm:$0xf]
      %v239 = vld [vmem:[%s166 + $0x100] sm:$0xf]
      %v240 = vld [vmem:[%s166 + $0x104] sm:$0xf]
      %v241 = vld [vmem:[%s166 + $0x108] sm:$0xf]
      %v242 = vld [vmem:[%s166 + $0x10c] sm:$0xf]
      %v243 = vld [vmem:[%s166 + $0x110] sm:$0xf]
      %v244 = vld [vmem:[%s166 + $0x114] sm:$0xf]
      %v245 = vld [vmem:[%s166 + $0x118] sm:$0xf]
      %v246 = vld [vmem:[%s166 + $0x11c] sm:$0xf]
      %v247 = vld [vmem:[%s166 + $0x120] sm:$0xf]
      %v248 = vld [vmem:[%s166 + $0x124] sm:$0xf]
      %v249 = vld [vmem:[%s166 + $0x128] sm:$0xf]
      %v250 = vld [vmem:[%s166 + $0x12c] sm:$0xf]
      %v251 = vld [vmem:[%s166 + $0x130] sm:$0xf]
      %v252 = vld [vmem:[%s166 + $0x134] sm:$0xf]
      %v253 = vld [vmem:[%s166 + $0x138] sm:$0xf]
      %v254 = vld [vmem:[%s166 + $0x13c] sm:$0xf]
      %v255 = vld [vmem:[%s166 + $0x140] sm:$0xf]
      %v256 = vld [vmem:[%s166 + $0x144] sm:$0xf]
      %v257 = vld [vmem:[%s166 + $0x148] sm:$0xf]
      %v258 = vld [vmem:[%s166 + $0x14c] sm:$0xf]
      %v259 = vld [vmem:[%s166 + $0x150] sm:$0xf]
      %v260 = vld [vmem:[%s166 + $0x154] sm:$0xf]
      %v261 = vld [vmem:[%s166 + $0x158] sm:$0xf]
      %v262 = vld [vmem:[%s166 + $0x15c] sm:$0xf]
      %v263 = vld [vmem:[%s166 + $0x160] sm:$0xf]
      %v264 = vld [vmem:[%s166 + $0x164] sm:$0xf]
      %v265 = vld [vmem:[%s166 + $0x168] sm:$0xf]
      %v266 = vld [vmem:[%s166 + $0x16c] sm:$0xf]
      %v267 = vld [vmem:[%s166 + $0x170] sm:$0xf]
      %v268 = vld [vmem:[%s166 + $0x174] sm:$0xf]
      %v269 = vld [vmem:[%s166 + $0x178] sm:$0xf]
      %v270 = vld [vmem:[%s166 + $0x17c] sm:$0xf]
      %v271 = vld [vmem:[%s166 + $0x180] sm:$0xf]
      %v272 = vld [vmem:[%s166 + $0x184] sm:$0xf]
      %v273 = vld [vmem:[%s166 + $0x188] sm:$0xf]
      %v274 = vld [vmem:[%s166 + $0x18c] sm:$0xf]
      %v275 = vld [vmem:[%s1] sm:$0xf]
      %v276 = vld [vmem:[%s1 + $0x4] sm:$0xf]
      %v277 = vld [vmem:[%s1 + $0x8] sm:$0xf]
      %v278 = vld [vmem:[%s1 + $0xc] sm:$0xf]
      %v279 = vld [vmem:[%s1 + $0x10] sm:$0xf]
      %v280 = vld [vmem:[%s1 + $0x14] sm:$0xf]
      %v281 = vld [vmem:[%s1 + $0x18] sm:$0xf]
      %v282 = vld [vmem:[%s1 + $0x1c] sm:$0xf]
      %v283 = vld [vmem:[%s1 + $0x20] sm:$0xf]
      %v284 = vld [vmem:[%s1 + $0x24] sm:$0xf]
      %v285 = vld [vmem:[%s1 + $0x28] sm:$0xf]
      %v286 = vld [vmem:[%s1 + $0x2c] sm:$0xf]
      %v287 = vld [vmem:[%s1 + $0x30] sm:$0xf]
      %v288 = vld [vmem:[%s1 + $0x34] sm:$0xf]
      %v289 = vld [vmem:[%s1 + $0x38] sm:$0xf]
      %v290 = vld [vmem:[%s1 + $0x3c] sm:$0xf]
      %v391 = vunpack.c.l.b16 %v175
      %v392 = vunpack.c.l.b16 %v176
      %v393 = vunpack.c.l.b16 %v177
      %v394 = vunpack.c.l.b16 %v178
      %v395 = vunpack.c.l.b16 %v179
      %v396 = vunpack.c.l.b16 %v180
      %v397 = vunpack.c.l.b16 %v181
      %v398 = vunpack.c.l.b16 %v182
      %v399 = vunpack.c.l.b16 %v183
      %v400 = vunpack.c.l.b16 %v184
      %v401 = vunpack.c.l.b16 %v185
      %v402 = vunpack.c.l.b16 %v186
      %v403 = vunpack.c.l.b16 %v187
      %v404 = vunpack.c.l.b16 %v188
      %v405 = vunpack.c.l.b16 %v189
      %v406 = vunpack.c.l.b16 %v190
      %v407 = vunpack.c.l.b16 %v191
      %v408 = vunpack.c.l.b16 %v192
      %v409 = vunpack.c.l.b16 %v193
      %v410 = vunpack.c.l.b16 %v194
      %v411 = vunpack.c.l.b16 %v195
      %v412 = vunpack.c.l.b16 %v196
      %v413 = vunpack.c.l.b16 %v197
      %v414 = vunpack.c.l.b16 %v198
      %v415 = vunpack.c.l.b16 %v199
      %v416 = vunpack.c.l.b16 %v200
      %v417 = vunpack.c.l.b16 %v201
      %v418 = vunpack.c.l.b16 %v202
      %v419 = vunpack.c.l.b16 %v203
      %v420 = vunpack.c.l.b16 %v204
      %v421 = vunpack.c.l.b16 %v205
      %v422 = vunpack.c.l.b16 %v206
      %v423 = vunpack.c.l.b16 %v207
      %v424 = vunpack.c.l.b16 %v208
      %v425 = vunpack.c.l.b16 %v209
      %v426 = vunpack.c.l.b16 %v210
      %v427 = vunpack.c.l.b16 %v211
      %v428 = vunpack.c.l.b16 %v212
      %v429 = vunpack.c.l.b16 %v213
      %v430 = vunpack.c.l.b16 %v214
      %v431 = vunpack.c.l.b16 %v215
      %v432 = vunpack.c.l.b16 %v216
      %v433 = vunpack.c.l.b16 %v217
      %v434 = vunpack.c.l.b16 %v218
      %v435 = vunpack.c.l.b16 %v219
      %v436 = vunpack.c.l.b16 %v220
      %v437 = vunpack.c.l.b16 %v221
      %v438 = vunpack.c.l.b16 %v222
      %v439 = vunpack.c.l.b16 %v223
      %v440 = vunpack.c.l.b16 %v224
      %v441 = vunpack.c.l.b16 %v225
      %v442 = vunpack.c.l.b16 %v226
      %v443 = vunpack.c.l.b16 %v227
      %v444 = vunpack.c.l.b16 %v228
      %v445 = vunpack.c.l.b16 %v229
      %v446 = vunpack.c.l.b16 %v230
      %v447 = vunpack.c.l.b16 %v231
      %v448 = vunpack.c.l.b16 %v232
      %v449 = vunpack.c.l.b16 %v233
      %v450 = vunpack.c.l.b16 %v234
      %v451 = vunpack.c.l.b16 %v235
      %v452 = vunpack.c.l.b16 %v236
      %v453 = vunpack.c.l.b16 %v237
      %v454 = vunpack.c.l.b16 %v238
      %v455 = vunpack.c.l.b16 %v239
      %v456 = vunpack.c.l.b16 %v240
      %v457 = vunpack.c.l.b16 %v241
      %v458 = vunpack.c.l.b16 %v242
      %v459 = vunpack.c.l.b16 %v243
      %v460 = vunpack.c.l.b16 %v244
      %v461 = vunpack.c.l.b16 %v245
      %v462 = vunpack.c.l.b16 %v246
      %v463 = vunpack.c.l.b16 %v247
      %v464 = vunpack.c.l.b16 %v248
      %v465 = vunpack.c.l.b16 %v249
      %v466 = vunpack.c.l.b16 %v250
      %v467 = vunpack.c.l.b16 %v251
      %v468 = vunpack.c.l.b16 %v252
      %v469 = vunpack.c.l.b16 %v253
      %v470 = vunpack.c.l.b16 %v254
      %v471 = vunpack.c.l.b16 %v255
      %v472 = vunpack.c.l.b16 %v256
      %v473 = vunpack.c.l.b16 %v257
      %v474 = vunpack.c.l.b16 %v258
      %v475 = vunpack.c.l.b16 %v259
      %v476 = vunpack.c.l.b16 %v260
      %v477 = vunpack.c.l.b16 %v261
      %v478 = vunpack.c.l.b16 %v262
      %v479 = vunpack.c.l.b16 %v263
      %v480 = vunpack.c.l.b16 %v264
      %v481 = vunpack.c.l.b16 %v265
      %v482 = vunpack.c.l.b16 %v266
      %v483 = vunpack.c.l.b16 %v267
      %v484 = vunpack.c.l.b16 %v268
      %v485 = vunpack.c.l.b16 %v269
      %v486 = vunpack.c.l.b16 %v270
      %v487 = vunpack.c.l.b16 %v271
      %v488 = vunpack.c.l.b16 %v272
      %v489 = vunpack.c.l.b16 %v273
      %v490 = vunpack.c.l.b16 %v274
      %v491 = vpack.c.b16 %v392, %v391
      %v492 = vpack.c.b16 %v394, %v393
      %v493 = vpack.c.b16 %v396, %v395
      %v494 = vpack.c.b16 %v398, %v397
      %v495 = vpack.c.b16 %v400, %v399
      %v496 = vpack.c.b16 %v402, %v401
      %v497 = vpack.c.b16 %v404, %v403
      %v498 = vpack.c.b16 %v406, %v405
      %v499 = vpack.c.b16 %v408, %v407
      %v500 = vpack.c.b16 %v410, %v409
      %v501 = vpack.c.b16 %v412, %v411
      %v502 = vpack.c.b16 %v414, %v413
      %v503 = vpack.c.b16 %v416, %v415
      %v504 = vpack.c.b16 %v418, %v417
      %v505 = vpack.c.b16 %v420, %v419
      %v506 = vpack.c.b16 %v422, %v421
      %v507 = vpack.c.b16 %v424, %v423
      %v508 = vpack.c.b16 %v426, %v425
      %v509 = vpack.c.b16 %v428, %v427
      %v510 = vpack.c.b16 %v430, %v429
      %v511 = vpack.c.b16 %v432, %v431
      %v512 = vpack.c.b16 %v434, %v433
      %v513 = vpack.c.b16 %v436, %v435
      %v514 = vpack.c.b16 %v438, %v437
      %v515 = vpack.c.b16 %v440, %v439
      %v516 = vpack.c.b16 %v442, %v441
      %v517 = vpack.c.b16 %v444, %v443
      %v518 = vpack.c.b16 %v446, %v445
      %v519 = vpack.c.b16 %v448, %v447
      %v520 = vpack.c.b16 %v450, %v449
      %v521 = vpack.c.b16 %v452, %v451
      %v522 = vpack.c.b16 %v454, %v453
      %v523 = vpack.c.b16 %v456, %v455
      %v524 = vpack.c.b16 %v458, %v457
      %v525 = vpack.c.b16 %v460, %v459
      %v526 = vpack.c.b16 %v462, %v461
      %v527 = vpack.c.b16 %v464, %v463
      %v528 = vpack.c.b16 %v466, %v465
      %v529 = vpack.c.b16 %v468, %v467
      %v530 = vpack.c.b16 %v470, %v469
      %v531 = vpack.c.b16 %v472, %v471
      %v532 = vpack.c.b16 %v474, %v473
      %v533 = vpack.c.b16 %v476, %v475
      %v534 = vpack.c.b16 %v478, %v477
      %v535 = vpack.c.b16 %v480, %v479
      %v536 = vpack.c.b16 %v482, %v481
      %v537 = vpack.c.b16 %v484, %v483
      %v538 = vpack.c.b16 %v486, %v485
      %v539 = vpack.c.b16 %v488, %v487
      %v540 = vpack.c.b16 %v490, %v489
      %v607 = vunpack.c.l.b16 %v275
      %v608 = vunpack.c.l.b16 %v276
      %v609 = vunpack.c.l.b16 %v277
      %v610 = vunpack.c.l.b16 %v278
      %v611 = vunpack.c.l.b16 %v279
      %v612 = vunpack.c.l.b16 %v280
      %v613 = vunpack.c.l.b16 %v281
      %v614 = vunpack.c.l.b16 %v282
      %v615 = vunpack.c.l.b16 %v283
      %v616 = vunpack.c.l.b16 %v284
      %v617 = vunpack.c.l.b16 %v285
      %v618 = vunpack.c.l.b16 %v286
      %v619 = vunpack.c.l.b16 %v287
      %v620 = vunpack.c.l.b16 %v288
      %v621 = vunpack.c.l.b16 %v289
      %v622 = vunpack.c.l.b16 %v290
      %v623 = vpack.c.b16 %v608, %v607
      %v624 = vpack.c.b16 %v610, %v609
      %v625 = vpack.c.b16 %v612, %v611
      %v626 = vpack.c.b16 %v614, %v613
      %v627 = vpack.c.b16 %v616, %v615
      %v628 = vpack.c.b16 %v618, %v617
      %v629 = vpack.c.b16 %v620, %v619
      %v630 = vpack.c.b16 %v622, %v621
      %639 = vmatprep.subr.bf16.mxu0 0
      %640 = vmatpush1.bf16.msra.mxu0 %v623
      %641 = vmatprep.subr.bf16.mxu0 0
      %642 = vmatpush1.bf16.msra.mxu0 %v624
      %643 = vmatprep.subr.bf16.mxu0 0
      %644 = vmatpush1.bf16.msra.mxu0 %v625
      %645 = vmatprep.subr.bf16.mxu0 0
      %646 = vmatpush1.bf16.msra.mxu0 %v626
      %647 = vmatprep.subr.bf16.mxu0 0
      %648 = vmatpush1.bf16.msra.mxu0 %v627
      %649 = vmatprep.subr.bf16.mxu0 0
      %650 = vmatpush1.bf16.msra.mxu0 %v628
      %651 = vmatprep.subr.bf16.mxu0 0
      %652 = vmatpush1.bf16.msra.mxu0 %v629
      %653 = vmatprep.subr.bf16.mxu0 0
      %654 = vmatpush1.bf16.msra.mxu0 %v630
      %655 = vmatprep.subr.bf16.mxu0 0
      %656 = vmatpush1.bf16.msra.mxu0 0
      %657 = vmatprep.subr.bf16.mxu0 0
      %658 = vmatpush1.bf16.msra.mxu0 0
      %659 = vmatprep.subr.bf16.mxu0 0
      %660 = vmatpush1.bf16.msra.mxu0 0
      %661 = vmatprep.subr.bf16.mxu0 0
      %662 = vmatpush1.bf16.msra.mxu0 0
      %663 = vmatprep.subr.bf16.mxu0 0
      %664 = vmatpush1.bf16.msra.mxu0 0
      %665 = vmatprep.subr.bf16.mxu0 0
      %666 = vmatpush1.bf16.msra.mxu0 0
      %667 = vmatprep.subr.bf16.mxu0 0
      %668 = vmatpush1.bf16.msra.mxu0 0
      %669 = vmatprep.subr.bf16.mxu0 0
      %670 = vmatpush1.bf16.msra.mxu0 0
      %671 = vmatprep.mubr.bf16.mxu0 0
      %672 = vmatmul.mubr.bf16.gmra.mrb[0].mxu0 %v491
      %v673 = vpop.f32.mrb[0].mxu0
      %v674 = vadd.f32 0.0, %v673
      %v675 = vpop.f32.mrb[0].mxu0
      %v676 = vpop.f32.mrb[0].mxu0
      %v677 = vadd.f32 0.0, %v676
      %v678 = vpop.f32.mrb[0].mxu0
      %679 = vmatprep.mubr.bf16.mxu0 0
      %680 = vmatmul.mubr.bf16.gmra.mrb[0].mxu0 %v492
      %v681 = vpop.f32.mrb[0].mxu0
      %v682 = vadd.f32 0.0, %v681
      %v683 = vpop.f32.mrb[0].mxu0
      %v684 = vpop.f32.mrb[0].mxu0
      %v685 = vadd.f32 0.0, %v684
      %v686 = vpop.f32.mrb[0].mxu0
      %687 = vmatprep.mubr.bf16.mxu0 0
      %688 = vmatmul.mubr.bf16.gmra.mrb[0].mxu0 %v493
      %v689 = vpop.f32.mrb[0].mxu0
      %v690 = vadd.f32 0.0, %v689
      %v691 = vpop.f32.mrb[0].mxu0
      %v692 = vpop.f32.mrb[0].mxu0
      %v693 = vadd.f32 0.0, %v692
      %v694 = vpop.f32.mrb[0].mxu0
      %695 = vmatprep.mubr.bf16.mxu0 0
      %696 = vmatmul.mubr.bf16.gmra.mrb[0].mxu0 %v494
      %v697 = vpop.f32.mrb[0].mxu0
      %v698 = vadd.f32 0.0, %v697
      %v699 = vpop.f32.mrb[0].mxu0
      %v700 = vpop.f32.mrb[0].mxu0
      %v701 = vadd.f32 0.0, %v700
      %v702 = vpop.f32.mrb[0].mxu0
      %703 = vmatprep.mubr.bf16.mxu0 0
      %704 = vmatmul.mubr.bf16.gmra.mrb[0].mxu0 %v495
      %v705 = vpop.f32.mrb[0].mxu0
      %v706 = vadd.f32 0.0, %v705
      %v707 = vpop.f32.mrb[0].mxu0
      %v708 = vpop.f32.mrb[0].mxu0
      %v709 = vadd.f32 0.0, %v708
      %v710 = vpop.f32.mrb[0].mxu0
      %711 = vmatprep.mubr.bf16.mxu0 0
      %712 = vmatmul.mubr.bf16.gmra.mrb[0].mxu0 %v496
      %v713 = vpop.f32.mrb[0].mxu0
      %v714 = vadd.f32 0.0, %v713
      %v715 = vpop.f32.mrb[0].mxu0
      %v716 = vpop.f32.mrb[0].mxu0
      %v717 = vadd.f32 0.0, %v716
      %v718 = vpop.f32.mrb[0].mxu0
      %719 = vmatprep.mubr.bf16.mxu0 0
      %720 = vmatmul.mubr.bf16.gmra.mrb[0].mxu0 %v497
      %v721 = vpop.f32.mrb[0].mxu0
      %v722 = vadd.f32 0.0, %v721
      %v723 = vpop.f32.mrb[0].mxu0
      %v724 = vpop.f32.mrb[0].mxu0
      %v725 = vadd.f32 0.0, %v724
      %v726 = vpop.f32.mrb[0].mxu0
      %727 = vmatprep.mubr.bf16.mxu0 0
      %728 = vmatmul.mubr.bf16.gmra.mrb[0].mxu0 %v498
      %v729 = vpop.f32.mrb[0].mxu0
      %v730 = vadd.f32 0.0, %v729
      %v731 = vpop.f32.mrb[0].mxu0
      %v732 = vpop.f32.mrb[0].mxu0
      %v733 = vadd.f32 0.0, %v732
      %v734 = vpop.f32.mrb[0].mxu0
      %735 = vmatprep.mubr.bf16.mxu0 0
      %736 = vmatmul.mubr.bf16.gmra.mrb[0].mxu0 %v499
      %v737 = vpop.f32.mrb[0].mxu0
      %v738 = vadd.f32 0.0, %v737
      %v739 = vpop.f32.mrb[0].mxu0
      %v740 = vpop.f32.mrb[0].mxu0
      %v741 = vadd.f32 0.0, %v740
      %v742 = vpop.f32.mrb[0].mxu0
      %743 = vmatprep.mubr.bf16.mxu0 0
      %744 = vmatmul.mubr.bf16.gmra.mrb[0].mxu0 %v500
      %v745 = vpop.f32.mrb[0].mxu0
      %v746 = vadd.f32 0.0, %v745
      %v747 = vpop.f32.mrb[0].mxu0
      %v748 = vpop.f32.mrb[0].mxu0
      %v749 = vadd.f32 0.0, %v748
      %v750 = vpop.f32.mrb[0].mxu0
      %751 = vmatprep.mubr.bf16.mxu0 0
      %752 = vmatmul.mubr.bf16.gmra.mrb[0].mxu0 %v501
      %v753 = vpop.f32.mrb[0].mxu0
      %v754 = vadd.f32 0.0, %v753
      %v755 = vpop.f32.mrb[0].mxu0
      %v756 = vpop.f32.mrb[0].mxu0
      %v757 = vadd.f32 0.0, %v756
      %v758 = vpop.f32.mrb[0].mxu0
      %759 = vmatprep.mubr.bf16.mxu0 0
      %760 = vmatmul.mubr.bf16.gmra.mrb[0].mxu0 %v502
      %v761 = vpop.f32.mrb[0].mxu0
      %v762 = vadd.f32 0.0, %v761
      %v763 = vpop.f32.mrb[0].mxu0
      %v764 = vpop.f32.mrb[0].mxu0
      %v765 = vadd.f32 0.0, %v764
      %v766 = vpop.f32.mrb[0].mxu0
      %767 = vmatprep.mubr.bf16.mxu0 0
      %768 = vmatmul.mubr.bf16.gmra.mrb[0].mxu0 %v503
      %v769 = vpop.f32.mrb[0].mxu0
      %v770 = vadd.f32 0.0, %v769
      %v771 = vpop.f32.mrb[0].mxu0
      %v772 = vpop.f32.mrb[0].mxu0
      %v773 = vadd.f32 0.0, %v772
      %v774 = vpop.f32.mrb[0].mxu0
      %775 = vmatprep.mubr.bf16.mxu0 0
      %776 = vmatmul.mubr.bf16.gmra.mrb[0].mxu0 %v504
      %v777 = vpop.f32.mrb[0].mxu0
      %v778 = vadd.f32 0.0, %v777
      %v779 = vpop.f32.mrb[0].mxu0
      %v780 = vpop.f32.mrb[0].mxu0
      %v781 = vadd.f32 0.0, %v780
      %v782 = vpop.f32.mrb[0].mxu0
      %783 = vmatprep.mubr.bf16.mxu0 0
      %784 = vmatmul.mubr.bf16.gmra.mrb[0].mxu0 %v505
      %v785 = vpop.f32.mrb[0].mxu0
      %v786 = vadd.f32 0.0, %v785
      %v787 = vpop.f32.mrb[0].mxu0
      %v788 = vpop.f32.mrb[0].mxu0
      %v789 = vadd.f32 0.0, %v788
      %v790 = vpop.f32.mrb[0].mxu0
      %791 = vmatprep.mubr.bf16.mxu0 0
      %792 = vmatmul.mubr.bf16.gmra.mrb[0].mxu0 %v506
      %v793 = vpop.f32.mrb[0].mxu0
      %v794 = vadd.f32 0.0, %v793
      %v795 = vpop.f32.mrb[0].mxu0
      %v796 = vpop.f32.mrb[0].mxu0
      %v797 = vadd.f32 0.0, %v796
      %v798 = vpop.f32.mrb[0].mxu0
      %799 = vmatprep.mubr.bf16.mxu0 0
      %800 = vmatmul.mubr.bf16.gmra.mrb[0].mxu0 %v507
      %v801 = vpop.f32.mrb[0].mxu0
      %v802 = vadd.f32 0.0, %v801
      %v803 = vpop.f32.mrb[0].mxu0
      %v804 = vpop.f32.mrb[0].mxu0
      %v805 = vadd.f32 0.0, %v804
      %v806 = vpop.f32.mrb[0].mxu0
      %807 = vmatprep.mubr.bf16.mxu0 0
      %808 = vmatmul.mubr.bf16.gmra.mrb[0].mxu0 %v508
      %v809 = vpop.f32.mrb[0].mxu0
      %v810 = vadd.f32 0.0, %v809
      %v811 = vpop.f32.mrb[0].mxu0
      %v812 = vpop.f32.mrb[0].mxu0
      %v813 = vadd.f32 0.0, %v812
      %v814 = vpop.f32.mrb[0].mxu0
      %815 = vmatprep.mubr.bf16.mxu0 0
      %816 = vmatmul.mubr.bf16.gmra.mrb[0].mxu0 %v509
      %v817 = vpop.f32.mrb[0].mxu0
      %v818 = vadd.f32 0.0, %v817
      %v819 = vpop.f32.mrb[0].mxu0
      %v820 = vpop.f32.mrb[0].mxu0
      %v821 = vadd.f32 0.0, %v820
      %v822 = vpop.f32.mrb[0].mxu0
      %823 = vmatprep.mubr.bf16.mxu0 0
      %824 = vmatmul.mubr.bf16.gmra.mrb[0].mxu0 %v510
      %v825 = vpop.f32.mrb[0].mxu0
      %v826 = vadd.f32 0.0, %v825
      %v827 = vpop.f32.mrb[0].mxu0
      %v828 = vpop.f32.mrb[0].mxu0
      %v829 = vadd.f32 0.0, %v828
      %v830 = vpop.f32.mrb[0].mxu0
      %831 = vmatprep.mubr.bf16.mxu0 0
      %832 = vmatmul.mubr.bf16.gmra.mrb[0].mxu0 %v511
      %v833 = vpop.f32.mrb[0].mxu0
      %v834 = vadd.f32 0.0, %v833
      %v835 = vpop.f32.mrb[0].mxu0
      %v836 = vpop.f32.mrb[0].mxu0
      %v837 = vadd.f32 0.0, %v836
      %v838 = vpop.f32.mrb[0].mxu0
      %839 = vmatprep.mubr.bf16.mxu0 0
      %840 = vmatmul.mubr.bf16.gmra.mrb[0].mxu0 %v512
      %v841 = vpop.f32.mrb[0].mxu0
      %v842 = vadd.f32 0.0, %v841
      %v843 = vpop.f32.mrb[0].mxu0
      %v844 = vpop.f32.mrb[0].mxu0
      %v845 = vadd.f32 0.0, %v844
      %v846 = vpop.f32.mrb[0].mxu0
      %847 = vmatprep.mubr.bf16.mxu0 0
      %848 = vmatmul.mubr.bf16.gmra.mrb[0].mxu0 %v513
      %v849 = vpop.f32.mrb[0].mxu0
      %v850 = vadd.f32 0.0, %v849
      %v851 = vpop.f32.mrb[0].mxu0
      %v852 = vpop.f32.mrb[0].mxu0
      %v853 = vadd.f32 0.0, %v852
      %v854 = vpop.f32.mrb[0].mxu0
      %855 = vmatprep.mubr.bf16.mxu0 0
      %856 = vmatmul.mubr.bf16.gmra.mrb[0].mxu0 %v514
      %v857 = vpop.f32.mrb[0].mxu0
      %v858 = vadd.f32 0.0, %v857
      %v859 = vpop.f32.mrb[0].mxu0
      %v860 = vpop.f32.mrb[0].mxu0
      %v861 = vadd.f32 0.0, %v860
      %v862 = vpop.f32.mrb[0].mxu0
      %863 = vmatprep.mubr.bf16.mxu0 0
      %864 = vmatmul.mubr.bf16.gmra.mrb[0].mxu0 %v515
      %v865 = vpop.f32.mrb[0].mxu0
      %v866 = vadd.f32 0.0, %v865
      %v867 = vpop.f32.mrb[0].mxu0
      %v868 = vpop.f32.mrb[0].mxu0
      %v869 = vadd.f32 0.0, %v868
      %v870 = vpop.f32.mrb[0].mxu0
      %871 = vmatprep.mubr.bf16.mxu0 0
      %872 = vmatmul.mubr.bf16.gmra.mrb[0].mxu0 %v516
      %v873 = vpop.f32.mrb[0].mxu0
      %v874 = vadd.f32 0.0, %v873
      %v875 = vpop.f32.mrb[0].mxu0
      %v876 = vpop.f32.mrb[0].mxu0
      %v877 = vadd.f32 0.0, %v876
      %v878 = vpop.f32.mrb[0].mxu0
      %879 = vmatprep.mubr.bf16.mxu0 0
      %880 = vmatmul.mubr.bf16.gmra.mrb[0].mxu0 %v517
      %v881 = vpop.f32.mrb[0].mxu0
      %v882 = vadd.f32 0.0, %v881
      %v883 = vpop.f32.mrb[0].mxu0
      %v884 = vpop.f32.mrb[0].mxu0
      %v885 = vadd.f32 0.0, %v884
      %v886 = vpop.f32.mrb[0].mxu0
      %887 = vmatprep.mubr.bf16.mxu0 0
      %888 = vmatmul.mubr.bf16.gmra.mrb[0].mxu0 %v518
      %v889 = vpop.f32.mrb[0].mxu0
      %v890 = vadd.f32 0.0, %v889
      %v891 = vpop.f32.mrb[0].mxu0
      %v892 = vpop.f32.mrb[0].mxu0
      %v893 = vadd.f32 0.0, %v892
      %v894 = vpop.f32.mrb[0].mxu0
      %895 = vmatprep.mubr.bf16.mxu0 0
      %896 = vmatmul.mubr.bf16.gmra.mrb[0].mxu0 %v519
      %v897 = vpop.f32.mrb[0].mxu0
      %v898 = vadd.f32 0.0, %v897
      %v899 = vpop.f32.mrb[0].mxu0
      %v900 = vpop.f32.mrb[0].mxu0
      %v901 = vadd.f32 0.0, %v900
      %v902 = vpop.f32.mrb[0].mxu0
      %903 = vmatprep.mubr.bf16.mxu0 0
      %904 = vmatmul.mubr.bf16.gmra.mrb[0].mxu0 %v520
      %v905 = vpop.f32.mrb[0].mxu0
      %v906 = vadd.f32 0.0, %v905
      %v907 = vpop.f32.mrb[0].mxu0
      %v908 = vpop.f32.mrb[0].mxu0
      %v909 = vadd.f32 0.0, %v908
      %v910 = vpop.f32.mrb[0].mxu0
      %911 = vmatprep.mubr.bf16.mxu0 0
      %912 = vmatmul.mubr.bf16.gmra.mrb[0].mxu0 %v521
      %v913 = vpop.f32.mrb[0].mxu0
      %v914 = vadd.f32 0.0, %v913
      %v915 = vpop.f32.mrb[0].mxu0
      %v916 = vpop.f32.mrb[0].mxu0
      %v917 = vadd.f32 0.0, %v916
      %v918 = vpop.f32.mrb[0].mxu0
      %919 = vmatprep.mubr.bf16.mxu0 0
      %920 = vmatmul.mubr.bf16.gmra.mrb[0].mxu0 %v522
      %v921 = vpop.f32.mrb[0].mxu0
      %v922 = vadd.f32 0.0, %v921
      %v923 = vpop.f32.mrb[0].mxu0
      %v924 = vpop.f32.mrb[0].mxu0
      %v925 = vadd.f32 0.0, %v924
      %v926 = vpop.f32.mrb[0].mxu0
      %927 = vmatprep.mubr.bf16.mxu0 0
      %928 = vmatmul.mubr.bf16.gmra.mrb[0].mxu0 %v523
      %v929 = vpop.f32.mrb[0].mxu0
      %v930 = vadd.f32 0.0, %v929
      %v931 = vpop.f32.mrb[0].mxu0
      %v932 = vpop.f32.mrb[0].mxu0
      %v933 = vadd.f32 0.0, %v932
      %v934 = vpop.f32.mrb[0].mxu0
      %935 = vmatprep.mubr.bf16.mxu0 0
      %936 = vmatmul.mubr.bf16.gmra.mrb[0].mxu0 %v524
      %v937 = vpop.f32.mrb[0].mxu0
      %v938 = vadd.f32 0.0, %v937
      %v939 = vpop.f32.mrb[0].mxu0
      %v940 = vpop.f32.mrb[0].mxu0
      %v941 = vadd.f32 0.0, %v940
      %v942 = vpop.f32.mrb[0].mxu0
      %943 = vmatprep.mubr.bf16.mxu0 0
      %944 = vmatmul.mubr.bf16.gmra.mrb[0].mxu0 %v525
      %v945 = vpop.f32.mrb[0].mxu0
      %v946 = vadd.f32 0.0, %v945
      %v947 = vpop.f32.mrb[0].mxu0
      %v948 = vpop.f32.mrb[0].mxu0
      %v949 = vadd.f32 0.0, %v948
      %v950 = vpop.f32.mrb[0].mxu0
      %951 = vmatprep.mubr.bf16.mxu0 0
      %952 = vmatmul.mubr.bf16.gmra.mrb[0].mxu0 %v526
      %v953 = vpop.f32.mrb[0].mxu0
      %v954 = vadd.f32 0.0, %v953
      %v955 = vpop.f32.mrb[0].mxu0
      %v956 = vpop.f32.mrb[0].mxu0
      %v957 = vadd.f32 0.0, %v956
      %v958 = vpop.f32.mrb[0].mxu0
      %959 = vmatprep.mubr.bf16.mxu0 0
      %960 = vmatmul.mubr.bf16.gmra.mrb[0].mxu0 %v527
      %v961 = vpop.f32.mrb[0].mxu0
      %v962 = vadd.f32 0.0, %v961
      %v963 = vpop.f32.mrb[0].mxu0
      %v964 = vpop.f32.mrb[0].mxu0
      %v965 = vadd.f32 0.0, %v964
      %v966 = vpop.f32.mrb[0].mxu0
      %967 = vmatprep.mubr.bf16.mxu0 0
      %968 = vmatmul.mubr.bf16.gmra.mrb[0].mxu0 %v528
      %v969 = vpop.f32.mrb[0].mxu0
      %v970 = vadd.f32 0.0, %v969
      %v971 = vpop.f32.mrb[0].mxu0
      %v972 = vpop.f32.mrb[0].mxu0
      %v973 = vadd.f32 0.0, %v972
      %v974 = vpop.f32.mrb[0].mxu0
      %975 = vmatprep.mubr.bf16.mxu0 0
      %976 = vmatmul.mubr.bf16.gmra.mrb[0].mxu0 %v529
      %v977 = vpop.f32.mrb[0].mxu0
      %v978 = vadd.f32 0.0, %v977
      %v979 = vpop.f32.mrb[0].mxu0
      %v980 = vpop.f32.mrb[0].mxu0
      %v981 = vadd.f32 0.0, %v980
      %v982 = vpop.f32.mrb[0].mxu0
      %983 = vmatprep.mubr.bf16.mxu0 0
      %984 = vmatmul.mubr.bf16.gmra.mrb[0].mxu0 %v530
      %v985 = vpop.f32.mrb[0].mxu0
      %v986 = vadd.f32 0.0, %v985
      %v987 = vpop.f32.mrb[0].mxu0
      %v988 = vpop.f32.mrb[0].mxu0
      %v989 = vadd.f32 0.0, %v988
      %v990 = vpop.f32.mrb[0].mxu0
      %991 = vmatprep.mubr.bf16.mxu0 0
      %992 = vmatmul.mubr.bf16.gmra.mrb[0].mxu0 %v531
      %v993 = vpop.f32.mrb[0].mxu0
      %v994 = vadd.f32 0.0, %v993
      %v995 = vpop.f32.mrb[0].mxu0
      %v996 = vpop.f32.mrb[0].mxu0
      %v997 = vadd.f32 0.0, %v996
      %v998 = vpop.f32.mrb[0].mxu0
      %999 = vmatprep.mubr.bf16.mxu0 0
      %1000 = vmatmul.mubr.bf16.gmra.mrb[0].mxu0 %v532
      %v1001 = vpop.f32.mrb[0].mxu0
      %v1002 = vadd.f32 0.0, %v1001
      %v1003 = vpop.f32.mrb[0].mxu0
      %v1004 = vpop.f32.mrb[0].mxu0
      %v1005 = vadd.f32 0.0, %v1004
      %v1006 = vpop.f32.mrb[0].mxu0
      %1007 = vmatprep.mubr.bf16.mxu0 0
      %1008 = vmatmul.mubr.bf16.gmra.mrb[0].mxu0 %v533
      %v1009 = vpop.f32.mrb[0].mxu0
      %v1010 = vadd.f32 0.0, %v1009
      %v1011 = vpop.f32.mrb[0].mxu0
      %v1012 = vpop.f32.mrb[0].mxu0
      %v1013 = vadd.f32 0.0, %v1012
      %v1014 = vpop.f32.mrb[0].mxu0
      %1015 = vmatprep.mubr.bf16.mxu0 0
      %1016 = vmatmul.mubr.bf16.gmra.mrb[0].mxu0 %v534
      %v1017 = vpop.f32.mrb[0].mxu0
      %v1018 = vadd.f32 0.0, %v1017
      %v1019 = vpop.f32.mrb[0].mxu0
      %v1020 = vpop.f32.mrb[0].mxu0
      %v1021 = vadd.f32 0.0, %v1020
      %v1022 = vpop.f32.mrb[0].mxu0
      %1023 = vmatprep.mubr.bf16.mxu0 0
      %1024 = vmatmul.mubr.bf16.gmra.mrb[0].mxu0 %v535
      %v1025 = vpop.f32.mrb[0].mxu0
      %v1026 = vadd.f32 0.0, %v1025
      %v1027 = vpop.f32.mrb[0].mxu0
      %v1028 = vpop.f32.mrb[0].mxu0
      %v1029 = vadd.f32 0.0, %v1028
      %v1030 = vpop.f32.mrb[0].mxu0
      %1031 = vmatprep.mubr.bf16.mxu0 0
      %1032 = vmatmul.mubr.bf16.gmra.mrb[0].mxu0 %v536
      %v1033 = vpop.f32.mrb[0].mxu0
      %v1034 = vadd.f32 0.0, %v1033
      %v1035 = vpop.f32.mrb[0].mxu0
      %v1036 = vpop.f32.mrb[0].mxu0
      %v1037 = vadd.f32 0.0, %v1036
      %v1038 = vpop.f32.mrb[0].mxu0
      %1039 = vmatprep.mubr.bf16.mxu0 0
      %1040 = vmatmul.mubr.bf16.gmra.mrb[0].mxu0 %v537
      %v1041 = vpop.f32.mrb[0].mxu0
      %v1042 = vadd.f32 0.0, %v1041
      %v1043 = vpop.f32.mrb[0].mxu0
      %v1044 = vpop.f32.mrb[0].mxu0
      %v1045 = vadd.f32 0.0, %v1044
      %v1046 = vpop.f32.mrb[0].mxu0
      %1047 = vmatprep.mubr.bf16.mxu0 0
      %1048 = vmatmul.mubr.bf16.gmra.mrb[0].mxu0 %v538
      %v1049 = vpop.f32.mrb[0].mxu0
      %v1050 = vadd.f32 0.0, %v1049
      %v1051 = vpop.f32.mrb[0].mxu0
      %v1052 = vpop.f32.mrb[0].mxu0
      %v1053 = vadd.f32 0.0, %v1052
      %v1054 = vpop.f32.mrb[0].mxu0
      %1055 = vmatprep.mubr.bf16.mxu0 0
      %1056 = vmatmul.mubr.bf16.gmra.mrb[0].mxu0 %v539
      %v1057 = vpop.f32.mrb[0].mxu0
      %v1058 = vadd.f32 0.0, %v1057
      %v1059 = vpop.f32.mrb[0].mxu0
      %v1060 = vpop.f32.mrb[0].mxu0
      %v1061 = vadd.f32 0.0, %v1060
      %v1062 = vpop.f32.mrb[0].mxu0
      %1063 = vmatprep.mubr.bf16.mxu0 0
      %1064 = vmatmul.mubr.bf16.gmra.mrb[0].mxu0 %v540
      %v1065 = vpop.f32.mrb[0].mxu0
      %v1066 = vadd.f32 0.0, %v1065
      %v1067 = vpop.f32.mrb[0].mxu0
      %v1068 = vpop.f32.mrb[0].mxu0
      %v1069 = vadd.f32 0.0, %v1068
      %v1070 = vpop.f32.mrb[0].mxu0
      %1071 = vdwg.mxu0
      %1072 = vst [vmem:[#allocation2] sm:$0xff] %v674
      %1073 = vst [vmem:[#allocation2 + $0x8] sm:$0xff] %v677
      %1074 = vst [vmem:[#allocation2 + $0x10] sm:$0xff] %v682
      %1075 = vst [vmem:[#allocation2 + $0x18] sm:$0xff] %v685
      %1076 = vst [vmem:[#allocation2 + $0x20] sm:$0xff] %v690
      %1077 = vst [vmem:[#allocation2 + $0x28] sm:$0xff] %v693
      %1078 = vst [vmem:[#allocation2 + $0x30] sm:$0xff] %v698
      %1079 = vst [vmem:[#allocation2 + $0x38] sm:$0xff] %v701
      %1080 = vst [vmem:[#allocation2 + $0x40] sm:$0xff] %v706
      %1081 = vst [vmem:[#allocation2 + $0x48] sm:$0xff] %v709
      %1082 = vst [vmem:[#allocation2 + $0x50] sm:$0xff] %v714
      %1083 = vst [vmem:[#allocation2 + $0x58] sm:$0xff] %v717
      %1084 = vst [vmem:[#allocation2 + $0x60] sm:$0xff] %v722
      %1085 = vst [vmem:[#allocation2 + $0x68] sm:$0xff] %v725
      %1086 = vst [vmem:[#allocation2 + $0x70] sm:$0xff] %v730
      %1087 = vst [vmem:[#allocation2 + $0x78] sm:$0xff] %v733
      %1088 = vst [vmem:[#allocation2 + $0x80] sm:$0xff] %v738
      %1089 = vst [vmem:[#allocation2 + $0x88] sm:$0xff] %v741
      %1090 = vst [vmem:[#allocation2 + $0x90] sm:$0xff] %v746
      %1091 = vst [vmem:[#allocation2 + $0x98] sm:$0xff] %v749
      %1092 = vst [vmem:[#allocation2 + $0xa0] sm:$0xff] %v754
      %1093 = vst [vmem:[#allocation2 + $0xa8] sm:$0xff] %v757
      %1094 = vst [vmem:[#allocation2 + $0xb0] sm:$0xff] %v762
      %1095 = vst [vmem:[#allocation2 + $0xb8] sm:$0xff] %v765
      %1096 = vst [vmem:[#allocation2 + $0xc0] sm:$0xff] %v770
      %1097 = vst [vmem:[#allocation2 + $0xc8] sm:$0xff] %v773
      %1098 = vst [vmem:[#allocation2 + $0xd0] sm:$0xff] %v778
      %1099 = vst [vmem:[#allocation2 + $0xd8] sm:$0xff] %v781
      %1100 = vst [vmem:[#allocation2 + $0xe0] sm:$0xff] %v786
      %1101 = vst [vmem:[#allocation2 + $0xe8] sm:$0xff] %v789
      %1102 = vst [vmem:[#allocation2 + $0xf0] sm:$0xff] %v794
      %1103 = vst [vmem:[#allocation2 + $0xf8] sm:$0xff] %v797
      %1104 = vst [vmem:[#allocation2 + $0x100] sm:$0xff] %v802
      %1105 = vst [vmem:[#allocation2 + $0x108] sm:$0xff] %v805
      %1106 = vst [vmem:[#allocation2 + $0x110] sm:$0xff] %v810
      %1107 = vst [vmem:[#allocation2 + $0x118] sm:$0xff] %v813
      %1108 = vst [vmem:[#allocation2 + $0x120] sm:$0xff] %v818
      %1109 = vst [vmem:[#allocation2 + $0x128] sm:$0xff] %v821
      %1110 = vst [vmem:[#allocation2 + $0x130] sm:$0xff] %v826
      %1111 = vst [vmem:[#allocation2 + $0x138] sm:$0xff] %v829
      %1112 = vst [vmem:[#allocation2 + $0x140] sm:$0xff] %v834
      %1113 = vst [vmem:[#allocation2 + $0x148] sm:$0xff] %v837
      %1114 = vst [vmem:[#allocation2 + $0x150] sm:$0xff] %v842
      %1115 = vst [vmem:[#allocation2 + $0x158] sm:$0xff] %v845
      %1116 = vst [vmem:[#allocation2 + $0x160] sm:$0xff] %v850
      %1117 = vst [vmem:[#allocation2 + $0x168] sm:$0xff] %v853
      %1118 = vst [vmem:[#allocation2 + $0x170] sm:$0xff] %v858
      %1119 = vst [vmem:[#allocation2 + $0x178] sm:$0xff] %v861
      %1120 = vst [vmem:[#allocation2 + $0x180] sm:$0xff] %v866
      %1121 = vst [vmem:[#allocation2 + $0x188] sm:$0xff] %v869
      %1122 = vst [vmem:[#allocation2 + $0x190] sm:$0xff] %v874
      %1123 = vst [vmem:[#allocation2 + $0x198] sm:$0xff] %v877
      %1124 = vst [vmem:[#allocation2 + $0x1a0] sm:$0xff] %v882
      %1125 = vst [vmem:[#allocation2 + $0x1a8] sm:$0xff] %v885
      %1126 = vst [vmem:[#allocation2 + $0x1b0] sm:$0xff] %v890
      %1127 = vst [vmem:[#allocation2 + $0x1b8] sm:$0xff] %v893
      %1128 = vst [vmem:[#allocation2 + $0x1c0] sm:$0xff] %v898
      %1129 = vst [vmem:[#allocation2 + $0x1c8] sm:$0xff] %v901
      %1130 = vst [vmem:[#allocation2 + $0x1d0] sm:$0xff] %v906
      %1131 = vst [vmem:[#allocation2 + $0x1d8] sm:$0xff] %v909
      %1132 = vst [vmem:[#allocation2 + $0x1e0] sm:$0xff] %v914
      %1133 = vst [vmem:[#allocation2 + $0x1e8] sm:$0xff] %v917
      %1134 = vst [vmem:[#allocation2 + $0x1f0] sm:$0xff] %v922
      %1135 = vst [vmem:[#allocation2 + $0x1f8] sm:$0xff] %v925
      %1136 = vst [vmem:[#allocation2 + $0x200] sm:$0xff] %v930
      %1137 = vst [vmem:[#allocation2 + $0x208] sm:$0xff] %v933
      %1138 = vst [vmem:[#allocation2 + $0x210] sm:$0xff] %v938
      %1139 = vst [vmem:[#allocation2 + $0x218] sm:$0xff] %v941
      %1140 = vst [vmem:[#allocation2 + $0x220] sm:$0xff] %v946
      %1141 = vst [vmem:[#allocation2 + $0x228] sm:$0xff] %v949
      %1142 = vst [vmem:[#allocation2 + $0x230] sm:$0xff] %v954
      %1143 = vst [vmem:[#allocation2 + $0x238] sm:$0xff] %v957
      %1144 = vst [vmem:[#allocation2 + $0x240] sm:$0xff] %v962
      %1145 = vst [vmem:[#allocation2 + $0x248] sm:$0xff] %v965
      %1146 = vst [vmem:[#allocation2 + $0x250] sm:$0xff] %v970
      %1147 = vst [vmem:[#allocation2 + $0x258] sm:$0xff] %v973
      %1148 = vst [vmem:[#allocation2 + $0x260] sm:$0xff] %v978
      %1149 = vst [vmem:[#allocation2 + $0x268] sm:$0xff] %v981
      %1150 = vst [vmem:[#allocation2 + $0x270] sm:$0xff] %v986
      %1151 = vst [vmem:[#allocation2 + $0x278] sm:$0xff] %v989
      %1152 = vst [vmem:[#allocation2 + $0x280] sm:$0xff] %v994
      %1153 = vst [vmem:[#allocation2 + $0x288] sm:$0xff] %v997
      %1154 = vst [vmem:[#allocation2 + $0x290] sm:$0xff] %v1002
      %1155 = vst [vmem:[#allocation2 + $0x298] sm:$0xff] %v1005
      %1156 = vst [vmem:[#allocation2 + $0x2a0] sm:$0xff] %v1010
      %1157 = vst [vmem:[#allocation2 + $0x2a8] sm:$0xff] %v1013
      %1158 = vst [vmem:[#allocation2 + $0x2b0] sm:$0xff] %v1018
      %1159 = vst [vmem:[#allocation2 + $0x2b8] sm:$0xff] %v1021
      %1160 = vst [vmem:[#allocation2 + $0x2c0] sm:$0xff] %v1026
      %1161 = vst [vmem:[#allocation2 + $0x2c8] sm:$0xff] %v1029
      %1162 = vst [vmem:[#allocation2 + $0x2d0] sm:$0xff] %v1034
      %1163 = vst [vmem:[#allocation2 + $0x2d8] sm:$0xff] %v1037
      %1164 = vst [vmem:[#allocation2 + $0x2e0] sm:$0xff] %v1042
      %1165 = vst [vmem:[#allocation2 + $0x2e8] sm:$0xff] %v1045
      %1166 = vst [vmem:[#allocation2 + $0x2f0] sm:$0xff] %v1050
      %1167 = vst [vmem:[#allocation2 + $0x2f8] sm:$0xff] %v1053
      %1168 = vst [vmem:[#allocation2 + $0x300] sm:$0xff] %v1058
      %1169 = vst [vmem:[#allocation2 + $0x308] sm:$0xff] %v1061
      %1170 = vst [vmem:[#allocation2 + $0x310] sm:$0xff] %v1066
      %1171 = vst [vmem:[#allocation2 + $0x318] sm:$0xff] %v1069
      %v1172 = vld [vmem:[#allocation2] sm:$0xff]
      %v1173 = vld [vmem:[#allocation2 + $0x8] sm:$0xff]
      %v1174 = vld [vmem:[#allocation2 + $0x10] sm:$0xff]
      %v1175 = vld [vmem:[#allocation2 + $0x18] sm:$0xff]
      %v1176 = vld [vmem:[#allocation2 + $0x20] sm:$0xff]
      %v1177 = vld [vmem:[#allocation2 + $0x28] sm:$0xff]
      %v1178 = vld [vmem:[#allocation2 + $0x30] sm:$0xff]
      %v1179 = vld [vmem:[#allocation2 + $0x38] sm:$0xff]
      %v1180 = vld [vmem:[#allocation2 + $0x40] sm:$0xff]
      %v1181 = vld [vmem:[#allocation2 + $0x48] sm:$0xff]
      %v1182 = vld [vmem:[#allocation2 + $0x50] sm:$0xff]
      %v1183 = vld [vmem:[#allocation2 + $0x58] sm:$0xff]
      %v1184 = vld [vmem:[#allocation2 + $0x60] sm:$0xff]
      %v1185 = vld [vmem:[#allocation2 + $0x68] sm:$0xff]
      %v1186 = vld [vmem:[#allocation2 + $0x70] sm:$0xff]
      %v1187 = vld [vmem:[#allocation2 + $0x78] sm:$0xff]
      %v1188 = vld [vmem:[#allocation2 + $0x80] sm:$0xff]
      %v1189 = vld [vmem:[#allocation2 + $0x88] sm:$0xff]
      %v1190 = vld [vmem:[#allocation2 + $0x90] sm:$0xff]
      %v1191 = vld [vmem:[#allocation2 + $0x98] sm:$0xff]
      %v1192 = vld [vmem:[#allocation2 + $0xa0] sm:$0xff]
      %v1193 = vld [vmem:[#allocation2 + $0xa8] sm:$0xff]
      %v1194 = vld [vmem:[#allocation2 + $0xb0] sm:$0xff]
      %v1195 = vld [vmem:[#allocation2 + $0xb8] sm:$0xff]
      %v1196 = vld [vmem:[#allocation2 + $0xc0] sm:$0xff]
      %v1197 = vld [vmem:[#allocation2 + $0xc8] sm:$0xff]
      %v1198 = vld [vmem:[#allocation2 + $0xd0] sm:$0xff]
      %v1199 = vld [vmem:[#allocation2 + $0xd8] sm:$0xff]
      %v1200 = vld [vmem:[#allocation2 + $0xe0] sm:$0xff]
      %v1201 = vld [vmem:[#allocation2 + $0xe8] sm:$0xff]
      %v1202 = vld [vmem:[#allocation2 + $0xf0] sm:$0xff]
      %v1203 = vld [vmem:[#allocation2 + $0xf8] sm:$0xff]
      %v1204 = vld [vmem:[#allocation2 + $0x100] sm:$0xff]
      %v1205 = vld [vmem:[#allocation2 + $0x108] sm:$0xff]
      %v1206 = vld [vmem:[#allocation2 + $0x110] sm:$0xff]
      %v1207 = vld [vmem:[#allocation2 + $0x118] sm:$0xff]
      %v1208 = vld [vmem:[#allocation2 + $0x120] sm:$0xff]
      %v1209 = vld [vmem:[#allocation2 + $0x128] sm:$0xff]
      %v1210 = vld [vmem:[#allocation2 + $0x130] sm:$0xff]
      %v1211 = vld [vmem:[#allocation2 + $0x138] sm:$0xff]
      %v1212 = vld [vmem:[#allocation2 + $0x140] sm:$0xff]
      %v1213 = vld [vmem:[#allocation2 + $0x148] sm:$0xff]
      %v1214 = vld [vmem:[#allocation2 + $0x150] sm:$0xff]
      %v1215 = vld [vmem:[#allocation2 + $0x158] sm:$0xff]
      %v1216 = vld [vmem:[#allocation2 + $0x160] sm:$0xff]
      %v1217 = vld [vmem:[#allocation2 + $0x168] sm:$0xff]
      %v1218 = vld [vmem:[#allocation2 + $0x170] sm:$0xff]
      %v1219 = vld [vmem:[#allocation2 + $0x178] sm:$0xff]
      %v1220 = vld [vmem:[#allocation2 + $0x180] sm:$0xff]
      %v1221 = vld [vmem:[#allocation2 + $0x188] sm:$0xff]
      %v1222 = vld [vmem:[#allocation2 + $0x190] sm:$0xff]
      %v1223 = vld [vmem:[#allocation2 + $0x198] sm:$0xff]
      %v1224 = vld [vmem:[#allocation2 + $0x1a0] sm:$0xff]
      %v1225 = vld [vmem:[#allocation2 + $0x1a8] sm:$0xff]
      %v1226 = vld [vmem:[#allocation2 + $0x1b0] sm:$0xff]
      %v1227 = vld [vmem:[#allocation2 + $0x1b8] sm:$0xff]
      %v1228 = vld [vmem:[#allocation2 + $0x1c0] sm:$0xff]
      %v1229 = vld [vmem:[#allocation2 + $0x1c8] sm:$0xff]
      %v1230 = vld [vmem:[#allocation2 + $0x1d0] sm:$0xff]
      %v1231 = vld [vmem:[#allocation2 + $0x1d8] sm:$0xff]
      %v1232 = vld [vmem:[#allocation2 + $0x1e0] sm:$0xff]
      %v1233 = vld [vmem:[#allocation2 + $0x1e8] sm:$0xff]
      %v1234 = vld [vmem:[#allocation2 + $0x1f0] sm:$0xff]
      %v1235 = vld [vmem:[#allocation2 + $0x1f8] sm:$0xff]
      %v1236 = vld [vmem:[#allocation2 + $0x200] sm:$0xff]
      %v1237 = vld [vmem:[#allocation2 + $0x208] sm:$0xff]
      %v1238 = vld [vmem:[#allocation2 + $0x210] sm:$0xff]
      %v1239 = vld [vmem:[#allocation2 + $0x218] sm:$0xff]
      %v1240 = vld [vmem:[#allocation2 + $0x220] sm:$0xff]
      %v1241 = vld [vmem:[#allocation2 + $0x228] sm:$0xff]
      %v1242 = vld [vmem:[#allocation2 + $0x230] sm:$0xff]
      %v1243 = vld [vmem:[#allocation2 + $0x238] sm:$0xff]
      %v1244 = vld [vmem:[#allocation2 + $0x240] sm:$0xff]
      %v1245 = vld [vmem:[#allocation2 + $0x248] sm:$0xff]
      %v1246 = vld [vmem:[#allocation2 + $0x250] sm:$0xff]
      %v1247 = vld [vmem:[#allocation2 + $0x258] sm:$0xff]
      %v1248 = vld [vmem:[#allocation2 + $0x260] sm:$0xff]
      %v1249 = vld [vmem:[#allocation2 + $0x268] sm:$0xff]
      %v1250 = vld [vmem:[#allocation2 + $0x270] sm:$0xff]
      %v1251 = vld [vmem:[#allocation2 + $0x278] sm:$0xff]
      %v1252 = vld [vmem:[#allocation2 + $0x280] sm:$0xff]
      %v1253 = vld [vmem:[#allocation2 + $0x288] sm:$0xff]
      %v1254 = vld [vmem:[#allocation2 + $0x290] sm:$0xff]
      %v1255 = vld [vmem:[#allocation2 + $0x298] sm:$0xff]
      %v1256 = vld [vmem:[#allocation2 + $0x2a0] sm:$0xff]
      %v1257 = vld [vmem:[#allocation2 + $0x2a8] sm:$0xff]
      %v1258 = vld [vmem:[#allocation2 + $0x2b0] sm:$0xff]
      %v1259 = vld [vmem:[#allocation2 + $0x2b8] sm:$0xff]
      %v1260 = vld [vmem:[#allocation2 + $0x2c0] sm:$0xff]
      %v1261 = vld [vmem:[#allocation2 + $0x2c8] sm:$0xff]
      %v1262 = vld [vmem:[#allocation2 + $0x2d0] sm:$0xff]
      %v1263 = vld [vmem:[#allocation2 + $0x2d8] sm:$0xff]
      %v1264 = vld [vmem:[#allocation2 + $0x2e0] sm:$0xff]
      %v1265 = vld [vmem:[#allocation2 + $0x2e8] sm:$0xff]
      %v1266 = vld [vmem:[#allocation2 + $0x2f0] sm:$0xff]
      %v1267 = vld [vmem:[#allocation2 + $0x2f8] sm:$0xff]
      %v1268 = vld [vmem:[#allocation2 + $0x300] sm:$0xff]
      %v1269 = vld [vmem:[#allocation2 + $0x308] sm:$0xff]
      %v1270 = vld [vmem:[#allocation2 + $0x310] sm:$0xff]
      %v1271 = vld [vmem:[#allocation2 + $0x318] sm:$0xff]
      %v1272 = vmax.f32 %v1172, %v1197
      %v1273 = vmax.f32 %v1173, %v1198
      %v1274 = vmax.f32 %v1174, %v1199
      %v1275 = vmax.f32 %v1175, %v1200
      %v1276 = vmax.f32 %v1176, %v1201
      %v1277 = vmax.f32 %v1177, %v1202
      %v1278 = vmax.f32 %v1178, %v1203
      %v1279 = vmax.f32 %v1179, %v1204
      %v1280 = vmax.f32 %v1180, %v1205
      %v1281 = vmax.f32 %v1181, %v1206
      %v1282 = vmax.f32 %v1182, %v1207
      %v1283 = vmax.f32 %v1183, %v1208
      %v1284 = vmax.f32 %v1184, %v1209
      %v1285 = vmax.f32 %v1185, %v1210
      %v1286 = vmax.f32 %v1186, %v1211
      %v1287 = vmax.f32 %v1187, %v1212
      %v1288 = vmax.f32 %v1188, %v1213
      %v1289 = vmax.f32 %v1189, %v1214
      %v1290 = vmax.f32 %v1190, %v1215
      %v1291 = vmax.f32 %v1191, %v1216
      %v1292 = vmax.f32 %v1192, %v1217
      %v1293 = vmax.f32 %v1193, %v1218
      %v1294 = vmax.f32 %v1194, %v1219
      %v1295 = vmax.f32 %v1195, %v1220
      %v1296 = vmax.f32 %v1196, %v1221
      %v1297 = vmax.f32 %v1222, %v1247
      %v1298 = vmax.f32 %v1223, %v1248
      %v1299 = vmax.f32 %v1224, %v1249
      %v1300 = vmax.f32 %v1225, %v1250
      %v1301 = vmax.f32 %v1226, %v1251
      %v1302 = vmax.f32 %v1227, %v1252
      %v1303 = vmax.f32 %v1228, %v1253
      %v1304 = vmax.f32 %v1229, %v1254
      %v1305 = vmax.f32 %v1230, %v1255
      %v1306 = vmax.f32 %v1231, %v1256
      %v1307 = vmax.f32 %v1232, %v1257
      %v1308 = vmax.f32 %v1233, %v1258
      %v1309 = vmax.f32 %v1234, %v1259
      %v1310 = vmax.f32 %v1235, %v1260
      %v1311 = vmax.f32 %v1236, %v1261
      %v1312 = vmax.f32 %v1237, %v1262
      %v1313 = vmax.f32 %v1238, %v1263
      %v1314 = vmax.f32 %v1239, %v1264
      %v1315 = vmax.f32 %v1240, %v1265
      %v1316 = vmax.f32 %v1241, %v1266
      %v1317 = vmax.f32 %v1242, %v1267
      %v1318 = vmax.f32 %v1243, %v1268
      %v1319 = vmax.f32 %v1244, %v1269
      %v1320 = vmax.f32 %v1245, %v1270
      %v1321 = vmax.f32 %v1246, %v1271
      %v1322 = vmax.f32 %v1272, %v1297
      %v1323 = vmax.f32 %v1273, %v1298
      %v1324 = vmax.f32 %v1274, %v1299
      %v1325 = vmax.f32 %v1275, %v1300
      %v1326 = vmax.f32 %v1276, %v1301
      %v1327 = vmax.f32 %v1277, %v1302
      %v1328 = vmax.f32 %v1278, %v1303
      %v1329 = vmax.f32 %v1279, %v1304
      %v1330 = vmax.f32 %v1280, %v1305
      %v1331 = vmax.f32 %v1281, %v1306
      %v1332 = vmax.f32 %v1282, %v1307
      %v1333 = vmax.f32 %v1283, %v1308
      %v1334 = vmax.f32 %v1284, %v1309
      %v1335 = vmax.f32 %v1285, %v1310
      %v1336 = vmax.f32 %v1286, %v1311
      %v1337 = vmax.f32 %v1287, %v1312
      %v1338 = vmax.f32 %v1288, %v1313
      %v1339 = vmax.f32 %v1289, %v1314
      %v1340 = vmax.f32 %v1290, %v1315
      %v1341 = vmax.f32 %v1291, %v1316
      %v1342 = vmax.f32 %v1292, %v1317
      %v1343 = vmax.f32 %v1293, %v1318
      %v1344 = vmax.f32 %v1294, %v1319
      %v1345 = vmax.f32 %v1295, %v1320
      %v1346 = vmax.f32 %v1296, %v1321
      %v1347 = vld [vmem:[%s2] sm:$0x1]
      %v1349 = vlaneseq
      %v1350 = vshrl.u32 %v1349, 7
      %v1351 = vsub.s32 0, %v1350
      %v1352 = vrot.slane %v1347, %v1351
      %v1354 = vadd.f32 %v1322, %v1352
      %v1355 = vadd.f32 %v1323, %v1352
      %v1356 = vadd.f32 %v1324, %v1352
      %v1357 = vadd.f32 %v1325, %v1352
      %v1358 = vadd.f32 %v1326, %v1352
      %v1359 = vadd.f32 %v1327, %v1352
      %v1360 = vadd.f32 %v1328, %v1352
      %v1361 = vadd.f32 %v1329, %v1352
      %v1362 = vadd.f32 %v1330, %v1352
      %v1363 = vadd.f32 %v1331, %v1352
      %v1364 = vadd.f32 %v1332, %v1352
      %v1365 = vadd.f32 %v1333, %v1352
      %v1366 = vadd.f32 %v1334, %v1352
      %v1367 = vadd.f32 %v1335, %v1352
      %v1368 = vadd.f32 %v1336, %v1352
      %v1369 = vadd.f32 %v1337, %v1352
      %v1370 = vadd.f32 %v1338, %v1352
      %v1371 = vadd.f32 %v1339, %v1352
      %v1372 = vadd.f32 %v1340, %v1352
      %v1373 = vadd.f32 %v1341, %v1352
      %v1374 = vadd.f32 %v1342, %v1352
      %v1375 = vadd.f32 %v1343, %v1352
      %v1376 = vadd.f32 %v1344, %v1352
      %v1377 = vadd.f32 %v1345, %v1352
      %v1378 = vadd.f32 %v1346, %v1352
      %v1379 = vmax.f32 %v1354, 0.0
      %v1380 = vmax.f32 %v1355, 0.0
      %v1381 = vmax.f32 %v1356, 0.0
      %v1382 = vmax.f32 %v1357, 0.0
      %v1383 = vmax.f32 %v1358, 0.0
      %v1384 = vmax.f32 %v1359, 0.0
      %v1385 = vmax.f32 %v1360, 0.0
      %v1386 = vmax.f32 %v1361, 0.0
      %v1387 = vmax.f32 %v1362, 0.0
      %v1388 = vmax.f32 %v1363, 0.0
      %v1389 = vmax.f32 %v1364, 0.0
      %v1390 = vmax.f32 %v1365, 0.0
      %v1391 = vmax.f32 %v1366, 0.0
      %v1392 = vmax.f32 %v1367, 0.0
      %v1393 = vmax.f32 %v1368, 0.0
      %v1394 = vmax.f32 %v1369, 0.0
      %v1395 = vmax.f32 %v1370, 0.0
      %v1396 = vmax.f32 %v1371, 0.0
      %v1397 = vmax.f32 %v1372, 0.0
      %v1398 = vmax.f32 %v1373, 0.0
      %v1399 = vmax.f32 %v1374, 0.0
      %v1400 = vmax.f32 %v1375, 0.0
      %v1401 = vmax.f32 %v1376, 0.0
      %v1402 = vmax.f32 %v1377, 0.0
      %v1403 = vmax.f32 %v1378, 0.0
      %v1404 = vpack.c.bf16 %v1380, %v1379
      %v1405 = vpack.c.bf16 %v1382, %v1381
      %v1406 = vpack.c.bf16 %v1384, %v1383
      %v1407 = vpack.c.bf16 %v1386, %v1385
      %v1408 = vpack.c.bf16 %v1388, %v1387
      %v1409 = vpack.c.bf16 %v1390, %v1389
      %v1410 = vpack.c.bf16 %v1392, %v1391
      %v1411 = vpack.c.bf16 %v1394, %v1393
      %v1412 = vpack.c.bf16 %v1396, %v1395
      %v1413 = vpack.c.bf16 %v1398, %v1397
      %v1414 = vpack.c.bf16 %v1400, %v1399
      %v1415 = vpack.c.bf16 %v1402, %v1401
      %v1416 = vpack.c.bf16 %v1403, %v1403
      %v1430 = vunpack.c.l.b16 %v1404
      %v1431 = vunpack.c.h.b16 %v1404
      %v1432 = vunpack.c.l.b16 %v1405
      %v1433 = vunpack.c.h.b16 %v1405
      %v1434 = vunpack.c.l.b16 %v1406
      %v1435 = vunpack.c.h.b16 %v1406
      %v1436 = vunpack.c.l.b16 %v1407
      %v1437 = vunpack.c.h.b16 %v1407
      %v1438 = vunpack.c.l.b16 %v1408
      %v1439 = vunpack.c.h.b16 %v1408
      %v1440 = vunpack.c.l.b16 %v1409
      %v1441 = vunpack.c.h.b16 %v1409
      %v1442 = vunpack.c.l.b16 %v1410
      %v1443 = vunpack.c.h.b16 %v1410
      %v1444 = vunpack.c.l.b16 %v1411
      %v1445 = vunpack.c.h.b16 %v1411
      %v1446 = vunpack.c.l.b16 %v1412
      %v1447 = vunpack.c.h.b16 %v1412
      %v1448 = vunpack.c.l.b16 %v1413
      %v1449 = vunpack.c.h.b16 %v1413
      %v1450 = vunpack.c.l.b16 %v1414
      %v1451 = vunpack.c.h.b16 %v1414
      %v1452 = vunpack.c.l.b16 %v1415
      %v1453 = vunpack.c.h.b16 %v1415
      %v1454 = vunpack.c.l.b16 %v1416
      %v1455 = vpack.c.b16 %v1430, %v1430
      %v1456 = vpack.c.b16 %v1431, %v1431
      %v1457 = vpack.c.b16 %v1432, %v1432
      %v1458 = vpack.c.b16 %v1433, %v1433
      %v1459 = vpack.c.b16 %v1434, %v1434
      %v1460 = vpack.c.b16 %v1435, %v1435
      %v1461 = vpack.c.b16 %v1436, %v1436
      %v1462 = vpack.c.b16 %v1437, %v1437
      %v1463 = vpack.c.b16 %v1438, %v1438
      %v1464 = vpack.c.b16 %v1439, %v1439
      %v1465 = vpack.c.b16 %v1440, %v1440
      %v1466 = vpack.c.b16 %v1441, %v1441
      %v1467 = vpack.c.b16 %v1442, %v1442
      %v1468 = vpack.c.b16 %v1443, %v1443
      %v1469 = vpack.c.b16 %v1444, %v1444
      %v1470 = vpack.c.b16 %v1445, %v1445
      %v1471 = vpack.c.b16 %v1446, %v1446
      %v1472 = vpack.c.b16 %v1447, %v1447
      %v1473 = vpack.c.b16 %v1448, %v1448
      %v1474 = vpack.c.b16 %v1449, %v1449
      %v1475 = vpack.c.b16 %v1450, %v1450
      %v1476 = vpack.c.b16 %v1451, %v1451
      %v1477 = vpack.c.b16 %v1452, %v1452
      %v1478 = vpack.c.b16 %v1453, %v1453
      %v1479 = vpack.c.b16 %v1454, %v1454
      %1505 = vst [vmem:[%s172] sm:$0xf] %v1455
      %1506 = vst [vmem:[%s172 + $0x4] sm:$0xf] %v1456
      %1507 = vst [vmem:[%s172 + $0x8] sm:$0xf] %v1457
      %1508 = vst [vmem:[%s172 + $0xc] sm:$0xf] %v1458
      %1509 = vst [vmem:[%s172 + $0x10] sm:$0xf] %v1459
      %1510 = vst [vmem:[%s172 + $0x14] sm:$0xf] %v1460
      %1511 = vst [vmem:[%s172 + $0x18] sm:$0xf] %v1461
      %1512 = vst [vmem:[%s172 + $0x1c] sm:$0xf] %v1462
      %1513 = vst [vmem:[%s172 + $0x20] sm:$0xf] %v1463
      %1514 = vst [vmem:[%s172 + $0x24] sm:$0xf] %v1464
      %1515 = vst [vmem:[%s172 + $0x28] sm:$0xf] %v1465
      %1516 = vst [vmem:[%s172 + $0x2c] sm:$0xf] %v1466
      %1517 = vst [vmem:[%s172 + $0x30] sm:$0xf] %v1467
      %1518 = vst [vmem:[%s172 + $0x34] sm:$0xf] %v1468
      %1519 = vst [vmem:[%s172 + $0x38] sm:$0xf] %v1469
      %1520 = vst [vmem:[%s172 + $0x3c] sm:$0xf] %v1470
      %1521 = vst [vmem:[%s172 + $0x40] sm:$0xf] %v1471
      %1522 = vst [vmem:[%s172 + $0x44] sm:$0xf] %v1472
      %1523 = vst [vmem:[%s172 + $0x48] sm:$0xf] %v1473
      %1524 = vst [vmem:[%s172 + $0x4c] sm:$0xf] %v1474
      %1525 = vst [vmem:[%s172 + $0x50] sm:$0xf] %v1475
      %1526 = vst [vmem:[%s172 + $0x54] sm:$0xf] %v1476
      %1527 = vst [vmem:[%s172 + $0x58] sm:$0xf] %v1477
      %1528 = vst [vmem:[%s172 + $0x5c] sm:$0xf] %v1478
      %1529 = vst [vmem:[%s172 + $0x60] sm:$0xf] %v1479
      %s1530 = smul.u32 25, %s14
      %p1531 = scmp.lt.s32.totalorder %s1530, 49
      %s1532 = scalar_select %p1531, %s1530, 49
      %s1533 = smul.addr %s1532, 4
      %s1534 = scalar_lea.vmem %s3, %s1533
      // Predicated region
      $region33: #{net_forward.3} parent=31 // pred_check
        %p1535 = pneg %p100
      $region34: #{net_forward.3} parent=31 // pred_check_branch
        %1537 = sbr.rel (%p1535) target = $region36
      $region35: #{net_forward.3} parent=31 // pred_region
        %s1538 = smul.u32 25, %s14
      $region36: #{net_forward.3} parent=31 // pred_fallthru
        _
    $region32: #{net_forward.3} parent=5 // pred_fallthru
      _
    %p1539 = scmp.le.s32.totalorder 2, %s9
    // Predicated region
    $region37: #{net_forward.3} parent=5 // pred_check
      %p1540 = pneg %p1539
    $region38: #{net_forward.3} parent=5 // pred_check_branch
      %1542 = sbr.rel (%p1540) target = $region40
    $region39: #{net_forward.3} parent=5 // pred_region
      %s1543 = ssub.s32 %s9, 2
      // Predicated region
      $region41: #{net_forward.3} parent=39 // pred_check
        %p1544 = pneg %p106
      $region42: #{net_forward.3} parent=39 // pred_check_branch
        %1546 = sbr.rel (%p1544) target = $region44
      $region43: #{net_forward.3} parent=39 // pred_region
        %s1547 = smul.u32 25, %s15
        %p1548 = scmp.lt.s32.totalorder %s1547, 49
        %s1549 = scalar_select %p1548, %s1547, 49
        %s1550 = smul.addr %s1549, 4
        %s1551 = scalar_lea.vmem %s3, %s1550
      $region44: #{net_forward.3} parent=39 // pred_fallthru
        _
    $region40: #{net_forward.3} parent=5 // pred_fallthru
      _
  $region6: #{net_forward.3} parent=0 // loop_footer
    %s13 = sadd.s32 1, %s9
  $region7: #{net_forward.3} parent=0 // loop_footer_branch
    %8 = sbr.rel target = $region3
  $region8: #{net_forward.3} parent=0 // loop_exit
    _

// kernel: net_forward.4
$region0: #{net_forward.4}
  #allocation0 [shape = 'u32[]', space=smem, size = 0x4, offset = 0x4, fixed_abs, tag = 'smem constant byte address 0x4 - core index']
  #allocation1 [shape = 'u32[144,128]{1,0:T(1,128)}', space=vmem, size = 0x12000, scoped, tag = 'internal scratch']
  #allocation2 [shape = 'f32[128,128]{1,0:T(8,128)}', space=vmem, size = 0x10000, scoped, tag = 'scratch operand']
  %s0 = inlined_call_operand.vmem [shape: bf16[256,896], index: 0, kind: input, shape index: {}]
  %s1 = inlined_call_operand.vmem [shape: bf16[896,128], index: 1, kind: input, shape index: {}]
  %s2 = inlined_call_operand.vmem [shape: f32[1,128], index: 2, kind: input, shape index: {}]
  %s3 = inlined_call_operand.vmem [shape: bf16[64,128], index: 3, kind: output, shape index: {}]
  %s4 = sld [smem:[#allocation0]]
  $region45: #{net_forward.4} parent=0
    _
  %s6 = ssub.s32 1, %s4
  %s7 = scalar_select 0, %s6, %s4
  loop: start=0, step=1, limit=4
  $region2: #{net_forward.4} parent=0 // loop_pre_header
    _
  $region3: #{net_forward.4} parent=0 // loop_header
    %s9 = sphi 0, %s13
    %p10 = scmp.ge.s32.totalorder %s9, 4
    %s19 = sphi 0, %s21
    %s22 = sphi 0, %s19
    %s23 = sphi 0, %s22
    %s39 = sphi 0, %s23
    %s43 = sphi 0, %s43
    %s45 = sphi 0, %s43
    %s46 = sphi 0, %s45
    %s60 = sphi 0, %s46
    %s64 = sphi 0, %s64
    %s66 = sphi 0, %s64
    %s67 = sphi 0, %s66
    %s81 = sphi 0, %s67
    %s87 = sphi 0, %s89
    %s90 = sphi 0, %s87
    %s91 = sphi 0, %s90
    %s107 = sphi 0, %s91
  $region4: #{net_forward.4} parent=0 // loop_header_branch
    %12 = sbr.rel (%p10) target = $region8
  $region5: #{net_forward.4} parent=0 // loop_body
    %s14 = ssub.s32 %s9, 1
    %s15 = ssub.s32 %s9, 2
    %s16 = sadd.s32 %s9, 1
    %s17 = ssub.s32 %s9, %s16
    %p18 = scmp.eq.s32.totalorder %s17, 0
    %s20 = sadd.s32 %s19, 1
    %s21 = scalar_select %p18, %s19, %s20
    %p24 = pneg %p18
    %p25 = scmp.eq.s32.totalorder %s9, 1
    %p26 = por %p24, %p25
    %p27 = scmp.ne.s32.totalorder %s19, %s22
    %p28 = scmp.eq.s32.totalorder %s9, 0
    %p29 = por %p27, %p28
    %p30 = scmp.ne.s32.totalorder %s19, %s22
    %p31 = scmp.eq.s32.totalorder %s14, 1
    %p32 = por %p30, %p31
    %p33 = scmp.ne.s32.totalorder %s22, %s23
    %p34 = scmp.eq.s32.totalorder %s14, 0
    %p35 = por %p33, %p34
    %p36 = scmp.ne.s32.totalorder %s22, %s23
    %p37 = scmp.eq.s32.totalorder %s15, 1
    %p38 = por %p36, %p37
    %p40 = scmp.ne.s32.totalorder %s23, %s39
    %p41 = scmp.eq.s32.totalorder %s15, 0
    %p42 = por %p40, %p41
    %s44 = sadd.s32 %s43, 1
    %p47 = scmp.eq.s32.totalorder %s9, 1
    %p48 = scmp.ne.s32.totalorder %s43, %s45
    %p49 = scmp.eq.s32.totalorder %s9, 0
    %p50 = por %p48, %p49
    %p51 = scmp.ne.s32.totalorder %s43, %s45
    %p52 = scmp.eq.s32.totalorder %s14, 1
    %p53 = por %p51, %p52
    %p54 = scmp.ne.s32.totalorder %s45, %s46
    %p55 = scmp.eq.s32.totalorder %s14, 0
    %p56 = por %p54, %p55
    %p57 = scmp.ne.s32.totalorder %s45, %s46
    %p58 = scmp.eq.s32.totalorder %s15, 1
    %p59 = por %p57, %p58
    %p61 = scmp.ne.s32.totalorder %s46, %s60
    %p62 = scmp.eq.s32.totalorder %s15, 0
    %p63 = por %p61, %p62
    %s65 = sadd.s32 %s64, 1
    %p68 = scmp.eq.s32.totalorder %s9, 1
    %p69 = scmp.ne.s32.totalorder %s64, %s66
    %p70 = scmp.eq.s32.totalorder %s9, 0
    %p71 = por %p69, %p70
    %p72 = scmp.ne.s32.totalorder %s64, %s66
    %p73 = scmp.eq.s32.totalorder %s14, 1
    %p74 = por %p72, %p73
    %p75 = scmp.ne.s32.totalorder %s66, %s67
    %p76 = scmp.eq.s32.totalorder %s14, 0
    %p77 = por %p75, %p76
    %p78 = scmp.ne.s32.totalorder %s66, %s67
    %p79 = scmp.eq.s32.totalorder %s15, 1
    %p80 = por %p78, %p79
    %p82 = scmp.ne.s32.totalorder %s67, %s81
    %p83 = scmp.eq.s32.totalorder %s15, 0
    %p84 = por %p82, %p83
    %s85 = ssub.s32 %s9, %s16
    %p86 = scmp.eq.s32.totalorder %s85, 0
    %s88 = sadd.s32 %s87, 1
    %s89 = scalar_select %p86, %s87, %s88
    %p92 = pneg %p86
    %p93 = scmp.eq.s32.totalorder %s9, 1
    %p94 = por %p92, %p93
    %p95 = scmp.ne.s32.totalorder %s87, %s90
    %p96 = scmp.eq.s32.totalorder %s9, 0
    %p97 = por %p95, %p96
    %p98 = scmp.ne.s32.totalorder %s87, %s90
    %p99 = scmp.eq.s32.totalorder %s14, 1
    %p100 = por %p98, %p99
    %p101 = scmp.ne.s32.totalorder %s90, %s91
    %p102 = scmp.eq.s32.totalorder %s14, 0
    %p103 = por %p101, %p102
    %p104 = scmp.ne.s32.totalorder %s90, %s91
    %p105 = scmp.eq.s32.totalorder %s15, 1
    %p106 = por %p104, %p105
    %p108 = scmp.ne.s32.totalorder %s91, %s107
    %p109 = scmp.eq.s32.totalorder %s15, 0
    %p110 = por %p108, %p109
    %p111 = scmp.le.s32.totalorder 1, %s9
    %p112 = scmp.lt.s32.totalorder %s9, 3
    %p113 = pnand %p111, %p112
    %p114 = pneg %p113
    // Predicated region
    $region9: #{net_forward.4} parent=5 // pred_check
      _
    $region10: #{net_forward.4} parent=5 // pred_check_branch
      %116 = sbr.rel (%p113) target = $region12
    $region11: #{net_forward.4} parent=5 // pred_region
      %s117 = ssub.s32 %s9, 1
      // Predicated region
      $region13: #{net_forward.4} parent=11 // pred_check
        %p118 = pneg %p56
      $region14: #{net_forward.4} parent=11 // pred_check_branch
        %120 = sbr.rel (%p118) target = $region16
      $region15: #{net_forward.4} parent=11 // pred_region
        _
      $region16: #{net_forward.4} parent=11 // pred_fallthru
        _
      // Predicated region
      $region17: #{net_forward.4} parent=11 // pred_check
        %p121 = pneg %p77
      $region18: #{net_forward.4} parent=11 // pred_check_branch
        %123 = sbr.rel (%p121) target = $region20
      $region19: #{net_forward.4} parent=11 // pred_region
        _
      $region20: #{net_forward.4} parent=11 // pred_fallthru
        _
    $region12: #{net_forward.4} parent=5 // pred_fallthru
      _
    %p124 = scmp.lt.s32.totalorder %s9, 2
    // Predicated region
    $region21: #{net_forward.4} parent=5 // pred_check
      %p125 = pneg %p124
    $region22: #{net_forward.4} parent=5 // pred_check_branch
      %127 = sbr.rel (%p125) target = $region24
    $region23: #{net_forward.4} parent=5 // pred_region
      // Predicated region
      $region25: #{net_forward.4} parent=23 // pred_check
        %p128 = pneg %p29
      $region26: #{net_forward.4} parent=23 // pred_check_branch
        %130 = sbr.rel (%p128) target = $region28
      $region27: #{net_forward.4} parent=23 // pred_region
        %s131 = smul.u32 16, %s9
        %p132 = scmp.lt.s32.totalorder %s131, 31
        %s133 = scalar_select %p132, %s131, 31
        %s134 = smul.addr %s133, 7
        %s135 = smul.addr %s134, 4
        %s136 = scalar_lea.vmem %s0, %s135
        %s137 = smul.u32 16, %s9
      $region28: #{net_forward.4} parent=23 // pred_fallthru
        _
    $region24: #{net_forward.4} parent=5 // pred_fallthru
      _
    %p138 = scmp.le.s32.totalorder 1, %s9
    %p139 = scmp.lt.s32.totalorder %s9, 3
    %p140 = pnand %p138, %p139
    %p141 = pneg %p140
    // Predicated region
    $region29: #{net_forward.4} parent=5 // pred_check
      _
    $region30: #{net_forward.4} parent=5 // pred_check_branch
      %143 = sbr.rel (%p140) target = $region32
    $region31: #{net_forward.4} parent=5 // pred_region
      %s144 = ssub.s32 %s9, 1
      %s145 = smul.u32 16, %s14
      %p146 = scmp.lt.s32.totalorder %s145, 31
      %s147 = scalar_select %p146, %s145, 31
      %s148 = smul.addr %s147, 7
      %s149 = smul.addr %s148, 4
      %s150 = scalar_lea.vmem %s0, %s149
      %p151 = pneg %p35
      %p152 = pneg %p32
      %p153 = pneg %p56
      %p154 = pneg %p53
      %p155 = pneg %p77
      %p156 = pneg %p74
      %p157 = pneg %p103
      %p158 = pneg %p100
      %s159 = smul.u32 4, %s14
      %p160 = scmp.lt.s32.totalorder %s159, 7
      %s161 = scalar_select %p160, %s159, 7
      %s162 = smul.addr %s161, 4
      %s163 = scalar_lea.vmem %s3, %s162
      %s164 = smul.u32 16, %s14
      %p165 = scmp.lt.s32.totalorder %s164, 31
      %s166 = scalar_select %p165, %s164, 31
      %s167 = smul.addr %s166, 7
      %s168 = smul.addr %s167, 4
      %s169 = scalar_lea.vmem %s0, %s168
      %s170 = smul.u32 16, %s14
      %s171 = smul.u32 4, %s14
      %p172 = scmp.lt.s32.totalorder %s171, 7
      %s173 = scalar_select %p172, %s171, 7
      %s174 = smul.addr %s173, 4
      %s175 = scalar_lea.vmem %s3, %s174
      %s176 = smul.u32 4, %s14
      %v178 = vld [vmem:[%s169] sm:$0xff]
      %v179 = vld [vmem:[%s169 + $0x8] sm:$0xff]
      %v180 = vld [vmem:[%s169 + $0x10] sm:$0xff]
      %v181 = vld [vmem:[%s169 + $0x18] sm:$0xf]
      %v182 = vld [vmem:[%s169 + $0x1c] sm:$0xff]
      %v183 = vld [vmem:[%s169 + $0x24] sm:$0xff]
      %v184 = vld [vmem:[%s169 + $0x2c] sm:$0xff]
      %v185 = vld [vmem:[%s169 + $0x34] sm:$0xf]
      %v186 = vld [vmem:[%s169 + $0x38] sm:$0xff]
      %v187 = vld [vmem:[%s169 + $0x40] sm:$0xff]
      %v188 = vld [vmem:[%s169 + $0x48] sm:$0xff]
      %v189 = vld [vmem:[%s169 + $0x50] sm:$0xf]
      %v190 = vld [vmem:[%s169 + $0x54] sm:$0xff]
      %v191 = vld [vmem:[%s169 + $0x5c] sm:$0xff]
      %v192 = vld [vmem:[%s169 + $0x64] sm:$0xff]
      %v193 = vld [vmem:[%s169 + $0x6c] sm:$0xf]
      %v194 = vld [vmem:[%s169 + $0x70] sm:$0xff]
      %v195 = vld [vmem:[%s169 + $0x78] sm:$0xff]
      %v196 = vld [vmem:[%s169 + $0x80] sm:$0xff]
      %v197 = vld [vmem:[%s169 + $0x88] sm:$0xf]
      %v198 = vld [vmem:[%s169 + $0x8c] sm:$0xff]
      %v199 = vld [vmem:[%s169 + $0x94] sm:$0xff]
      %v200 = vld [vmem:[%s169 + $0x9c] sm:$0xff]
      %v201 = vld [vmem:[%s169 + $0xa4] sm:$0xf]
      %v202 = vld [vmem:[%s169 + $0xa8] sm:$0xff]
      %v203 = vld [vmem:[%s169 + $0xb0] sm:$0xff]
      %v204 = vld [vmem:[%s169 + $0xb8] sm:$0xff]
      %v205 = vld [vmem:[%s169 + $0xc0] sm:$0xf]
      %v206 = vld [vmem:[%s169 + $0xc4] sm:$0xff]
      %v207 = vld [vmem:[%s169 + $0xcc] sm:$0xff]
      %v208 = vld [vmem:[%s169 + $0xd4] sm:$0xff]
      %v209 = vld [vmem:[%s169 + $0xdc] sm:$0xf]
      %v210 = vld [vmem:[%s169 + $0xe0] sm:$0xff]
      %v211 = vld [vmem:[%s169 + $0xe8] sm:$0xff]
      %v212 = vld [vmem:[%s169 + $0xf0] sm:$0xff]
      %v213 = vld [vmem:[%s169 + $0xf8] sm:$0xf]
      %v214 = vld [vmem:[%s169 + $0xfc] sm:$0xff]
      %v215 = vld [vmem:[%s169 + $0x104] sm:$0xff]
      %v216 = vld [vmem:[%s169 + $0x10c] sm:$0xff]
      %v217 = vld [vmem:[%s169 + $0x114] sm:$0xf]
      %v218 = vld [vmem:[%s169 + $0x118] sm:$0xff]
      %v219 = vld [vmem:[%s169 + $0x120] sm:$0xff]
      %v220 = vld [vmem:[%s169 + $0x128] sm:$0xff]
      %v221 = vld [vmem:[%s169 + $0x130] sm:$0xf]
      %v222 = vld [vmem:[%s169 + $0x134] sm:$0xff]
      %v223 = vld [vmem:[%s169 + $0x13c] sm:$0xff]
      %v224 = vld [vmem:[%s169 + $0x144] sm:$0xff]
      %v225 = vld [vmem:[%s169 + $0x14c] sm:$0xf]
      %v226 = vld [vmem:[%s169 + $0x150] sm:$0xff]
      %v227 = vld [vmem:[%s169 + $0x158] sm:$0xff]
      %v228 = vld [vmem:[%s169 + $0x160] sm:$0xff]
      %v229 = vld [vmem:[%s169 + $0x168] sm:$0xf]
      %v230 = vld [vmem:[%s169 + $0x16c] sm:$0xff]
      %v231 = vld [vmem:[%s169 + $0x174] sm:$0xff]
      %v232 = vld [vmem:[%s169 + $0x17c] sm:$0xff]
      %v233 = vld [vmem:[%s169 + $0x184] sm:$0xf]
      %v234 = vld [vmem:[%s169 + $0x188] sm:$0xff]
      %v235 = vld [vmem:[%s169 + $0x190] sm:$0xff]
      %v236 = vld [vmem:[%s169 + $0x198] sm:$0xff]
      %v237 = vld [vmem:[%s169 + $0x1a0] sm:$0xf]
      %v238 = vld [vmem:[%s169 + $0x1a4] sm:$0xff]
      %v239 = vld [vmem:[%s169 + $0x1ac] sm:$0xff]
      %v240 = vld [vmem:[%s169 + $0x1b4] sm:$0xff]
      %v241 = vld [vmem:[%s169 + $0x1bc] sm:$0xf]
      %v242 = vld [vmem:[%s1] sm:$0xf]
      %v243 = vld [vmem:[%s1 + $0x4] sm:$0xf]
      %v244 = vld [vmem:[%s1 + $0x8] sm:$0xf]
      %v245 = vld [vmem:[%s1 + $0xc] sm:$0xf]
      %v246 = vld [vmem:[%s1 + $0x10] sm:$0xf]
      %v247 = vld [vmem:[%s1 + $0x14] sm:$0xf]
      %v248 = vld [vmem:[%s1 + $0x18] sm:$0xf]
      %v249 = vld [vmem:[%s1 + $0x1c] sm:$0xf]
      %v250 = vld [vmem:[%s1 + $0x20] sm:$0xf]
      %v251 = vld [vmem:[%s1 + $0x24] sm:$0xf]
      %v252 = vld [vmem:[%s1 + $0x28] sm:$0xf]
      %v253 = vld [vmem:[%s1 + $0x2c] sm:$0xf]
      %v254 = vld [vmem:[%s1 + $0x30] sm:$0xf]
      %v255 = vld [vmem:[%s1 + $0x34] sm:$0xf]
      %v256 = vld [vmem:[%s1 + $0x38] sm:$0xf]
      %v257 = vld [vmem:[%s1 + $0x3c] sm:$0xf]
      %v258 = vld [vmem:[%s1 + $0x40] sm:$0xf]
      %v259 = vld [vmem:[%s1 + $0x44] sm:$0xf]
      %v260 = vld [vmem:[%s1 + $0x48] sm:$0xf]
      %v261 = vld [vmem:[%s1 + $0x4c] sm:$0xf]
      %v262 = vld [vmem:[%s1 + $0x50] sm:$0xf]
      %v263 = vld [vmem:[%s1 + $0x54] sm:$0xf]
      %v264 = vld [vmem:[%s1 + $0x58] sm:$0xf]
      %v265 = vld [vmem:[%s1 + $0x5c] sm:$0xf]
      %v266 = vld [vmem:[%s1 + $0x60] sm:$0xf]
      %v267 = vld [vmem:[%s1 + $0x64] sm:$0xf]
      %v268 = vld [vmem:[%s1 + $0x68] sm:$0xf]
      %v269 = vld [vmem:[%s1 + $0x6c] sm:$0xf]
      %v270 = vld [vmem:[%s1 + $0x70] sm:$0xf]
      %v271 = vld [vmem:[%s1 + $0x74] sm:$0xf]
      %v272 = vld [vmem:[%s1 + $0x78] sm:$0xf]
      %v273 = vld [vmem:[%s1 + $0x7c] sm:$0xf]
      %v274 = vld [vmem:[%s1 + $0x80] sm:$0xf]
      %v275 = vld [vmem:[%s1 + $0x84] sm:$0xf]
      %v276 = vld [vmem:[%s1 + $0x88] sm:$0xf]
      %v277 = vld [vmem:[%s1 + $0x8c] sm:$0xf]
      %v278 = vld [vmem:[%s1 + $0x90] sm:$0xf]
      %v279 = vld [vmem:[%s1 + $0x94] sm:$0xf]
      %v280 = vld [vmem:[%s1 + $0x98] sm:$0xf]
      %v281 = vld [vmem:[%s1 + $0x9c] sm:$0xf]
      %v282 = vld [vmem:[%s1 + $0xa0] sm:$0xf]
      %v283 = vld [vmem:[%s1 + $0xa4] sm:$0xf]
      %v284 = vld [vmem:[%s1 + $0xa8] sm:$0xf]
      %v285 = vld [vmem:[%s1 + $0xac] sm:$0xf]
      %v286 = vld [vmem:[%s1 + $0xb0] sm:$0xf]
      %v287 = vld [vmem:[%s1 + $0xb4] sm:$0xf]
      %v288 = vld [vmem:[%s1 + $0xb8] sm:$0xf]
      %v289 = vld [vmem:[%s1 + $0xbc] sm:$0xf]
      %v290 = vld [vmem:[%s1 + $0xc0] sm:$0xf]
      %v291 = vld [vmem:[%s1 + $0xc4] sm:$0xf]
      %v292 = vld [vmem:[%s1 + $0xc8] sm:$0xf]
      %v293 = vld [vmem:[%s1 + $0xcc] sm:$0xf]
      %v294 = vld [vmem:[%s1 + $0xd0] sm:$0xf]
      %v295 = vld [vmem:[%s1 + $0xd4] sm:$0xf]
      %v296 = vld [vmem:[%s1 + $0xd8] sm:$0xf]
      %v297 = vld [vmem:[%s1 + $0xdc] sm:$0xf]
      %v298 = vld [vmem:[%s1 + $0xe0] sm:$0xf]
      %v299 = vld [vmem:[%s1 + $0xe4] sm:$0xf]
      %v300 = vld [vmem:[%s1 + $0xe8] sm:$0xf]
      %v301 = vld [vmem:[%s1 + $0xec] sm:$0xf]
      %v302 = vld [vmem:[%s1 + $0xf0] sm:$0xf]
      %v303 = vld [vmem:[%s1 + $0xf4] sm:$0xf]
      %v304 = vld [vmem:[%s1 + $0xf8] sm:$0xf]
      %v305 = vld [vmem:[%s1 + $0xfc] sm:$0xf]
      %v306 = vld [vmem:[%s1 + $0x100] sm:$0xf]
      %v307 = vld [vmem:[%s1 + $0x104] sm:$0xf]
      %v308 = vld [vmem:[%s1 + $0x108] sm:$0xf]
      %v309 = vld [vmem:[%s1 + $0x10c] sm:$0xf]
      %v310 = vld [vmem:[%s1 + $0x110] sm:$0xf]
      %v311 = vld [vmem:[%s1 + $0x114] sm:$0xf]
      %v312 = vld [vmem:[%s1 + $0x118] sm:$0xf]
      %v313 = vld [vmem:[%s1 + $0x11c] sm:$0xf]
      %v314 = vld [vmem:[%s1 + $0x120] sm:$0xf]
      %v315 = vld [vmem:[%s1 + $0x124] sm:$0xf]
      %v316 = vld [vmem:[%s1 + $0x128] sm:$0xf]
      %v317 = vld [vmem:[%s1 + $0x12c] sm:$0xf]
      %v318 = vld [vmem:[%s1 + $0x130] sm:$0xf]
      %v319 = vld [vmem:[%s1 + $0x134] sm:$0xf]
      %v320 = vld [vmem:[%s1 + $0x138] sm:$0xf]
      %v321 = vld [vmem:[%s1 + $0x13c] sm:$0xf]
      %v322 = vld [vmem:[%s1 + $0x140] sm:$0xf]
      %v323 = vld [vmem:[%s1 + $0x144] sm:$0xf]
      %v324 = vld [vmem:[%s1 + $0x148] sm:$0xf]
      %v325 = vld [vmem:[%s1 + $0x14c] sm:$0xf]
      %v326 = vld [vmem:[%s1 + $0x150] sm:$0xf]
      %v327 = vld [vmem:[%s1 + $0x154] sm:$0xf]
      %v328 = vld [vmem:[%s1 + $0x158] sm:$0xf]
      %v329 = vld [vmem:[%s1 + $0x15c] sm:$0xf]
      %v330 = vld [vmem:[%s1 + $0x160] sm:$0xf]
      %v331 = vld [vmem:[%s1 + $0x164] sm:$0xf]
      %v332 = vld [vmem:[%s1 + $0x168] sm:$0xf]
      %v333 = vld [vmem:[%s1 + $0x16c] sm:$0xf]
      %v334 = vld [vmem:[%s1 + $0x170] sm:$0xf]
      %v335 = vld [vmem:[%s1 + $0x174] sm:$0xf]
      %v336 = vld [vmem:[%s1 + $0x178] sm:$0xf]
      %v337 = vld [vmem:[%s1 + $0x17c] sm:$0xf]
      %v338 = vld [vmem:[%s1 + $0x180] sm:$0xf]
      %v339 = vld [vmem:[%s1 + $0x184] sm:$0xf]
      %v340 = vld [vmem:[%s1 + $0x188] sm:$0xf]
      %v341 = vld [vmem:[%s1 + $0x18c] sm:$0xf]
      %v342 = vld [vmem:[%s1 + $0x190] sm:$0xf]
      %v343 = vld [vmem:[%s1 + $0x194] sm:$0xf]
      %v344 = vld [vmem:[%s1 + $0x198] sm:$0xf]
      %v345 = vld [vmem:[%s1 + $0x19c] sm:$0xf]
      %v346 = vld [vmem:[%s1 + $0x1a0] sm:$0xf]
      %v347 = vld [vmem:[%s1 + $0x1a4] sm:$0xf]
      %v348 = vld [vmem:[%s1 + $0x1a8] sm:$0xf]
      %v349 = vld [vmem:[%s1 + $0x1ac] sm:$0xf]
      %v350 = vld [vmem:[%s1 + $0x1b0] sm:$0xf]
      %v351 = vld [vmem:[%s1 + $0x1b4] sm:$0xf]
      %v352 = vld [vmem:[%s1 + $0x1b8] sm:$0xf]
      %v353 = vld [vmem:[%s1 + $0x1bc] sm:$0xf]
      %v418 = vunpack.c.l.b16 %v178
      %v419 = vunpack.c.h.b16 %v178
      %v420 = vunpack.c.l.b16 %v179
      %v421 = vunpack.c.h.b16 %v179
      %v422 = vunpack.c.l.b16 %v180
      %v423 = vunpack.c.h.b16 %v180
      %v424 = vunpack.c.l.b16 %v181
      %v425 = vunpack.c.l.b16 %v182
      %v426 = vunpack.c.h.b16 %v182
      %v427 = vunpack.c.l.b16 %v183
      %v428 = vunpack.c.h.b16 %v183
      %v429 = vunpack.c.l.b16 %v184
      %v430 = vunpack.c.h.b16 %v184
      %v431 = vunpack.c.l.b16 %v185
      %v432 = vunpack.c.l.b16 %v186
      %v433 = vunpack.c.h.b16 %v186
      %v434 = vunpack.c.l.b16 %v187
      %v435 = vunpack.c.h.b16 %v187
      %v436 = vunpack.c.l.b16 %v188
      %v437 = vunpack.c.h.b16 %v188
      %v438 = vunpack.c.l.b16 %v189
      %v439 = vunpack.c.l.b16 %v190
      %v440 = vunpack.c.h.b16 %v190
      %v441 = vunpack.c.l.b16 %v191
      %v442 = vunpack.c.h.b16 %v191
      %v443 = vunpack.c.l.b16 %v192
      %v444 = vunpack.c.h.b16 %v192
      %v445 = vunpack.c.l.b16 %v193
      %v446 = vunpack.c.l.b16 %v194
      %v447 = vunpack.c.h.b16 %v194
      %v448 = vunpack.c.l.b16 %v195
      %v449 = vunpack.c.h.b16 %v195
      %v450 = vunpack.c.l.b16 %v196
      %v451 = vunpack.c.h.b16 %v196
      %v452 = vunpack.c.l.b16 %v197
      %v453 = vunpack.c.l.b16 %v198
      %v454 = vunpack.c.h.b16 %v198
      %v455 = vunpack.c.l.b16 %v199
      %v456 = vunpack.c.h.b16 %v199
      %v457 = vunpack.c.l.b16 %v200
      %v458 = vunpack.c.h.b16 %v200
      %v459 = vunpack.c.l.b16 %v201
      %v460 = vunpack.c.l.b16 %v202
      %v461 = vunpack.c.h.b16 %v202
      %v462 = vunpack.c.l.b16 %v203
      %v463 = vunpack.c.h.b16 %v203
      %v464 = vunpack.c.l.b16 %v204
      %v465 = vunpack.c.h.b16 %v204
      %v466 = vunpack.c.l.b16 %v205
      %v467 = vunpack.c.l.b16 %v206
      %v468 = vunpack.c.h.b16 %v206
      %v469 = vunpack.c.l.b16 %v207
      %v470 = vunpack.c.h.b16 %v207
      %v471 = vunpack.c.l.b16 %v208
      %v472 = vunpack.c.h.b16 %v208
      %v473 = vunpack.c.l.b16 %v209
      %v474 = vunpack.c.l.b16 %v210
      %v475 = vunpack.c.h.b16 %v210
      %v476 = vunpack.c.l.b16 %v211
      %v477 = vunpack.c.h.b16 %v211
      %v478 = vunpack.c.l.b16 %v212
      %v479 = vunpack.c.h.b16 %v212
      %v480 = vunpack.c.l.b16 %v213
      %v481 = vunpack.c.l.b16 %v214
      %v482 = vunpack.c.h.b16 %v214
      %v483 = vunpack.c.l.b16 %v215
      %v484 = vunpack.c.h.b16 %v215
      %v485 = vunpack.c.l.b16 %v216
      %v486 = vunpack.c.h.b16 %v216
      %v487 = vunpack.c.l.b16 %v217
      %v488 = vunpack.c.l.b16 %v218
      %v489 = vunpack.c.h.b16 %v218
      %v490 = vunpack.c.l.b16 %v219
      %v491 = vunpack.c.h.b16 %v219
      %v492 = vunpack.c.l.b16 %v220
      %v493 = vunpack.c.h.b16 %v220
      %v494 = vunpack.c.l.b16 %v221
      %v495 = vunpack.c.l.b16 %v222
      %v496 = vunpack.c.h.b16 %v222
      %v497 = vunpack.c.l.b16 %v223
      %v498 = vunpack.c.h.b16 %v223
      %v499 = vunpack.c.l.b16 %v224
      %v500 = vunpack.c.h.b16 %v224
      %v501 = vunpack.c.l.b16 %v225
      %v502 = vunpack.c.l.b16 %v226
      %v503 = vunpack.c.h.b16 %v226
      %v504 = vunpack.c.l.b16 %v227
      %v505 = vunpack.c.h.b16 %v227
      %v506 = vunpack.c.l.b16 %v228
      %v507 = vunpack.c.h.b16 %v228
      %v508 = vunpack.c.l.b16 %v229
      %v509 = vunpack.c.l.b16 %v230
      %v510 = vunpack.c.h.b16 %v230
      %v511 = vunpack.c.l.b16 %v231
      %v512 = vunpack.c.h.b16 %v231
      %v513 = vunpack.c.l.b16 %v232
      %v514 = vunpack.c.h.b16 %v232
      %v515 = vunpack.c.l.b16 %v233
      %v516 = vunpack.c.l.b16 %v234
      %v517 = vunpack.c.h.b16 %v234
      %v518 = vunpack.c.l.b16 %v235
      %v519 = vunpack.c.h.b16 %v235
      %v520 = vunpack.c.l.b16 %v236
      %v521 = vunpack.c.h.b16 %v236
      %v522 = vunpack.c.l.b16 %v237
      %v523 = vunpack.c.l.b16 %v238
      %v524 = vunpack.c.h.b16 %v238
      %v525 = vunpack.c.l.b16 %v239
      %v526 = vunpack.c.h.b16 %v239
      %v527 = vunpack.c.l.b16 %v240
      %v528 = vunpack.c.h.b16 %v240
      %v529 = vunpack.c.l.b16 %v241
      %v530 = vpack.c.b16 %v425, %v418
      %v531 = vpack.c.b16 %v426, %v419
      %v532 = vpack.c.b16 %v427, %v420
      %v533 = vpack.c.b16 %v428, %v421
      %v534 = vpack.c.b16 %v429, %v422
      %v535 = vpack.c.b16 %v430, %v423
      %v536 = vpack.c.b16 %v431, %v424
      %v537 = vpack.c.b16 %v439, %v432
      %v538 = vpack.c.b16 %v440, %v433
      %v539 = vpack.c.b16 %v441, %v434
      %v540 = vpack.c.b16 %v442, %v435
      %v541 = vpack.c.b16 %v443, %v436
      %v542 = vpack.c.b16 %v444, %v437
      %v543 = vpack.c.b16 %v445, %v438
      %v544 = vpack.c.b16 %v453, %v446
      %v545 = vpack.c.b16 %v454, %v447
      %v546 = vpack.c.b16 %v455, %v448
      %v547 = vpack.c.b16 %v456, %v449
      %v548 = vpack.c.b16 %v457, %v450
      %v549 = vpack.c.b16 %v458, %v451
      %v550 = vpack.c.b16 %v459, %v452
      %v551 = vpack.c.b16 %v467, %v460
      %v552 = vpack.c.b16 %v468, %v461
      %v553 = vpack.c.b16 %v469, %v462
      %v554 = vpack.c.b16 %v470, %v463
      %v555 = vpack.c.b16 %v471, %v464
      %v556 = vpack.c.b16 %v472, %v465
      %v557 = vpack.c.b16 %v473, %v466
      %v558 = vpack.c.b16 %v481, %v474
      %v559 = vpack.c.b16 %v482, %v475
      %v560 = vpack.c.b16 %v483, %v476
      %v561 = vpack.c.b16 %v484, %v477
      %v562 = vpack.c.b16 %v485, %v478
      %v563 = vpack.c.b16 %v486, %v479
      %v564 = vpack.c.b16 %v487, %v480
      %v565 = vpack.c.b16 %v495, %v488
      %v566 = vpack.c.b16 %v496, %v489
      %v567 = vpack.c.b16 %v497, %v490
      %v568 = vpack.c.b16 %v498, %v491
      %v569 = vpack.c.b16 %v499, %v492
      %v570 = vpack.c.b16 %v500, %v493
      %v571 = vpack.c.b16 %v501, %v494
      %v572 = vpack.c.b16 %v509, %v502
      %v573 = vpack.c.b16 %v510, %v503
      %v574 = vpack.c.b16 %v511, %v504
      %v575 = vpack.c.b16 %v512, %v505
      %v576 = vpack.c.b16 %v513, %v506
      %v577 = vpack.c.b16 %v514, %v507
      %v578 = vpack.c.b16 %v515, %v508
      %v579 = vpack.c.b16 %v523, %v516
      %v580 = vpack.c.b16 %v524, %v517
      %v581 = vpack.c.b16 %v525, %v518
      %v582 = vpack.c.b16 %v526, %v519
      %v583 = vpack.c.b16 %v527, %v520
      %v584 = vpack.c.b16 %v528, %v521
      %v585 = vpack.c.b16 %v529, %v522
      %v754 = vunpack.c.l.b16 %v242
      %v755 = vunpack.c.l.b16 %v243
      %v756 = vunpack.c.l.b16 %v244
      %v757 = vunpack.c.l.b16 %v245
      %v758 = vunpack.c.l.b16 %v246
      %v759 = vunpack.c.l.b16 %v247
      %v760 = vunpack.c.l.b16 %v248
      %v761 = vunpack.c.l.b16 %v249
      %v762 = vunpack.c.l.b16 %v250
      %v763 = vunpack.c.l.b16 %v251
      %v764 = vunpack.c.l.b16 %v252
      %v765 = vunpack.c.l.b16 %v253
      %v766 = vunpack.c.l.b16 %v254
      %v767 = vunpack.c.l.b16 %v255
      %v768 = vunpack.c.l.b16 %v256
      %v769 = vunpack.c.l.b16 %v257
      %v770 = vunpack.c.l.b16 %v258
      %v771 = vunpack.c.l.b16 %v259
      %v772 = vunpack.c.l.b16 %v260
      %v773 = vunpack.c.l.b16 %v261
      %v774 = vunpack.c.l.b16 %v262
      %v775 = vunpack.c.l.b16 %v263
      %v776 = vunpack.c.l.b16 %v264
      %v777 = vunpack.c.l.b16 %v265
      %v778 = vunpack.c.l.b16 %v266
      %v779 = vunpack.c.l.b16 %v267
      %v780 = vunpack.c.l.b16 %v268
      %v781 = vunpack.c.l.b16 %v269
      %v782 = vunpack.c.l.b16 %v270
      %v783 = vunpack.c.l.b16 %v271
      %v784 = vunpack.c.l.b16 %v272
      %v785 = vunpack.c.l.b16 %v273
      %v786 = vunpack.c.l.b16 %v274
      %v787 = vunpack.c.l.b16 %v275
      %v788 = vunpack.c.l.b16 %v276
      %v789 = vunpack.c.l.b16 %v277
      %v790 = vunpack.c.l.b16 %v278
      %v791 = vunpack.c.l.b16 %v279
      %v792 = vunpack.c.l.b16 %v280
      %v793 = vunpack.c.l.b16 %v281
      %v794 = vunpack.c.l.b16 %v282
      %v795 = vunpack.c.l.b16 %v283
      %v796 = vunpack.c.l.b16 %v284
      %v797 = vunpack.c.l.b16 %v285
      %v798 = vunpack.c.l.b16 %v286
      %v799 = vunpack.c.l.b16 %v287
      %v800 = vunpack.c.l.b16 %v288
      %v801 = vunpack.c.l.b16 %v289
      %v802 = vunpack.c.l.b16 %v290
      %v803 = vunpack.c.l.b16 %v291
      %v804 = vunpack.c.l.b16 %v292
      %v805 = vunpack.c.l.b16 %v293
      %v806 = vunpack.c.l.b16 %v294
      %v807 = vunpack.c.l.b16 %v295
      %v808 = vunpack.c.l.b16 %v296
      %v809 = vunpack.c.l.b16 %v297
      %v810 = vunpack.c.l.b16 %v298
      %v811 = vunpack.c.l.b16 %v299
      %v812 = vunpack.c.l.b16 %v300
      %v813 = vunpack.c.l.b16 %v301
      %v814 = vunpack.c.l.b16 %v302
      %v815 = vunpack.c.l.b16 %v303
      %v816 = vunpack.c.l.b16 %v304
      %v817 = vunpack.c.l.b16 %v305
      %v818 = vunpack.c.l.b16 %v306
      %v819 = vunpack.c.l.b16 %v307
      %v820 = vunpack.c.l.b16 %v308
      %v821 = vunpack.c.l.b16 %v309
      %v822 = vunpack.c.l.b16 %v310
      %v823 = vunpack.c.l.b16 %v311
      %v824 = vunpack.c.l.b16 %v312
      %v825 = vunpack.c.l.b16 %v313
      %v826 = vunpack.c.l.b16 %v314
      %v827 = vunpack.c.l.b16 %v315
      %v828 = vunpack.c.l.b16 %v316
      %v829 = vunpack.c.l.b16 %v317
      %v830 = vunpack.c.l.b16 %v318
      %v831 = vunpack.c.l.b16 %v319
      %v832 = vunpack.c.l.b16 %v320
      %v833 = vunpack.c.l.b16 %v321
      %v834 = vunpack.c.l.b16 %v322
      %v835 = vunpack.c.l.b16 %v323
      %v836 = vunpack.c.l.b16 %v324
      %v837 = vunpack.c.l.b16 %v325
      %v838 = vunpack.c.l.b16 %v326
      %v839 = vunpack.c.l.b16 %v327
      %v840 = vunpack.c.l.b16 %v328
      %v841 = vunpack.c.l.b16 %v329
      %v842 = vunpack.c.l.b16 %v330
      %v843 = vunpack.c.l.b16 %v331
      %v844 = vunpack.c.l.b16 %v332
      %v845 = vunpack.c.l.b16 %v333
      %v846 = vunpack.c.l.b16 %v334
      %v847 = vunpack.c.l.b16 %v335
      %v848 = vunpack.c.l.b16 %v336
      %v849 = vunpack.c.l.b16 %v337
      %v850 = vunpack.c.l.b16 %v338
      %v851 = vunpack.c.l.b16 %v339
      %v852 = vunpack.c.l.b16 %v340
      %v853 = vunpack.c.l.b16 %v341
      %v854 = vunpack.c.l.b16 %v342
      %v855 = vunpack.c.l.b16 %v343
      %v856 = vunpack.c.l.b16 %v344
      %v857 = vunpack.c.l.b16 %v345
      %v858 = vunpack.c.l.b16 %v346
      %v859 = vunpack.c.l.b16 %v347
      %v860 = vunpack.c.l.b16 %v348
      %v861 = vunpack.c.l.b16 %v349
      %v862 = vunpack.c.l.b16 %v350
      %v863 = vunpack.c.l.b16 %v351
      %v864 = vunpack.c.l.b16 %v352
      %v865 = vunpack.c.l.b16 %v353
      %v866 = vpack.c.b16 %v755, %v754
      %v867 = vpack.c.b16 %v757, %v756
      %v868 = vpack.c.b16 %v759, %v758
      %v869 = vpack.c.b16 %v761, %v760
      %v870 = vpack.c.b16 %v763, %v762
      %v871 = vpack.c.b16 %v765, %v764
      %v872 = vpack.c.b16 %v767, %v766
      %v873 = vpack.c.b16 %v769, %v768
      %v874 = vpack.c.b16 %v771, %v770
      %v875 = vpack.c.b16 %v773, %v772
      %v876 = vpack.c.b16 %v775, %v774
      %v877 = vpack.c.b16 %v777, %v776
      %v878 = vpack.c.b16 %v779, %v778
      %v879 = vpack.c.b16 %v781, %v780
      %v880 = vpack.c.b16 %v783, %v782
      %v881 = vpack.c.b16 %v785, %v784
      %v882 = vpack.c.b16 %v787, %v786
      %v883 = vpack.c.b16 %v789, %v788
      %v884 = vpack.c.b16 %v791, %v790
      %v885 = vpack.c.b16 %v793, %v792
      %v886 = vpack.c.b16 %v795, %v794
      %v887 = vpack.c.b16 %v797, %v796
      %v888 = vpack.c.b16 %v799, %v798
      %v889 = vpack.c.b16 %v801, %v800
      %v890 = vpack.c.b16 %v803, %v802
      %v891 = vpack.c.b16 %v805, %v804
      %v892 = vpack.c.b16 %v807, %v806
      %v893 = vpack.c.b16 %v809, %v808
      %v894 = vpack.c.b16 %v811, %v810
      %v895 = vpack.c.b16 %v813, %v812
      %v896 = vpack.c.b16 %v815, %v814
      %v897 = vpack.c.b16 %v817, %v816
      %v898 = vpack.c.b16 %v819, %v818
      %v899 = vpack.c.b16 %v821, %v820
      %v900 = vpack.c.b16 %v823, %v822
      %v901 = vpack.c.b16 %v825, %v824
      %v902 = vpack.c.b16 %v827, %v826
      %v903 = vpack.c.b16 %v829, %v828
      %v904 = vpack.c.b16 %v831, %v830
      %v905 = vpack.c.b16 %v833, %v832
      %v906 = vpack.c.b16 %v835, %v834
      %v907 = vpack.c.b16 %v837, %v836
      %v908 = vpack.c.b16 %v839, %v838
      %v909 = vpack.c.b16 %v841, %v840
      %v910 = vpack.c.b16 %v843, %v842
      %v911 = vpack.c.b16 %v845, %v844
      %v912 = vpack.c.b16 %v847, %v846
      %v913 = vpack.c.b16 %v849, %v848
      %v914 = vpack.c.b16 %v851, %v850
      %v915 = vpack.c.b16 %v853, %v852
      %v916 = vpack.c.b16 %v855, %v854
      %v917 = vpack.c.b16 %v857, %v856
      %v918 = vpack.c.b16 %v859, %v858
      %v919 = vpack.c.b16 %v861, %v860
      %v920 = vpack.c.b16 %v863, %v862
      %v921 = vpack.c.b16 %v865, %v864
      %978 = vmatprep.subr.bf16.mxu0 0
      %979 = vmatpush1.bf16.msra.mxu0 %v866
      %980 = vmatprep.subr.bf16.mxu0 0
      %981 = vmatpush1.bf16.msra.mxu0 %v867
      %982 = vmatprep.subr.bf16.mxu0 0
      %983 = vmatpush1.bf16.msra.mxu0 %v868
      %984 = vmatprep.subr.bf16.mxu0 0
      %985 = vmatpush1.bf16.msra.mxu0 %v869
      %986 = vmatprep.subr.bf16.mxu0 0
      %987 = vmatpush1.bf16.msra.mxu0 %v870
      %988 = vmatprep.subr.bf16.mxu0 0
      %989 = vmatpush1.bf16.msra.mxu0 %v871
      %990 = vmatprep.subr.bf16.mxu0 0
      %991 = vmatpush1.bf16.msra.mxu0 %v872
      %992 = vmatprep.subr.bf16.mxu0 0
      %993 = vmatpush1.bf16.msra.mxu0 %v873
      %994 = vmatprep.subr.bf16.mxu0 0
      %995 = vmatpush1.bf16.msra.mxu0 %v874
      %996 = vmatprep.subr.bf16.mxu0 0
      %997 = vmatpush1.bf16.msra.mxu0 %v875
      %998 = vmatprep.subr.bf16.mxu0 0
      %999 = vmatpush1.bf16.msra.mxu0 %v876
      %1000 = vmatprep.subr.bf16.mxu0 0
      %1001 = vmatpush1.bf16.msra.mxu0 %v877
      %1002 = vmatprep.subr.bf16.mxu0 0
      %1003 = vmatpush1.bf16.msra.mxu0 %v878
      %1004 = vmatprep.subr.bf16.mxu0 0
      %1005 = vmatpush1.bf16.msra.mxu0 %v879
      %1006 = vmatprep.subr.bf16.mxu0 0
      %1007 = vmatpush1.bf16.msra.mxu0 %v880
      %1008 = vmatprep.subr.bf16.mxu0 0
      %1009 = vmatpush1.bf16.msra.mxu0 %v881
      %1010 = vmatprep.mubr.bf16.mxu0 %v531
      %1011 = vmatmul.mubr.bf16.gmra.mrb[0].mxu0 %v530
      %v1012 = vpop.f32.mrb[0].mxu0
      %v1013 = vadd.f32 0.0, %v1012
      %v1014 = vpop.f32.mrb[0].mxu0
      %v1015 = vpop.f32.mrb[0].mxu0
      %v1016 = vadd.f32 0.0, %v1015
      %v1017 = vpop.f32.mrb[0].mxu0
      %1018 = vmatprep.mubr.bf16.mxu0 %v538
      %1019 = vmatmul.mubr.bf16.gmra.mrb[0].mxu0 %v537
      %v1020 = vpop.f32.mrb[0].mxu0
      %v1021 = vadd.f32 0.0, %v1020
      %v1022 = vpop.f32.mrb[0].mxu0
      %v1023 = vpop.f32.mrb[0].mxu0
      %v1024 = vadd.f32 0.0, %v1023
      %v1025 = vpop.f32.mrb[0].mxu0
      %1026 = vmatprep.mubr.bf16.mxu0 %v545
      %1027 = vmatmul.mubr.bf16.gmra.mrb[0].mxu0 %v544
      %v1028 = vpop.f32.mrb[0].mxu0
      %v1029 = vadd.f32 0.0, %v1028
      %v1030 = vpop.f32.mrb[0].mxu0
      %v1031 = vpop.f32.mrb[0].mxu0
      %v1032 = vadd.f32 0.0, %v1031
      %v1033 = vpop.f32.mrb[0].mxu0
      %1034 = vmatprep.mubr.bf16.mxu0 %v552
      %1035 = vmatmul.mubr.bf16.gmra.mrb[0].mxu0 %v551
      %v1036 = vpop.f32.mrb[0].mxu0
      %v1037 = vadd.f32 0.0, %v1036
      %v1038 = vpop.f32.mrb[0].mxu0
      %v1039 = vpop.f32.mrb[0].mxu0
      %v1040 = vadd.f32 0.0, %v1039
      %v1041 = vpop.f32.mrb[0].mxu0
      %1042 = vmatprep.mubr.bf16.mxu0 %v559
      %1043 = vmatmul.mubr.bf16.gmra.mrb[0].mxu0 %v558
      %v1044 = vpop.f32.mrb[0].mxu0
      %v1045 = vadd.f32 0.0, %v1044
      %v1046 = vpop.f32.mrb[0].mxu0
      %v1047 = vpop.f32.mrb[0].mxu0
      %v1048 = vadd.f32 0.0, %v1047
      %v1049 = vpop.f32.mrb[0].mxu0
      %1050 = vmatprep.mubr.bf16.mxu0 %v566
      %1051 = vmatmul.mubr.bf16.gmra.mrb[0].mxu0 %v565
      %v1052 = vpop.f32.mrb[0].mxu0
      %v1053 = vadd.f32 0.0, %v1052
      %v1054 = vpop.f32.mrb[0].mxu0
      %v1055 = vpop.f32.mrb[0].mxu0
      %v1056 = vadd.f32 0.0, %v1055
      %v1057 = vpop.f32.mrb[0].mxu0
      %1058 = vmatprep.mubr.bf16.mxu0 %v573
      %1059 = vmatmul.mubr.bf16.gmra.mrb[0].mxu0 %v572
      %v1060 = vpop.f32.mrb[0].mxu0
      %v1061 = vadd.f32 0.0, %v1060
      %v1062 = vpop.f32.mrb[0].mxu0
      %v1063 = vpop.f32.mrb[0].mxu0
      %v1064 = vadd.f32 0.0, %v1063
      %v1065 = vpop.f32.mrb[0].mxu0
      %1066 = vmatprep.mubr.bf16.mxu0 %v580
      %1067 = vmatmul.mubr.bf16.gmra.mrb[0].mxu0 %v579
      %v1068 = vpop.f32.mrb[0].mxu0
      %v1069 = vadd.f32 0.0, %v1068
      %v1070 = vpop.f32.mrb[0].mxu0
      %v1071 = vpop.f32.mrb[0].mxu0
      %v1072 = vadd.f32 0.0, %v1071
      %v1073 = vpop.f32.mrb[0].mxu0
      %1074 = vdwg.mxu0
      %1075 = vmatprep.subr.bf16.mxu0 0
      %1076 = vmatpush1.bf16.msra.mxu0 %v882
      %1077 = vmatprep.subr.bf16.mxu0 0
      %1078 = vmatpush1.bf16.msra.mxu0 %v883
      %1079 = vmatprep.subr.bf16.mxu0 0
      %1080 = vmatpush1.bf16.msra.mxu0 %v884
      %1081 = vmatprep.subr.bf16.mxu0 0
      %1082 = vmatpush1.bf16.msra.mxu0 %v885
      %1083 = vmatprep.subr.bf16.mxu0 0
      %1084 = vmatpush1.bf16.msra.mxu0 %v886
      %1085 = vmatprep.subr.bf16.mxu0 0
      %1086 = vmatpush1.bf16.msra.mxu0 %v887
      %1087 = vmatprep.subr.bf16.mxu0 0
      %1088 = vmatpush1.bf16.msra.mxu0 %v888
      %1089 = vmatprep.subr.bf16.mxu0 0
      %1090 = vmatpush1.bf16.msra.mxu0 %v889
      %1091 = vmatprep.subr.bf16.mxu0 0
      %1092 = vmatpush1.bf16.msra.mxu0 %v890
      %1093 = vmatprep.subr.bf16.mxu0 0
      %1094 = vmatpush1.bf16.msra.mxu0 %v891
      %1095 = vmatprep.subr.bf16.mxu0 0
      %1096 = vmatpush1.bf16.msra.mxu0 %v892
      %1097 = vmatprep.subr.bf16.mxu0 0
      %1098 = vmatpush1.bf16.msra.mxu0 %v893
      %1099 = vmatprep.subr.bf16.mxu0 0
      %1100 = vmatpush1.bf16.msra.mxu0 %v894
      %1101 = vmatprep.subr.bf16.mxu0 0
      %1102 = vmatpush1.bf16.msra.mxu0 %v895
      %1103 = vmatprep.subr.bf16.mxu0 0
      %1104 = vmatpush1.bf16.msra.mxu0 %v896
      %1105 = vmatprep.subr.bf16.mxu0 0
      %1106 = vmatpush1.bf16.msra.mxu0 %v897
      %1107 = vmatprep.mubr.bf16.mxu0 %v533
      %1108 = vmatmul.mubr.bf16.gmra.mrb[0].mxu0 %v532
      %v1109 = vpop.f32.mrb[0].mxu0
      %v1110 = vadd.f32 %v1013, %v1109
      %v1111 = vpop.f32.mrb[0].mxu0
      %v1112 = vpop.f32.mrb[0].mxu0
      %v1113 = vadd.f32 %v1016, %v1112
      %v1114 = vpop.f32.mrb[0].mxu0
      %1115 = vmatprep.mubr.bf16.mxu0 %v540
      %1116 = vmatmul.mubr.bf16.gmra.mrb[0].mxu0 %v539
      %v1117 = vpop.f32.mrb[0].mxu0
      %v1118 = vadd.f32 %v1021, %v1117
      %v1119 = vpop.f32.mrb[0].mxu0
      %v1120 = vpop.f32.mrb[0].mxu0
      %v1121 = vadd.f32 %v1024, %v1120
      %v1122 = vpop.f32.mrb[0].mxu0
      %1123 = vmatprep.mubr.bf16.mxu0 %v547
      %1124 = vmatmul.mubr.bf16.gmra.mrb[0].mxu0 %v546
      %v1125 = vpop.f32.mrb[0].mxu0
      %v1126 = vadd.f32 %v1029, %v1125
      %v1127 = vpop.f32.mrb[0].mxu0
      %v1128 = vpop.f32.mrb[0].mxu0
      %v1129 = vadd.f32 %v1032, %v1128
      %v1130 = vpop.f32.mrb[0].mxu0
      %1131 = vmatprep.mubr.bf16.mxu0 %v554
      %1132 = vmatmul.mubr.bf16.gmra.mrb[0].mxu0 %v553
      %v1133 = vpop.f32.mrb[0].mxu0
      %v1134 = vadd.f32 %v1037, %v1133
      %v1135 = vpop.f32.mrb[0].mxu0
      %v1136 = vpop.f32.mrb[0].mxu0
      %v1137 = vadd.f32 %v1040, %v1136
      %v1138 = vpop.f32.mrb[0].mxu0
      %1139 = vmatprep.mubr.bf16.mxu0 %v561
      %1140 = vmatmul.mubr.bf16.gmra.mrb[0].mxu0 %v560
      %v1141 = vpop.f32.mrb[0].mxu0
      %v1142 = vadd.f32 %v1045, %v1141
      %v1143 = vpop.f32.mrb[0].mxu0
      %v1144 = vpop.f32.mrb[0].mxu0
      %v1145 = vadd.f32 %v1048, %v1144
      %v1146 = vpop.f32.mrb[0].mxu0
      %1147 = vmatprep.mubr.bf16.mxu0 %v568
      %1148 = vmatmul.mubr.bf16.gmra.mrb[0].mxu0 %v567
      %v1149 = vpop.f32.mrb[0].mxu0
      %v1150 = vadd.f32 %v1053, %v1149
      %v1151 = vpop.f32.mrb[0].mxu0
      %v1152 = vpop.f32.mrb[0].mxu0
      %v1153 = vadd.f32 %v1056, %v1152
      %v1154 = vpop.f32.mrb[0].mxu0
      %1155 = vmatprep.mubr.bf16.mxu0 %v575
      %1156 = vmatmul.mubr.bf16.gmra.mrb[0].mxu0 %v574
      %v1157 = vpop.f32.mrb[0].mxu0
      %v1158 = vadd.f32 %v1061, %v1157
      %v1159 = vpop.f32.mrb[0].mxu0
      %v1160 = vpop.f32.mrb[0].mxu0
      %v1161 = vadd.f32 %v1064, %v1160
      %v1162 = vpop.f32.mrb[0].mxu0
      %1163 = vmatprep.mubr.bf16.mxu0 %v582
      %1164 = vmatmul.mubr.bf16.gmra.mrb[0].mxu0 %v581
      %v1165 = vpop.f32.mrb[0].mxu0
      %v1166 = vadd.f32 %v1069, %v1165
      %v1167 = vpop.f32.mrb[0].mxu0
      %v1168 = vpop.f32.mrb[0].mxu0
      %v1169 = vadd.f32 %v1072, %v1168
      %v1170 = vpop.f32.mrb[0].mxu0
      %1171 = vdwg.mxu0
      %1172 = vmatprep.subr.bf16.mxu0 0
      %1173 = vmatpush1.bf16.msra.mxu0 %v898
      %1174 = vmatprep.subr.bf16.mxu0 0
      %1175 = vmatpush1.bf16.msra.mxu0 %v899
      %1176 = vmatprep.subr.bf16.mxu0 0
      %1177 = vmatpush1.bf16.msra.mxu0 %v900
      %1178 = vmatprep.subr.bf16.mxu0 0
      %1179 = vmatpush1.bf16.msra.mxu0 %v901
      %1180 = vmatprep.subr.bf16.mxu0 0
      %1181 = vmatpush1.bf16.msra.mxu0 %v902
      %1182 = vmatprep.subr.bf16.mxu0 0
      %1183 = vmatpush1.bf16.msra.mxu0 %v903
      %1184 = vmatprep.subr.bf16.mxu0 0
      %1185 = vmatpush1.bf16.msra.mxu0 %v904
      %1186 = vmatprep.subr.bf16.mxu0 0
      %1187 = vmatpush1.bf16.msra.mxu0 %v905
      %1188 = vmatprep.subr.bf16.mxu0 0
      %1189 = vmatpush1.bf16.msra.mxu0 %v906
      %1190 = vmatprep.subr.bf16.mxu0 0
      %1191 = vmatpush1.bf16.msra.mxu0 %v907
      %1192 = vmatprep.subr.bf16.mxu0 0
      %1193 = vmatpush1.bf16.msra.mxu0 %v908
      %1194 = vmatprep.subr.bf16.mxu0 0
      %1195 = vmatpush1.bf16.msra.mxu0 %v909
      %1196 = vmatprep.subr.bf16.mxu0 0
      %1197 = vmatpush1.bf16.msra.mxu0 %v910
      %1198 = vmatprep.subr.bf16.mxu0 0
      %1199 = vmatpush1.bf16.msra.mxu0 %v911
      %1200 = vmatprep.subr.bf16.mxu0 0
      %1201 = vmatpush1.bf16.msra.mxu0 %v912
      %1202 = vmatprep.subr.bf16.mxu0 0
      %1203 = vmatpush1.bf16.msra.mxu0 %v913
      %1204 = vmatprep.mubr.bf16.mxu0 %v535
      %1205 = vmatmul.mubr.bf16.gmra.mrb[0].mxu0 %v534
      %v1206 = vpop.f32.mrb[0].mxu0
      %v1207 = vadd.f32 %v1110, %v1206
      %v1208 = vpop.f32.mrb[0].mxu0
      %v1209 = vpop.f32.mrb[0].mxu0
      %v1210 = vadd.f32 %v1113, %v1209
      %v1211 = vpop.f32.mrb[0].mxu0
      %1212 = vmatprep.mubr.bf16.mxu0 %v542
      %1213 = vmatmul.mubr.bf16.gmra.mrb[0].mxu0 %v541
      %v1214 = vpop.f32.mrb[0].mxu0
      %v1215 = vadd.f32 %v1118, %v1214
      %v1216 = vpop.f32.mrb[0].mxu0
      %v1217 = vpop.f32.mrb[0].mxu0
      %v1218 = vadd.f32 %v1121, %v1217
      %v1219 = vpop.f32.mrb[0].mxu0
      %1220 = vmatprep.mubr.bf16.mxu0 %v549
      %1221 = vmatmul.mubr.bf16.gmra.mrb[0].mxu0 %v548
      %v1222 = vpop.f32.mrb[0].mxu0
      %v1223 = vadd.f32 %v1126, %v1222
      %v1224 = vpop.f32.mrb[0].mxu0
      %v1225 = vpop.f32.mrb[0].mxu0
      %v1226 = vadd.f32 %v1129, %v1225
      %v1227 = vpop.f32.mrb[0].mxu0
      %1228 = vmatprep.mubr.bf16.mxu0 %v556
      %1229 = vmatmul.mubr.bf16.gmra.mrb[0].mxu0 %v555
      %v1230 = vpop.f32.mrb[0].mxu0
      %v1231 = vadd.f32 %v1134, %v1230
      %v1232 = vpop.f32.mrb[0].mxu0
      %v1233 = vpop.f32.mrb[0].mxu0
      %v1234 = vadd.f32 %v1137, %v1233
      %v1235 = vpop.f32.mrb[0].mxu0
      %1236 = vmatprep.mubr.bf16.mxu0 %v563
      %1237 = vmatmul.mubr.bf16.gmra.mrb[0].mxu0 %v562
      %v1238 = vpop.f32.mrb[0].mxu0
      %v1239 = vadd.f32 %v1142, %v1238
      %v1240 = vpop.f32.mrb[0].mxu0
      %v1241 = vpop.f32.mrb[0].mxu0
      %v1242 = vadd.f32 %v1145, %v1241
      %v1243 = vpop.f32.mrb[0].mxu0
      %1244 = vmatprep.mubr.bf16.mxu0 %v570
      %1245 = vmatmul.mubr.bf16.gmra.mrb[0].mxu0 %v569
      %v1246 = vpop.f32.mrb[0].mxu0
      %v1247 = vadd.f32 %v1150, %v1246
      %v1248 = vpop.f32.mrb[0].mxu0
      %v1249 = vpop.f32.mrb[0].mxu0
      %v1250 = vadd.f32 %v1153, %v1249
      %v1251 = vpop.f32.mrb[0].mxu0
      %1252 = vmatprep.mubr.bf16.mxu0 %v577
      %1253 = vmatmul.mubr.bf16.gmra.mrb[0].mxu0 %v576
      %v1254 = vpop.f32.mrb[0].mxu0
      %v1255 = vadd.f32 %v1158, %v1254
      %v1256 = vpop.f32.mrb[0].mxu0
      %v1257 = vpop.f32.mrb[0].mxu0
      %v1258 = vadd.f32 %v1161, %v1257
      %v1259 = vpop.f32.mrb[0].mxu0
      %1260 = vmatprep.mubr.bf16.mxu0 %v584
      %1261 = vmatmul.mubr.bf16.gmra.mrb[0].mxu0 %v583
      %v1262 = vpop.f32.mrb[0].mxu0
      %v1263 = vadd.f32 %v1166, %v1262
      %v1264 = vpop.f32.mrb[0].mxu0
      %v1265 = vpop.f32.mrb[0].mxu0
      %v1266 = vadd.f32 %v1169, %v1265
      %v1267 = vpop.f32.mrb[0].mxu0
      %1268 = vdwg.mxu0
      %1269 = vmatprep.subr.bf16.mxu0 0
      %1270 = vmatpush1.bf16.msra.mxu0 %v914
      %1271 = vmatprep.subr.bf16.mxu0 0
      %1272 = vmatpush1.bf16.msra.mxu0 %v915
      %1273 = vmatprep.subr.bf16.mxu0 0
      %1274 = vmatpush1.bf16.msra.mxu0 %v916
      %1275 = vmatprep.subr.bf16.mxu0 0
      %1276 = vmatpush1.bf16.msra.mxu0 %v917
      %1277 = vmatprep.subr.bf16.mxu0 0
      %1278 = vmatpush1.bf16.msra.mxu0 %v918
      %1279 = vmatprep.subr.bf16.mxu0 0
      %1280 = vmatpush1.bf16.msra.mxu0 %v919
      %1281 = vmatprep.subr.bf16.mxu0 0
      %1282 = vmatpush1.bf16.msra.mxu0 %v920
      %1283 = vmatprep.subr.bf16.mxu0 0
      %1284 = vmatpush1.bf16.msra.mxu0 %v921
      %1285 = vmatprep.subr.bf16.mxu0 0
      %1286 = vmatpush1.bf16.msra.mxu0 0
      %1287 = vmatprep.subr.bf16.mxu0 0
      %1288 = vmatpush1.bf16.msra.mxu0 0
      %1289 = vmatprep.subr.bf16.mxu0 0
      %1290 = vmatpush1.bf16.msra.mxu0 0
      %1291 = vmatprep.subr.bf16.mxu0 0
      %1292 = vmatpush1.bf16.msra.mxu0 0
      %1293 = vmatprep.subr.bf16.mxu0 0
      %1294 = vmatpush1.bf16.msra.mxu0 0
      %1295 = vmatprep.subr.bf16.mxu0 0
      %1296 = vmatpush1.bf16.msra.mxu0 0
      %1297 = vmatprep.subr.bf16.mxu0 0
      %1298 = vmatpush1.bf16.msra.mxu0 0
      %1299 = vmatprep.subr.bf16.mxu0 0
      %1300 = vmatpush1.bf16.msra.mxu0 0
      %1301 = vmatprep.mubr.bf16.mxu0 0
      %1302 = vmatmul.mubr.bf16.gmra.mrb[0].mxu0 %v536
      %v1303 = vpop.f32.mrb[0].mxu0
      %v1304 = vadd.f32 %v1207, %v1303
      %v1305 = vpop.f32.mrb[0].mxu0
      %v1306 = vpop.f32.mrb[0].mxu0
      %v1307 = vadd.f32 %v1210, %v1306
      %v1308 = vpop.f32.mrb[0].mxu0
      %1309 = vmatprep.mubr.bf16.mxu0 0
      %1310 = vmatmul.mubr.bf16.gmra.mrb[0].mxu0 %v543
      %v1311 = vpop.f32.mrb[0].mxu0
      %v1312 = vadd.f32 %v1215, %v1311
      %v1313 = vpop.f32.mrb[0].mxu0
      %v1314 = vpop.f32.mrb[0].mxu0
      %v1315 = vadd.f32 %v1218, %v1314
      %v1316 = vpop.f32.mrb[0].mxu0
      %1317 = vmatprep.mubr.bf16.mxu0 0
      %1318 = vmatmul.mubr.bf16.gmra.mrb[0].mxu0 %v550
      %v1319 = vpop.f32.mrb[0].mxu0
      %v1320 = vadd.f32 %v1223, %v1319
      %v1321 = vpop.f32.mrb[0].mxu0
      %v1322 = vpop.f32.mrb[0].mxu0
      %v1323 = vadd.f32 %v1226, %v1322
      %v1324 = vpop.f32.mrb[0].mxu0
      %1325 = vmatprep.mubr.bf16.mxu0 0
      %1326 = vmatmul.mubr.bf16.gmra.mrb[0].mxu0 %v557
      %v1327 = vpop.f32.mrb[0].mxu0
      %v1328 = vadd.f32 %v1231, %v1327
      %v1329 = vpop.f32.mrb[0].mxu0
      %v1330 = vpop.f32.mrb[0].mxu0
      %v1331 = vadd.f32 %v1234, %v1330
      %v1332 = vpop.f32.mrb[0].mxu0
      %1333 = vmatprep.mubr.bf16.mxu0 0
      %1334 = vmatmul.mubr.bf16.gmra.mrb[0].mxu0 %v564
      %v1335 = vpop.f32.mrb[0].mxu0
      %v1336 = vadd.f32 %v1239, %v1335
      %v1337 = vpop.f32.mrb[0].mxu0
      %v1338 = vpop.f32.mrb[0].mxu0
      %v1339 = vadd.f32 %v1242, %v1338
      %v1340 = vpop.f32.mrb[0].mxu0
      %1341 = vmatprep.mubr.bf16.mxu0 0
      %1342 = vmatmul.mubr.bf16.gmra.mrb[0].mxu0 %v571
      %v1343 = vpop.f32.mrb[0].mxu0
      %v1344 = vadd.f32 %v1247, %v1343
      %v1345 = vpop.f32.mrb[0].mxu0
      %v1346 = vpop.f32.mrb[0].mxu0
      %v1347 = vadd.f32 %v1250, %v1346
      %v1348 = vpop.f32.mrb[0].mxu0
      %1349 = vmatprep.mubr.bf16.mxu0 0
      %1350 = vmatmul.mubr.bf16.gmra.mrb[0].mxu0 %v578
      %v1351 = vpop.f32.mrb[0].mxu0
      %v1352 = vadd.f32 %v1255, %v1351
      %v1353 = vpop.f32.mrb[0].mxu0
      %v1354 = vpop.f32.mrb[0].mxu0
      %v1355 = vadd.f32 %v1258, %v1354
      %v1356 = vpop.f32.mrb[0].mxu0
      %1357 = vmatprep.mubr.bf16.mxu0 0
      %1358 = vmatmul.mubr.bf16.gmra.mrb[0].mxu0 %v585
      %v1359 = vpop.f32.mrb[0].mxu0
      %v1360 = vadd.f32 %v1263, %v1359
      %v1361 = vpop.f32.mrb[0].mxu0
      %v1362 = vpop.f32.mrb[0].mxu0
      %v1363 = vadd.f32 %v1266, %v1362
      %v1364 = vpop.f32.mrb[0].mxu0
      %1365 = vdwg.mxu0
      %1366 = vst [vmem:[#allocation2] sm:$0xff] %v1304
      %1367 = vst [vmem:[#allocation2 + $0x8] sm:$0xff] %v1307
      %1368 = vst [vmem:[#allocation2 + $0x10] sm:$0xff] %v1312
      %1369 = vst [vmem:[#allocation2 + $0x18] sm:$0xff] %v1315
      %1370 = vst [vmem:[#allocation2 + $0x20] sm:$0xff] %v1320
      %1371 = vst [vmem:[#allocation2 + $0x28] sm:$0xff] %v1323
      %1372 = vst [vmem:[#allocation2 + $0x30] sm:$0xff] %v1328
      %1373 = vst [vmem:[#allocation2 + $0x38] sm:$0xff] %v1331
      %1374 = vst [vmem:[#allocation2 + $0x40] sm:$0xff] %v1336
      %1375 = vst [vmem:[#allocation2 + $0x48] sm:$0xff] %v1339
      %1376 = vst [vmem:[#allocation2 + $0x50] sm:$0xff] %v1344
      %1377 = vst [vmem:[#allocation2 + $0x58] sm:$0xff] %v1347
      %1378 = vst [vmem:[#allocation2 + $0x60] sm:$0xff] %v1352
      %1379 = vst [vmem:[#allocation2 + $0x68] sm:$0xff] %v1355
      %1380 = vst [vmem:[#allocation2 + $0x70] sm:$0xff] %v1360
      %1381 = vst [vmem:[#allocation2 + $0x78] sm:$0xff] %v1363
      %v1382 = vld [vmem:[#allocation2] sm:$0xff]
      %v1383 = vld [vmem:[#allocation2 + $0x8] sm:$0xff]
      %v1384 = vld [vmem:[#allocation2 + $0x10] sm:$0xff]
      %v1385 = vld [vmem:[#allocation2 + $0x18] sm:$0xff]
      %v1386 = vld [vmem:[#allocation2 + $0x20] sm:$0xff]
      %v1387 = vld [vmem:[#allocation2 + $0x28] sm:$0xff]
      %v1388 = vld [vmem:[#allocation2 + $0x30] sm:$0xff]
      %v1389 = vld [vmem:[#allocation2 + $0x38] sm:$0xff]
      %v1390 = vld [vmem:[#allocation2 + $0x40] sm:$0xff]
      %v1391 = vld [vmem:[#allocation2 + $0x48] sm:$0xff]
      %v1392 = vld [vmem:[#allocation2 + $0x50] sm:$0xff]
      %v1393 = vld [vmem:[#allocation2 + $0x58] sm:$0xff]
      %v1394 = vld [vmem:[#allocation2 + $0x60] sm:$0xff]
      %v1395 = vld [vmem:[#allocation2 + $0x68] sm:$0xff]
      %v1396 = vld [vmem:[#allocation2 + $0x70] sm:$0xff]
      %v1397 = vld [vmem:[#allocation2 + $0x78] sm:$0xff]
      %v1398 = vmax.f32 %v1382, %v1386
      %v1399 = vmax.f32 %v1383, %v1387
      %v1400 = vmax.f32 %v1384, %v1388
      %v1401 = vmax.f32 %v1385, %v1389
      %v1402 = vmax.f32 %v1390, %v1394
      %v1403 = vmax.f32 %v1391, %v1395
      %v1404 = vmax.f32 %v1392, %v1396
      %v1405 = vmax.f32 %v1393, %v1397
      %v1406 = vmax.f32 %v1398, %v1402
      %v1407 = vmax.f32 %v1399, %v1403
      %v1408 = vmax.f32 %v1400, %v1404
      %v1409 = vmax.f32 %v1401, %v1405
      %v1410 = vld [vmem:[%s2] sm:$0x1]
      %v1412 = vlaneseq
      %v1413 = vshrl.u32 %v1412, 7
      %v1414 = vsub.s32 0, %v1413
      %v1415 = vrot.slane %v1410, %v1414
      %v1417 = vadd.f32 %v1406, %v1415
      %v1418 = vadd.f32 %v1407, %v1415
      %v1419 = vadd.f32 %v1408, %v1415
      %v1420 = vadd.f32 %v1409, %v1415
      %v1421 = vmax.f32 %v1417, 0.0
      %v1422 = vmax.f32 %v1418, 0.0
      %v1423 = vmax.f32 %v1419, 0.0
      %v1424 = vmax.f32 %v1420, 0.0
      %v1425 = vpack.c.bf16 %v1422, %v1421
      %v1426 = vpack.c.bf16 %v1424, %v1423
      %v1429 = vunpack.c.l.b16 %v1425
      %v1430 = vunpack.c.h.b16 %v1425
      %v1431 = vunpack.c.l.b16 %v1426
      %v1432 = vunpack.c.h.b16 %v1426
      %v1433 = vpack.c.b16 %v1429, %v1429
      %v1434 = vpack.c.b16 %v1430, %v1430
      %v1435 = vpack.c.b16 %v1431, %v1431
      %v1436 = vpack.c.b16 %v1432, %v1432
      %1441 = vst [vmem:[%s175] sm:$0xf] %v1433
      %1442 = vst [vmem:[%s175 + $0x4] sm:$0xf] %v1434
      %1443 = vst [vmem:[%s175 + $0x8] sm:$0xf] %v1435
      %1444 = vst [vmem:[%s175 + $0xc] sm:$0xf] %v1436
      %s1445 = smul.u32 4, %s14
      %p1446 = scmp.lt.s32.totalorder %s1445, 7
      %s1447 = scalar_select %p1446, %s1445, 7
      %s1448 = smul.addr %s1447, 4
      %s1449 = scalar_lea.vmem %s3, %s1448
      // Predicated region
      $region33: #{net_forward.4} parent=31 // pred_check
        %p1450 = pneg %p100
      $region34: #{net_forward.4} parent=31 // pred_check_branch
        %1452 = sbr.rel (%p1450) target = $region36
      $region35: #{net_forward.4} parent=31 // pred_region
        %s1453 = smul.u32 4, %s14
      $region36: #{net_forward.4} parent=31 // pred_fallthru
        _
    $region32: #{net_forward.4} parent=5 // pred_fallthru
      _
    %p1454 = scmp.le.s32.totalorder 2, %s9
    // Predicated region
    $region37: #{net_forward.4} parent=5 // pred_check
      %p1455 = pneg %p1454
    $region38: #{net_forward.4} parent=5 // pred_check_branch
      %1457 = sbr.rel (%p1455) target = $region40
    $region39: #{net_forward.4} parent=5 // pred_region
      %s1458 = ssub.s32 %s9, 2
      // Predicated region
      $region41: #{net_forward.4} parent=39 // pred_check
        %p1459 = pneg %p106
      $region42: #{net_forward.4} parent=39 // pred_check_branch
        %1461 = sbr.rel (%p1459) target = $region44
      $region43: #{net_forward.4} parent=39 // pred_region
        %s1462 = smul.u32 4, %s15
        %p1463 = scmp.lt.s32.totalorder %s1462, 7
        %s1464 = scalar_select %p1463, %s1462, 7
        %s1465 = smul.addr %s1464, 4
        %s1466 = scalar_lea.vmem %s3, %s1465
      $region44: #{net_forward.4} parent=39 // pred_fallthru
        _
    $region40: #{net_forward.4} parent=5 // pred_fallthru
      _
  $region6: #{net_forward.4} parent=0 // loop_footer
    %s13 = sadd.s32 1, %s9
  $region7: #{net_forward.4} parent=0 // loop_footer_branch
    %8 = sbr.rel target = $region3
  $region8: #{net_forward.4} parent=0 // loop_exit
    _

// kernel: net_forward.5
$region0: #{net_forward.5}
  #allocation0 [shape = 'u32[]', space=smem, size = 0x4, offset = 0x4, fixed_abs, tag = 'smem constant byte address 0x4 - core index']
  #allocation1 [shape = 'u32[144,128]{1,0:T(1,128)}', space=vmem, size = 0x12000, scoped, tag = 'internal scratch']
  %s0 = inlined_call_operand.vmem [shape: bf16[2,512], index: 0, kind: input, shape index: {}]
  %s1 = inlined_call_operand.vmem [shape: bf16[512,128], index: 1, kind: input, shape index: {}]
  %s2 = inlined_call_operand.vmem [shape: f32[1,128], index: 2, kind: input, shape index: {}]
  %s3 = inlined_call_operand.vmem [shape: bf16[128,128], index: 3, kind: input, shape index: {}]
  %s4 = inlined_call_operand.vmem [shape: f32[1,128], index: 4, kind: input, shape index: {}]
  %s5 = inlined_call_operand.vmem [shape: bf16[128,128], index: 5, kind: input, shape index: {}]
  %s6 = inlined_call_operand.vmem [shape: f32[1,128], index: 6, kind: input, shape index: {}]
  %s7 = inlined_call_operand.hbm [shape: f32[2,128], index: 7, kind: output, shape index: {}]
  %s8 = sld [smem:[#allocation0]]
  $region38: #{net_forward.5} parent=0
    _
  %s10 = ssub.s32 1, %s8
  %s11 = scalar_select 0, %s10, %s8
  $region1: #{net_forward.5} parent=0
    #allocation2 [shape = 'u8[1024]{0}', space=vmem, size = 0x400, scoped, tag = 'output window, operand 0, single buffered']
    #allocation3 [shape = 's32[1]{0}', space=sflag, size = 0x4, scoped, tag = 'scoped memory for net_forward.5']
    %12 = vsyncpa [#allocation3], 0
    // Predicated region
    $region2: #{net_forward.5} parent=1 // pred_check
      _
    $region3: #{net_forward.5} parent=1 // pred_check_branch
      %14 = sbr.rel (0) target = $region5
    $region4: #{net_forward.5} parent=1 // pred_region
      _
    $region5: #{net_forward.5} parent=1 // pred_fallthru
      _
    // Predicated region
    $region6: #{net_forward.5} parent=1 // pred_check
      _
    $region7: #{net_forward.5} parent=1 // pred_check_branch
      %16 = sbr.rel (0) target = $region9
    $region8: #{net_forward.5} parent=1 // pred_region
      _
    $region9: #{net_forward.5} parent=1 // pred_fallthru
      _
    // Predicated region
    $region10: #{net_forward.5} parent=1 // pred_check
      _
    $region11: #{net_forward.5} parent=1 // pred_check_branch
      %18 = sbr.rel (0) target = $region13
    $region12: #{net_forward.5} parent=1 // pred_region
      _
    $region13: #{net_forward.5} parent=1 // pred_fallthru
      _
    // Predicated region
    $region14: #{net_forward.5} parent=1 // pred_check
      _
    $region15: #{net_forward.5} parent=1 // pred_check_branch
      %20 = sbr.rel (0) target = $region17
    $region16: #{net_forward.5} parent=1 // pred_region
      _
    $region17: #{net_forward.5} parent=1 // pred_fallthru
      _
    // Predicated region
    $region18: #{net_forward.5} parent=1 // pred_check
      _
    $region19: #{net_forward.5} parent=1 // pred_check_branch
      %22 = sbr.rel (0) target = $region21
    $region20: #{net_forward.5} parent=1 // pred_region
      _
    $region21: #{net_forward.5} parent=1 // pred_fallthru
      _
    // Predicated region
    $region22: #{net_forward.5} parent=1 // pred_check
      _
    $region23: #{net_forward.5} parent=1 // pred_check_branch
      %24 = sbr.rel (0) target = $region25
    $region24: #{net_forward.5} parent=1 // pred_region
      _
    $region25: #{net_forward.5} parent=1 // pred_fallthru
      _
    // Predicated region
    $region26: #{net_forward.5} parent=1 // pred_check
      _
    $region27: #{net_forward.5} parent=1 // pred_check_branch
      %26 = sbr.rel (0) target = $region29
    $region28: #{net_forward.5} parent=1 // pred_region
      _
    $region29: #{net_forward.5} parent=1 // pred_fallthru
      _
    %v28 = vld [vmem:[%s0] sm:$0xf]
    %v29 = vld [vmem:[%s1] sm:$0xf]
    %v30 = vld [vmem:[%s1 + $0x4] sm:$0xf]
    %v31 = vld [vmem:[%s1 + $0x8] sm:$0xf]
    %v32 = vld [vmem:[%s1 + $0xc] sm:$0xf]
    %v33 = vld [vmem:[%s1 + $0x10] sm:$0xf]
    %v34 = vld [vmem:[%s1 + $0x14] sm:$0xf]
    %v35 = vld [vmem:[%s1 + $0x18] sm:$0xf]
    %v36 = vld [vmem:[%s1 + $0x1c] sm:$0xf]
    %v37 = vld [vmem:[%s1 + $0x20] sm:$0xf]
    %v38 = vld [vmem:[%s1 + $0x24] sm:$0xf]
    %v39 = vld [vmem:[%s1 + $0x28] sm:$0xf]
    %v40 = vld [vmem:[%s1 + $0x2c] sm:$0xf]
    %v41 = vld [vmem:[%s1 + $0x30] sm:$0xf]
    %v42 = vld [vmem:[%s1 + $0x34] sm:$0xf]
    %v43 = vld [vmem:[%s1 + $0x38] sm:$0xf]
    %v44 = vld [vmem:[%s1 + $0x3c] sm:$0xf]
    %v45 = vld [vmem:[%s1 + $0x40] sm:$0xf]
    %v46 = vld [vmem:[%s1 + $0x44] sm:$0xf]
    %v47 = vld [vmem:[%s1 + $0x48] sm:$0xf]
    %v48 = vld [vmem:[%s1 + $0x4c] sm:$0xf]
    %v49 = vld [vmem:[%s1 + $0x50] sm:$0xf]
    %v50 = vld [vmem:[%s1 + $0x54] sm:$0xf]
    %v51 = vld [vmem:[%s1 + $0x58] sm:$0xf]
    %v52 = vld [vmem:[%s1 + $0x5c] sm:$0xf]
    %v53 = vld [vmem:[%s1 + $0x60] sm:$0xf]
    %v54 = vld [vmem:[%s1 + $0x64] sm:$0xf]
    %v55 = vld [vmem:[%s1 + $0x68] sm:$0xf]
    %v56 = vld [vmem:[%s1 + $0x6c] sm:$0xf]
    %v57 = vld [vmem:[%s1 + $0x70] sm:$0xf]
    %v58 = vld [vmem:[%s1 + $0x74] sm:$0xf]
    %v59 = vld [vmem:[%s1 + $0x78] sm:$0xf]
    %v60 = vld [vmem:[%s1 + $0x7c] sm:$0xf]
    %v61 = vld [vmem:[%s1 + $0x80] sm:$0xf]
    %v62 = vld [vmem:[%s1 + $0x84] sm:$0xf]
    %v63 = vld [vmem:[%s1 + $0x88] sm:$0xf]
    %v64 = vld [vmem:[%s1 + $0x8c] sm:$0xf]
    %v65 = vld [vmem:[%s1 + $0x90] sm:$0xf]
    %v66 = vld [vmem:[%s1 + $0x94] sm:$0xf]
    %v67 = vld [vmem:[%s1 + $0x98] sm:$0xf]
    %v68 = vld [vmem:[%s1 + $0x9c] sm:$0xf]
    %v69 = vld [vmem:[%s1 + $0xa0] sm:$0xf]
    %v70 = vld [vmem:[%s1 + $0xa4] sm:$0xf]
    %v71 = vld [vmem:[%s1 + $0xa8] sm:$0xf]
    %v72 = vld [vmem:[%s1 + $0xac] sm:$0xf]
    %v73 = vld [vmem:[%s1 + $0xb0] sm:$0xf]
    %v74 = vld [vmem:[%s1 + $0xb4] sm:$0xf]
    %v75 = vld [vmem:[%s1 + $0xb8] sm:$0xf]
    %v76 = vld [vmem:[%s1 + $0xbc] sm:$0xf]
    %v77 = vld [vmem:[%s1 + $0xc0] sm:$0xf]
    %v78 = vld [vmem:[%s1 + $0xc4] sm:$0xf]
    %v79 = vld [vmem:[%s1 + $0xc8] sm:$0xf]
    %v80 = vld [vmem:[%s1 + $0xcc] sm:$0xf]
    %v81 = vld [vmem:[%s1 + $0xd0] sm:$0xf]
    %v82 = vld [vmem:[%s1 + $0xd4] sm:$0xf]
    %v83 = vld [vmem:[%s1 + $0xd8] sm:$0xf]
    %v84 = vld [vmem:[%s1 + $0xdc] sm:$0xf]
    %v85 = vld [vmem:[%s1 + $0xe0] sm:$0xf]
    %v86 = vld [vmem:[%s1 + $0xe4] sm:$0xf]
    %v87 = vld [vmem:[%s1 + $0xe8] sm:$0xf]
    %v88 = vld [vmem:[%s1 + $0xec] sm:$0xf]
    %v89 = vld [vmem:[%s1 + $0xf0] sm:$0xf]
    %v90 = vld [vmem:[%s1 + $0xf4] sm:$0xf]
    %v91 = vld [vmem:[%s1 + $0xf8] sm:$0xf]
    %v92 = vld [vmem:[%s1 + $0xfc] sm:$0xf]
    %v93 = vld [vmem:[%s2] sm:$0x1]
    %v95 = vlaneseq
    %v96 = vshrl.u32 %v95, 7
    %v97 = vsub.s32 0, %v96
    %v98 = vrot.slane %v93, %v97
    %v102 = vunpack.c.l.s4 1966171168
    %v103 = vunpack.c.0.s8 %v102
    %v104 = vlaneseq
    %v105 = vshrl.u32 %v104, 7
    %v106 = vsub.s32 %v103, %v105
    %v107 = vrot.slane %v28, %v106
    %v108 = vcombine.high %v107, %v107
    %v110 = vunpack.c.l.s4 1966171168
    %v111 = vunpack.c.0.s8 %v110
    %v112 = vlaneseq
    %v113 = vshrl.u32 %v112, 7
    %v114 = vsub.s32 %v111, %v113
    %v115 = vrot.slane %v107, %v114
    %v117 = vunpack.c.l.s4 1966171168
    %v118 = vunpack.c.0.s8 %v117
    %v119 = vlaneseq
    %v120 = vshrl.u32 %v119, 7
    %v121 = vsub.s32 %v118, %v120
    %v122 = vrot.slane %v108, %v121
    %v123 = vcombine.high %v115, %v115
    %v124 = vcombine.high %v122, %v122
    %v193 = vunpack.c.l.b16 %v29
    %v194 = vunpack.c.l.b16 %v30
    %v195 = vunpack.c.l.b16 %v31
    %v196 = vunpack.c.l.b16 %v32
    %v197 = vunpack.c.l.b16 %v33
    %v198 = vunpack.c.l.b16 %v34
    %v199 = vunpack.c.l.b16 %v35
    %v200 = vunpack.c.l.b16 %v36
    %v201 = vunpack.c.l.b16 %v37
    %v202 = vunpack.c.l.b16 %v38
    %v203 = vunpack.c.l.b16 %v39
    %v204 = vunpack.c.l.b16 %v40
    %v205 = vunpack.c.l.b16 %v41
    %v206 = vunpack.c.l.b16 %v42
    %v207 = vunpack.c.l.b16 %v43
    %v208 = vunpack.c.l.b16 %v44
    %v209 = vunpack.c.l.b16 %v45
    %v210 = vunpack.c.l.b16 %v46
    %v211 = vunpack.c.l.b16 %v47
    %v212 = vunpack.c.l.b16 %v48
    %v213 = vunpack.c.l.b16 %v49
    %v214 = vunpack.c.l.b16 %v50
    %v215 = vunpack.c.l.b16 %v51
    %v216 = vunpack.c.l.b16 %v52
    %v217 = vunpack.c.l.b16 %v53
    %v218 = vunpack.c.l.b16 %v54
    %v219 = vunpack.c.l.b16 %v55
    %v220 = vunpack.c.l.b16 %v56
    %v221 = vunpack.c.l.b16 %v57
    %v222 = vunpack.c.l.b16 %v58
    %v223 = vunpack.c.l.b16 %v59
    %v224 = vunpack.c.l.b16 %v60
    %v225 = vunpack.c.l.b16 %v61
    %v226 = vunpack.c.l.b16 %v62
    %v227 = vunpack.c.l.b16 %v63
    %v228 = vunpack.c.l.b16 %v64
    %v229 = vunpack.c.l.b16 %v65
    %v230 = vunpack.c.l.b16 %v66
    %v231 = vunpack.c.l.b16 %v67
    %v232 = vunpack.c.l.b16 %v68
    %v233 = vunpack.c.l.b16 %v69
    %v234 = vunpack.c.l.b16 %v70
    %v235 = vunpack.c.l.b16 %v71
    %v236 = vunpack.c.l.b16 %v72
    %v237 = vunpack.c.l.b16 %v73
    %v238 = vunpack.c.l.b16 %v74
    %v239 = vunpack.c.l.b16 %v75
    %v240 = vunpack.c.l.b16 %v76
    %v241 = vunpack.c.l.b16 %v77
    %v242 = vunpack.c.l.b16 %v78
    %v243 = vunpack.c.l.b16 %v79
    %v244 = vunpack.c.l.b16 %v80
    %v245 = vunpack.c.l.b16 %v81
    %v246 = vunpack.c.l.b16 %v82
    %v247 = vunpack.c.l.b16 %v83
    %v248 = vunpack.c.l.b16 %v84
    %v249 = vunpack.c.l.b16 %v85
    %v250 = vunpack.c.l.b16 %v86
    %v251 = vunpack.c.l.b16 %v87
    %v252 = vunpack.c.l.b16 %v88
    %v253 = vunpack.c.l.b16 %v89
    %v254 = vunpack.c.l.b16 %v90
    %v255 = vunpack.c.l.b16 %v91
    %v256 = vunpack.c.l.b16 %v92
    %v257 = vpack.c.b16 %v194, %v193
    %v258 = vpack.c.b16 %v196, %v195
    %v259 = vpack.c.b16 %v198, %v197
    %v260 = vpack.c.b16 %v200, %v199
    %v261 = vpack.c.b16 %v202, %v201
    %v262 = vpack.c.b16 %v204, %v203
    %v263 = vpack.c.b16 %v206, %v205
    %v264 = vpack.c.b16 %v208, %v207
    %v265 = vpack.c.b16 %v210, %v209
    %v266 = vpack.c.b16 %v212, %v211
    %v267 = vpack.c.b16 %v214, %v213
    %v268 = vpack.c.b16 %v216, %v215
    %v269 = vpack.c.b16 %v218, %v217
    %v270 = vpack.c.b16 %v220, %v219
    %v271 = vpack.c.b16 %v222, %v221
    %v272 = vpack.c.b16 %v224, %v223
    %v273 = vpack.c.b16 %v226, %v225
    %v274 = vpack.c.b16 %v228, %v227
    %v275 = vpack.c.b16 %v230, %v229
    %v276 = vpack.c.b16 %v232, %v231
    %v277 = vpack.c.b16 %v234, %v233
    %v278 = vpack.c.b16 %v236, %v235
    %v279 = vpack.c.b16 %v238, %v237
    %v280 = vpack.c.b16 %v240, %v239
    %v281 = vpack.c.b16 %v242, %v241
    %v282 = vpack.c.b16 %v244, %v243
    %v283 = vpack.c.b16 %v246, %v245
    %v284 = vpack.c.b16 %v248, %v247
    %v285 = vpack.c.b16 %v250, %v249
    %v286 = vpack.c.b16 %v252, %v251
    %v287 = vpack.c.b16 %v254, %v253
    %v288 = vpack.c.b16 %v256, %v255
    %321 = vmatprep.subr.bf16.mxu0 0
    %322 = vmatpush1.bf16.msra.mxu0 %v257
    %323 = vmatprep.subr.bf16.mxu0 0
    %324 = vmatpush1.bf16.msra.mxu0 %v258
    %325 = vmatprep.subr.bf16.mxu0 0
    %326 = vmatpush1.bf16.msra.mxu0 %v259
    %327 = vmatprep.subr.bf16.mxu0 0
    %328 = vmatpush1.bf16.msra.mxu0 %v260
    %329 = vmatprep.subr.bf16.mxu0 0
    %330 = vmatpush1.bf16.msra.mxu0 %v261
    %331 = vmatprep.subr.bf16.mxu0 0
    %332 = vmatpush1.bf16.msra.mxu0 %v262
    %333 = vmatprep.subr.bf16.mxu0 0
    %334 = vmatpush1.bf16.msra.mxu0 %v263
    %335 = vmatprep.subr.bf16.mxu0 0
    %336 = vmatpush1.bf16.msra.mxu0 %v264
    %337 = vmatprep.subr.bf16.mxu0 0
    %338 = vmatpush1.bf16.msra.mxu0 %v265
    %339 = vmatprep.subr.bf16.mxu0 0
    %340 = vmatpush1.bf16.msra.mxu0 %v266
    %341 = vmatprep.subr.bf16.mxu0 0
    %342 = vmatpush1.bf16.msra.mxu0 %v267
    %343 = vmatprep.subr.bf16.mxu0 0
    %344 = vmatpush1.bf16.msra.mxu0 %v268
    %345 = vmatprep.subr.bf16.mxu0 0
    %346 = vmatpush1.bf16.msra.mxu0 %v269
    %347 = vmatprep.subr.bf16.mxu0 0
    %348 = vmatpush1.bf16.msra.mxu0 %v270
    %349 = vmatprep.subr.bf16.mxu0 0
    %350 = vmatpush1.bf16.msra.mxu0 %v271
    %351 = vmatprep.subr.bf16.mxu0 0
    %352 = vmatpush1.bf16.msra.mxu0 %v272
    %353 = vmatprep.mubr.bf16.mxu0 %v122
    %354 = vmatmul.mubr.bf16.gmra.mrb[0].mxu0 %v115
    %v355 = vpop.f32.mrb[0].mxu0
    %v356 = vadd.f32 %v98, %v355
    %v357 = vpop.f32.mrb[0].mxu0
    %v358 = vpop.f32.mrb[0].mxu0
    %v359 = vpop.f32.mrb[0].mxu0
    %360 = vdwg.mxu0
    %361 = vmatprep.subr.bf16.mxu0 0
    %362 = vmatpush1.bf16.msra.mxu0 %v273
    %363 = vmatprep.subr.bf16.mxu0 0
    %364 = vmatpush1.bf16.msra.mxu0 %v274
    %365 = vmatprep.subr.bf16.mxu0 0
    %366 = vmatpush1.bf16.msra.mxu0 %v275
    %367 = vmatprep.subr.bf16.mxu0 0
    %368 = vmatpush1.bf16.msra.mxu0 %v276
    %369 = vmatprep.subr.bf16.mxu0 0
    %370 = vmatpush1.bf16.msra.mxu0 %v277
    %371 = vmatprep.subr.bf16.mxu0 0
    %372 = vmatpush1.bf16.msra.mxu0 %v278
    %373 = vmatprep.subr.bf16.mxu0 0
    %374 = vmatpush1.bf16.msra.mxu0 %v279
    %375 = vmatprep.subr.bf16.mxu0 0
    %376 = vmatpush1.bf16.msra.mxu0 %v280
    %377 = vmatprep.subr.bf16.mxu0 0
    %378 = vmatpush1.bf16.msra.mxu0 %v281
    %379 = vmatprep.subr.bf16.mxu0 0
    %380 = vmatpush1.bf16.msra.mxu0 %v282
    %381 = vmatprep.subr.bf16.mxu0 0
    %382 = vmatpush1.bf16.msra.mxu0 %v283
    %383 = vmatprep.subr.bf16.mxu0 0
    %384 = vmatpush1.bf16.msra.mxu0 %v284
    %385 = vmatprep.subr.bf16.mxu0 0
    %386 = vmatpush1.bf16.msra.mxu0 %v285
    %387 = vmatprep.subr.bf16.mxu0 0
    %388 = vmatpush1.bf16.msra.mxu0 %v286
    %389 = vmatprep.subr.bf16.mxu0 0
    %390 = vmatpush1.bf16.msra.mxu0 %v287
    %391 = vmatprep.subr.bf16.mxu0 0
    %392 = vmatpush1.bf16.msra.mxu0 %v288
    %393 = vmatprep.mubr.bf16.mxu0 %v124
    %394 = vmatmul.mubr.bf16.gmra.mrb[0].mxu0 %v123
    %v395 = vpop.f32.mrb[0].mxu0
    %v396 = vadd.f32 %v356, %v395
    %v397 = vpop.f32.mrb[0].mxu0
    %v398 = vpop.f32.mrb[0].mxu0
    %v399 = vpop.f32.mrb[0].mxu0
    %400 = vdwg.mxu0
    %v401 = vmax.f32 %v396, 0.0
    %v402 = vpack.c.bf16 %v401, %v401
    %v403 = vld [vmem:[%s3] sm:$0xf]
    %v404 = vld [vmem:[%s3 + $0x4] sm:$0xf]
    %v405 = vld [vmem:[%s3 + $0x8] sm:$0xf]
    %v406 = vld [vmem:[%s3 + $0xc] sm:$0xf]
    %v407 = vld [vmem:[%s3 + $0x10] sm:$0xf]
    %v408 = vld [vmem:[%s3 + $0x14] sm:$0xf]
    %v409 = vld [vmem:[%s3 + $0x18] sm:$0xf]
    %v410 = vld [vmem:[%s3 + $0x1c] sm:$0xf]
    %v411 = vld [vmem:[%s3 + $0x20] sm:$0xf]
    %v412 = vld [vmem:[%s3 + $0x24] sm:$0xf]
    %v413 = vld [vmem:[%s3 + $0x28] sm:$0xf]
    %v414 = vld [vmem:[%s3 + $0x2c] sm:$0xf]
    %v415 = vld [vmem:[%s3 + $0x30] sm:$0xf]
    %v416 = vld [vmem:[%s3 + $0x34] sm:$0xf]
    %v417 = vld [vmem:[%s3 + $0x38] sm:$0xf]
    %v418 = vld [vmem:[%s3 + $0x3c] sm:$0xf]
    %v419 = vld [vmem:[%s4] sm:$0x1]
    %v421 = vlaneseq
    %v422 = vshrl.u32 %v421, 7
    %v423 = vsub.s32 0, %v422
    %v424 = vrot.slane %v419, %v423
    %v442 = vunpack.c.l.b16 %v403
    %v443 = vunpack.c.l.b16 %v404
    %v444 = vunpack.c.l.b16 %v405
    %v445 = vunpack.c.l.b16 %v406
    %v446 = vunpack.c.l.b16 %v407
    %v447 = vunpack.c.l.b16 %v408
    %v448 = vunpack.c.l.b16 %v409
    %v449 = vunpack.c.l.b16 %v410
    %v450 = vunpack.c.l.b16 %v411
    %v451 = vunpack.c.l.b16 %v412
    %v452 = vunpack.c.l.b16 %v413
    %v453 = vunpack.c.l.b16 %v414
    %v454 = vunpack.c.l.b16 %v415
    %v455 = vunpack.c.l.b16 %v416
    %v456 = vunpack.c.l.b16 %v417
    %v457 = vunpack.c.l.b16 %v418
    %v458 = vpack.c.b16 %v443, %v442
    %v459 = vpack.c.b16 %v445, %v444
    %v460 = vpack.c.b16 %v447, %v446
    %v461 = vpack.c.b16 %v449, %v448
    %v462 = vpack.c.b16 %v451, %v450
    %v463 = vpack.c.b16 %v453, %v452
    %v464 = vpack.c.b16 %v455, %v454
    %v465 = vpack.c.b16 %v457, %v456
    %474 = vmatprep.subr.bf16.mxu0 0
    %475 = vmatpush1.bf16.msra.mxu0 %v458
    %476 = vmatprep.subr.bf16.mxu0 0
    %477 = vmatpush1.bf16.msra.mxu0 %v459
    %478 = vmatprep.subr.bf16.mxu0 0
    %479 = vmatpush1.bf16.msra.mxu0 %v460
    %480 = vmatprep.subr.bf16.mxu0 0
    %481 = vmatpush1.bf16.msra.mxu0 %v461
    %482 = vmatprep.subr.bf16.mxu0 0
    %483 = vmatpush1.bf16.msra.mxu0 %v462
    %484 = vmatprep.subr.bf16.mxu0 0
    %485 = vmatpush1.bf16.msra.mxu0 %v463
    %486 = vmatprep.subr.bf16.mxu0 0
    %487 = vmatpush1.bf16.msra.mxu0 %v464
    %488 = vmatprep.subr.bf16.mxu0 0
    %489 = vmatpush1.bf16.msra.mxu0 %v465
    %490 = vmatprep.subr.bf16.mxu0 0
    %491 = vmatpush1.bf16.msra.mxu0 0
    %492 = vmatprep.subr.bf16.mxu0 0
    %493 = vmatpush1.bf16.msra.mxu0 0
    %494 = vmatprep.subr.bf16.mxu0 0
    %495 = vmatpush1.bf16.msra.mxu0 0
    %496 = vmatprep.subr.bf16.mxu0 0
    %497 = vmatpush1.bf16.msra.mxu0 0
    %498 = vmatprep.subr.bf16.mxu0 0
    %499 = vmatpush1.bf16.msra.mxu0 0
    %500 = vmatprep.subr.bf16.mxu0 0
    %501 = vmatpush1.bf16.msra.mxu0 0
    %502 = vmatprep.subr.bf16.mxu0 0
    %503 = vmatpush1.bf16.msra.mxu0 0
    %504 = vmatprep.subr.bf16.mxu0 0
    %505 = vmatpush1.bf16.msra.mxu0 0
    %506 = vmatprep.mubr.bf16.mxu0 0
    %507 = vmatmul.mubr.bf16.gmra.mrb[0].mxu0 %v402
    %v508 = vpop.f32.mrb[0].mxu0
    %v509 = vadd.f32 %v424, %v508
    %v510 = vpop.f32.mrb[0].mxu0
    %v511 = vpop.f32.mrb[0].mxu0
    %v512 = vpop.f32.mrb[0].mxu0
    %513 = vdwg.mxu0
    %v514 = vmax.f32 %v509, 0.0
    %v515 = vpack.c.bf16 %v514, %v514
    %v516 = vld [vmem:[%s5] sm:$0xf]
    %v517 = vld [vmem:[%s5 + $0x4] sm:$0xf]
    %v518 = vld [vmem:[%s5 + $0x8] sm:$0xf]
    %v519 = vld [vmem:[%s5 + $0xc] sm:$0xf]
    %v520 = vld [vmem:[%s5 + $0x10] sm:$0xf]
    %v521 = vld [vmem:[%s5 + $0x14] sm:$0xf]
    %v522 = vld [vmem:[%s5 + $0x18] sm:$0xf]
    %v523 = vld [vmem:[%s5 + $0x1c] sm:$0xf]
    %v524 = vld [vmem:[%s5 + $0x20] sm:$0xf]
    %v525 = vld [vmem:[%s5 + $0x24] sm:$0xf]
    %v526 = vld [vmem:[%s5 + $0x28] sm:$0xf]
    %v527 = vld [vmem:[%s5 + $0x2c] sm:$0xf]
    %v528 = vld [vmem:[%s5 + $0x30] sm:$0xf]
    %v529 = vld [vmem:[%s5 + $0x34] sm:$0xf]
    %v530 = vld [vmem:[%s5 + $0x38] sm:$0xf]
    %v531 = vld [vmem:[%s5 + $0x3c] sm:$0xf]
    %v532 = vld [vmem:[%s6] sm:$0x1]
    %v534 = vlaneseq
    %v535 = vshrl.u32 %v534, 7
    %v536 = vsub.s32 0, %v535
    %v537 = vrot.slane %v532, %v536
    %v555 = vunpack.c.l.b16 %v516
    %v556 = vunpack.c.l.b16 %v517
    %v557 = vunpack.c.l.b16 %v518
    %v558 = vunpack.c.l.b16 %v519
    %v559 = vunpack.c.l.b16 %v520
    %v560 = vunpack.c.l.b16 %v521
    %v561 = vunpack.c.l.b16 %v522
    %v562 = vunpack.c.l.b16 %v523
    %v563 = vunpack.c.l.b16 %v524
    %v564 = vunpack.c.l.b16 %v525
    %v565 = vunpack.c.l.b16 %v526
    %v566 = vunpack.c.l.b16 %v527
    %v567 = vunpack.c.l.b16 %v528
    %v568 = vunpack.c.l.b16 %v529
    %v569 = vunpack.c.l.b16 %v530
    %v570 = vunpack.c.l.b16 %v531
    %v571 = vpack.c.b16 %v556, %v555
    %v572 = vpack.c.b16 %v558, %v557
    %v573 = vpack.c.b16 %v560, %v559
    %v574 = vpack.c.b16 %v562, %v561
    %v575 = vpack.c.b16 %v564, %v563
    %v576 = vpack.c.b16 %v566, %v565
    %v577 = vpack.c.b16 %v568, %v567
    %v578 = vpack.c.b16 %v570, %v569
    %587 = vmatprep.subr.bf16.mxu0 0
    %588 = vmatpush1.bf16.msra.mxu0 %v571
    %589 = vmatprep.subr.bf16.mxu0 0
    %590 = vmatpush1.bf16.msra.mxu0 %v572
    %591 = vmatprep.subr.bf16.mxu0 0
    %592 = vmatpush1.bf16.msra.mxu0 %v573
    %593 = vmatprep.subr.bf16.mxu0 0
    %594 = vmatpush1.bf16.msra.mxu0 %v574
    %595 = vmatprep.subr.bf16.mxu0 0
    %596 = vmatpush1.bf16.msra.mxu0 %v575
    %597 = vmatprep.subr.bf16.mxu0 0
    %598 = vmatpush1.bf16.msra.mxu0 %v576
    %599 = vmatprep.subr.bf16.mxu0 0
    %600 = vmatpush1.bf16.msra.mxu0 %v577
    %601 = vmatprep.subr.bf16.mxu0 0
    %602 = vmatpush1.bf16.msra.mxu0 %v578
    %603 = vmatprep.subr.bf16.mxu0 0
    %604 = vmatpush1.bf16.msra.mxu0 0
    %605 = vmatprep.subr.bf16.mxu0 0
    %606 = vmatpush1.bf16.msra.mxu0 0
    %607 = vmatprep.subr.bf16.mxu0 0
    %608 = vmatpush1.bf16.msra.mxu0 0
    %609 = vmatprep.subr.bf16.mxu0 0
    %610 = vmatpush1.bf16.msra.mxu0 0
    %611 = vmatprep.subr.bf16.mxu0 0
    %612 = vmatpush1.bf16.msra.mxu0 0
    %613 = vmatprep.subr.bf16.mxu0 0
    %614 = vmatpush1.bf16.msra.mxu0 0
    %615 = vmatprep.subr.bf16.mxu0 0
    %616 = vmatpush1.bf16.msra.mxu0 0
    %617 = vmatprep.subr.bf16.mxu0 0
    %618 = vmatpush1.bf16.msra.mxu0 0
    %619 = vmatprep.mubr.bf16.mxu0 0
    %620 = vmatmul.mubr.bf16.gmra.mrb[0].mxu0 %v515
    %v621 = vpop.f32.mrb[0].mxu0
    %v622 = vadd.f32 %v537, %v621
    %v623 = vpop.f32.mrb[0].mxu0
    %v624 = vpop.f32.mrb[0].mxu0
    %v625 = vpop.f32.mrb[0].mxu0
    %626 = vdwg.mxu0
    %627 = vst [vmem:[#allocation2] sm:$0x3] %v622
    // Predicated region
    $region30: #{net_forward.5} parent=1 // pred_check
      _
    $region31: #{net_forward.5} parent=1 // pred_check_branch
      %629 = sbr.rel (0) target = $region33
    $region32: #{net_forward.5} parent=1 // pred_region
      %s631 = ssub.s32 32, 32
      %632 = vsyncadd [#allocation3], %s631
      %s634 = sshll.u32 [#allocation2], 4
      %s635 = int_to_ptr.vmem [resolvable:$true] %s634
      %637 = dma.vmem_to_hbm [thread:$0]  %s635, 32, %s7, [#allocation3]
    $region33: #{net_forward.5} parent=1 // pred_fallthru
      _
    // Predicated region
    $region34: #{net_forward.5} parent=1 // pred_check
      _
    $region35: #{net_forward.5} parent=1 // pred_check_branch
      %639 = sbr.rel (0) target = $region37
    $region36: #{net_forward.5} parent=1 // pred_region
      %640 = dma.done [#allocation3], 32
    $region37: #{net_forward.5} parent=1 // pred_fallthru
      _
    %641 = vsyncpa [#allocation3], 1

</llo_original>
